<compile_context>
chip_gen: v6e
topology: v6e:2x2x1
jax: 0.10.0
libtpu: 0.0.40
codegen_flags: <defaults>
</compile_context>

<pallas_src>
import jax
import jax.numpy as jnp
from jax import lax
from jax.experimental import pallas as pl
from jax.experimental.pallas import tpu as pltpu


# ---------------------------------------------------------------------------
# Fused GATv2 layer kernel factory
# ---------------------------------------------------------------------------
def make_gat_layer_kernel(*, heads, C, concat, fuse_input_lin, project_after_gather,
                          final_proj, tile_n, neg_slope=0.2, bn_eps=1e-5):
    HC = heads * C

    def kernel(*refs):
        (x_ref, ea_ref, S_ref, DTg_ref, DTs_ref,
         Wl_ref, bl_ref, Wr_ref, br_ref, We_ref,
         attB_ref, headE_ref, gb_ref,
         Wres_ref, bres_ref, gm_ref, bt_ref, mu_ref, vr_ref) = refs[:19]
        k = 19
        if fuse_input_lin:
            Win_ref, bin_ref = refs[k], refs[k + 1]
            k += 2
        if not concat:
            hm_ref = refs[k]
            k += 1
        if final_proj:
            Wout_ref, bout_ref = refs[k], refs[k + 1]
            k += 2
        o_ref = refs[k]
        dmax_sc, den_sc, num_sc = refs[k + 1], refs[k + 2], refs[k + 3]
        k += 4
        if fuse_input_lin:
            h_sc = refs[k]
            k += 1
        if not project_after_gather:
            xl_sc, xr_sc = refs[k], refs[k + 1]
            k += 2

        i = pl.program_id(0)      # node tile  ("parallel")
        p = pl.program_id(1)      # phase: 0 = segment max, 1 = accumulate / finalize
        j = pl.program_id(2)      # edge tile  (reduction axis, "arbitrary")
        nj = pl.num_programs(2)

        # ---- once per node tile: node-level projections into persistent VMEM scratch ----
        @pl.when(jnp.logical_and(p == 0, j == 0))
        def _():
            if fuse_input_lin:
                h_sc[...] = jnp.maximum(
                    jnp.dot(x_ref[...], Win_ref[...],
                            preferred_element_type=jnp.float32) + bin_ref[...], 0.0)
            if not project_after_gather:
                hn0 = h_sc[...] if fuse_input_lin else x_ref[...]
                xl_sc[...] = jnp.dot(hn0, Wl_ref[...],
                                     preferred_element_type=jnp.float32) + bl_ref[...]
                xr_sc[...] = jnp.dot(hn0, Wr_ref[...],
                                     preferred_element_type=jnp.float32) + br_ref[...]
            dmax_sc[...] = jnp.full_like(dmax_sc, -1e30)

        # ---- per-edge-tile attention scores (needed by both phases) ----
        S = S_ref[...].astype(jnp.float32)        # [tE, N]   (bf16 0/1 in HBM)
        DTg = DTg_ref[...].astype(jnp.float32)    # [tE, N]
        DTs = DTs_ref[...].astype(jnp.float32)    # [tE, tN]

        if project_after_gather:
            hn = h_sc[...] if fuse_input_lin else x_ref[...]                   # [N, F]
            xl_src = jnp.dot(jnp.dot(S, hn, preferred_element_type=jnp.float32),
                             Wl_ref[...], preferred_element_type=jnp.float32) + bl_ref[...]
            xr_dst = jnp.dot(jnp.dot(DTg, hn, preferred_element_type=jnp.float32),
                             Wr_ref[...], preferred_element_type=jnp.float32) + br_ref[...]
        else:
            xl_src = jnp.dot(S, xl_sc[...], preferred_element_type=jnp.float32)
            xr_dst = jnp.dot(DTg, xr_sc[...], preferred_element_type=jnp.float32)

        z = xl_src + xr_dst + jnp.dot(ea_ref[...], We_ref[...],
                                      preferred_element_type=jnp.float32)      # [tE, HC]
        z = jnp.where(z >= 0.0, z, neg_slope * z)                               # leaky_relu(0.2)
        scores = jnp.dot(z, attB_ref[...], preferred_element_type=jnp.float32)  # [tE, H]

        # ---- phase 0: exact per-destination segment max (softmax stabilizer) ----
        @pl.when(p == 0)
        def _():
            for hh in range(heads):  # static unroll, heads <= 4
                masked = jnp.where(DTs > 0.0, scores[:, hh:hh + 1], -1e30)       # [tE, tN]
                mrow = jnp.max(masked, axis=0, keepdims=True)                    # [1, tN]
                dmax_sc[hh:hh + 1, :] = jnp.maximum(dmax_sc[hh:hh + 1, :], mrow)

        # ---- phase 1: accumulate softmax denominator + weighted messages ----
        @pl.when(p == 1)
        def _():
            @pl.when(j == 0)
            def _():
                den_sc[...] = jnp.zeros_like(den_sc)
                num_sc[...] = jnp.zeros_like(num_sc)

            # per-edge max of its destination group (0 for edges whose dst lies outside this
            # node tile; those rows are zeroed by the scatter and the clamp keeps exp finite).
            m_e = lax.dot_general(DTs, dmax_sc[...], (((1,), (1,)), ((), ())),
                                  preferred_element_type=jnp.float32)            # [tE, H]
            exp_s = jnp.exp(jnp.minimum(scores - m_e, 40.0))                      # [tE, H]
            w = jnp.dot(exp_s, headE_ref[...], preferred_element_type=jnp.float32)  # [tE, HC]
            wmsg = w * xl_src                                                     # [tE, HC]

            # destination scatter-sum: contract DT along its edge axis (D = DT.T never built)
            den_sc[...] += lax.dot_general(DTs, exp_s, (((0,), (0,)), ((), ())),
                                           preferred_element_type=jnp.float32)    # [tN, H]
            num_sc[...] += lax.dot_general(DTs, wmsg, (((0,), (0,)), ((), ())),
                                           preferred_element_type=jnp.float32)    # [tN, HC]

            # ---- finalize on last edge tile: normalize + bias + residual + BN + ReLU ----
            @pl.when(j == nj - 1)
            def _():
                inv_den = pl.reciprocal(jnp.maximum(den_sc[...], 1e-20), approx=True)  # [tN, H]
                inv_full = jnp.dot(inv_den, headE_ref[...],
                                   preferred_element_type=jnp.float32)                  # [tN, HC]
                out = num_sc[...] * inv_full
                if not concat:
                    out = jnp.dot(out, hm_ref[...],
                                  preferred_element_type=jnp.float32)                    # head mean
                out = out + gb_ref[...]

                row0 = i * tile_n
                if fuse_input_lin:
                    h_rows = h_sc[pl.ds(row0, tile_n), :]
                else:
                    h_rows = x_ref[pl.ds(row0, tile_n), :]
                res = jnp.dot(h_rows, Wres_ref[...],
                              preferred_element_type=jnp.float32) + bres_ref[...]

                y = out + res
                y = (y - mu_ref[...]) * lax.rsqrt(vr_ref[...] + bn_eps) * gm_ref[...] + bt_ref[...]
                y = jnp.maximum(y, 0.0)
                if final_proj:
                    y = jnp.dot(y, Wout_ref[...],
                                preferred_element_type=jnp.float32) + bout_ref[...]
                o_ref[...] = y

    return kernel


# ---------------------------------------------------------------------------
# Host-side wrapper: build inputs, BlockSpecs, grid, and call the fused kernel
# ---------------------------------------------------------------------------
def _pick_edge_tile(E):
    for t in (1024, 512, 256, 128, 64, 32, 16, 8):
        if E % t == 0 and E // t >= 2:
            return t
    return E


def _pick_node_tile(N):
    for t in (256, 128):   # node tiles must be 128-lane multiples (or the full N)
        if N % t == 0:
            return t
    return N


def fused_gat_layer(x, ea, S, DT, *, heads, C, concat,
                    Wl, bl, Wr, br, We, att, gat_bias,
                    Wres, bres, bn, input_lin=None, final_lin=None):
    """One GATv2 layer (+ optional fused input Linear+ReLU, residual Linear, BatchNorm,
    ReLU, optional fused output Linear) as a single tiled, pipelined pallas_call."""
    N = x.shape[0]
    E = ea.shape[0]
    HC = heads * C
    F_h = Wl.shape[0]

    tN = _pick_node_tile(N)
    tE = _pick_edge_tile(E)
    n_node, n_edge = N // tN, E // tE

    # Layer-1 style (gather node features first, project after the gather) is cheaper when
    # the pre-projection width is smaller than heads*C; otherwise project first.
    project_after_gather = F_h < HC

    # Small host-built helper matrices so per-head reduce / broadcast / mean run on the MXU.
    head_of = jnp.arange(HC, dtype=jnp.int32) // C
    attB = att.reshape(HC, 1) * jax.nn.one_hot(head_of, heads, dtype=jnp.float32)   # [HC, H]
    headE = jnp.transpose(jax.nn.one_hot(head_of, heads, dtype=jnp.float32))         # [H, HC]

    gamma, beta, mean, var = bn
    gat_dim = HC if concat else C
    out_dim = final_lin[0].shape[1] if final_lin is not None else gat_dim

    def row2d(v):
        return v.reshape(1, -1).astype(jnp.float32)

    inputs = [x, ea, S, DT, DT,
              Wl, row2d(bl), Wr, row2d(br), We,
              attB, headE, row2d(gat_bias),
              Wres, row2d(bres), row2d(gamma), row2d(beta), row2d(mean), row2d(var)]
    if input_lin is not None:
        Win, bin_ = input_lin
        inputs += [Win, row2d(bin_)]
    if not concat:
        hm = jax.nn.one_hot(jnp.arange(HC, dtype=jnp.int32) % C, C,
                            dtype=jnp.float32) / float(heads)                         # [HC, C]
        inputs += [hm]
    if final_lin is not None:
        Wout, bout = final_lin
        inputs += [Wout, row2d(bout)]

    def full_spec(a):
        return pl.BlockSpec(a.shape, lambda i, p, j: (0, 0))

    def edge_spec(a):
        return pl.BlockSpec((tE, a.shape[1]), lambda i, p, j: (j, 0))

    in_specs = [full_spec(x), edge_spec(ea), edge_spec(S), edge_spec(DT),
                pl.BlockSpec((tE, tN), lambda i, p, j: (j, i))]       # DT scatter view
    in_specs += [full_spec(a) for a in inputs[5:]]

    scratch = [pltpu.VMEM((heads, tN), jnp.float32),   # per-destination score max
               pltpu.VMEM((tN, heads), jnp.float32),   # softmax denominator
               pltpu.VMEM((tN, HC), jnp.float32)]      # weighted-message accumulator
    if input_lin is not None:
        scratch.append(pltpu.VMEM((N, F_h), jnp.float32))   # h = relu(lin_in(x))
    if not project_after_gather:
        scratch.append(pltpu.VMEM((N, HC), jnp.float32))    # lin_l(h)
        scratch.append(pltpu.VMEM((N, HC), jnp.float32))    # lin_r(h)

    kernel = make_gat_layer_kernel(
        heads=heads, C=C, concat=concat,
        fuse_input_lin=input_lin is not None,
        project_after_gather=project_after_gather,
        final_proj=final_lin is not None,
        tile_n=tN)

    return pl.pallas_call(
        kernel,
        out_shape=jax.ShapeDtypeStruct((N, out_dim), jnp.float32),
        grid_spec=pltpu.PrefetchScalarGridSpec(
            num_scalar_prefetch=0,
            grid=(n_node, 2, n_edge),
            in_specs=in_specs,
            out_specs=pl.BlockSpec((tN, out_dim), lambda i, p, j: (i, 0)),
            scratch_shapes=scratch),
        compiler_params=pltpu.CompilerParams(
            dimension_semantics=("parallel", "arbitrary", "arbitrary"),
            vmem_limit_bytes=32 * 1024 * 1024),
    )(*inputs)


# ---------------------------------------------------------------------------
# Parameter init (deterministic, synthetic)
# ---------------------------------------------------------------------------
def init_linear(key, fan_in, fan_out, bias=True):
    kw, kb = jax.random.split(key)
    w = jax.random.normal(kw, (fan_in, fan_out), jnp.float32) / jnp.sqrt(float(fan_in))
    b = (jax.random.normal(kb, (fan_out,), jnp.float32) * 0.1) if bias else jnp.zeros(
        (fan_out,), jnp.float32)
    return w, b


def init_bn(key, f):
    k1, k2, k3, k4 = jax.random.split(key, 4)
    gamma = 1.0 + 0.1 * jax.random.normal(k1, (f,), jnp.float32)
    beta = 0.1 * jax.random.normal(k2, (f,), jnp.float32)
    mean = 0.1 * jax.random.normal(k3, (f,), jnp.float32)
    var = 1.0 + 0.1 * jnp.abs(jax.random.normal(k4, (f,), jnp.float32))
    return gamma, beta, mean, var


def init_params(key, in_channels, edge_dim, hidden, heads, out_channels):
    ks = jax.random.split(key, 16)
    p = {}
    p["lin_in"] = init_linear(ks[0], in_channels, hidden)
    # gat1 : hidden -> hidden, heads, concat=True, edge_dim
    p["g1_l"] = init_linear(ks[1], hidden, heads * hidden)
    p["g1_r"] = init_linear(ks[2], hidden, heads * hidden)
    p["g1_e"] = init_linear(ks[3], edge_dim, heads * hidden, bias=False)
    p["g1_att"] = jax.random.normal(ks[4], (heads * hidden,), jnp.float32) / jnp.sqrt(float(hidden))
    p["g1_bias"] = 0.1 * jax.random.normal(ks[5], (heads * hidden,), jnp.float32)
    p["res1"] = init_linear(ks[6], hidden, heads * hidden)
    p["bn1"] = init_bn(ks[7], heads * hidden)
    # gat2 : heads*hidden -> hidden, 1 head, concat=False, edge_dim
    p["g2_l"] = init_linear(ks[8], heads * hidden, hidden)
    p["g2_r"] = init_linear(ks[9], heads * hidden, hidden)
    p["g2_e"] = init_linear(ks[10], edge_dim, hidden, bias=False)
    p["g2_att"] = jax.random.normal(ks[11], (hidden,), jnp.float32) / jnp.sqrt(float(hidden))
    p["g2_bias"] = 0.1 * jax.random.normal(ks[12], (hidden,), jnp.float32)
    p["res2"] = init_linear(ks[13], heads * hidden, hidden)
    p["bn2"] = init_bn(ks[14], hidden)
    p["lin_out"] = init_linear(ks[15], hidden, out_channels)
    return p


# ---------------------------------------------------------------------------
# Forward pass: 2 fused pallas_calls (glue: self-loop handling + one-hot build)
# ---------------------------------------------------------------------------
def gat_improved_forward(x, edge_index, edge_attr, params, *, hidden, heads):
    n = x.shape[0]
    src, dst = edge_index[0], edge_index[1]

    # GATv2Conv default: remove self loops then add self loops with edge_attr fill 'mean'.
    # (raw inputs are constructed without self loops, so only the add step is needed)
    loop_attr = jnp.broadcast_to(jnp.mean(edge_attr, axis=0, keepdims=True),
                                 (n, edge_attr.shape[1]))
    src_a = jnp.concatenate([src, jnp.arange(n, dtype=src.dtype)])
    dst_a = jnp.concatenate([dst, jnp.arange(n, dtype=dst.dtype)])
    ea = jnp.concatenate([edge_attr, loop_attr], axis=0)            # [E, edge_dim]

    # bf16 one-hot gather matrices (exact 0/1, half the bytes of f32); the destination
    # scatter reuses DT contracted along its edge axis -> D = DT.T is never materialized.
    S = jax.nn.one_hot(src_a, n, dtype=jnp.bfloat16)                # [E, N] src gather
    DT = jax.nn.one_hot(dst_a, n, dtype=jnp.bfloat16)               # [E, N] dst gather/scatter

    # layer 1: lin_in + ReLU + GATv2(heads, concat) + res_lin1 + BN1 + ReLU   (one kernel)
    h2 = fused_gat_layer(
        x, ea, S, DT, heads=heads, C=hidden, concat=True,
        Wl=params["g1_l"][0], bl=params["g1_l"][1],
        Wr=params["g1_r"][0], br=params["g1_r"][1],
        We=params["g1_e"][0],
        att=params["g1_att"], gat_bias=params["g1_bias"],
        Wres=params["res1"][0], bres=params["res1"][1],
        bn=params["bn1"],
        input_lin=params["lin_in"])                                  # [N, heads*hidden]

    # layer 2: GATv2(1 head, mean) + res_lin2 + BN2 + ReLU + lin_out          (one kernel)
    out = fused_gat_layer(
        h2, ea, S, DT, heads=1, C=hidden, concat=False,
        Wl=params["g2_l"][0], bl=params["g2_l"][1],
        Wr=params["g2_r"][0], br=params["g2_r"][1],
        We=params["g2_e"][0],
        att=params["g2_att"], gat_bias=params["g2_bias"],
        Wres=params["res2"][0], bres=params["res2"][1],
        bn=params["bn2"],
        final_lin=params["lin_out"])                                 # [N, out_channels]
    return out


if __name__ == "__main__":
    key = jax.random.PRNGKey(0)
    k_x, k_src, k_off, k_ea, k_p = jax.random.split(key, 5)

    N, E_raw = 16, 48
    in_channels, edge_dim, hidden, heads, out_channels = 8, 8, 32, 4, 1

    x = jax.random.normal(k_x, (N, in_channels), jnp.float32)
    src = jax.random.randint(k_src, (E_raw,), 0, N, dtype=jnp.int32)
    off = jax.random.randint(k_off, (E_raw,), 1, N, dtype=jnp.int32)
    dst = (src + off) % N                                   # no self loops in the raw graph
    edge_index = jnp.stack([src, dst], axis=0)              # [2, E_raw]
    edge_attr = jax.random.normal(k_ea, (E_raw, edge_dim), jnp.float32)

    params = init_params(k_p, in_channels, edge_dim, hidden, heads, out_channels)

    fwd = jax.jit(lambda a, b, c: gat_improved_forward(a, b, c, params,
                                                       hidden=hidden, heads=heads))
    out = fwd(x, edge_index, edge_attr)
    jax.block_until_ready(out)
    assert out.shape == (N, out_channels)
    assert bool(jnp.all(jnp.isfinite(out)))
    print("KERNEL_OK")
</pallas_src>

<mosaic_0001>
module attributes {stable_mosaic.version = 11 : i64} {
  func.func @kernel(%arg0: i32, %arg1: i32, %arg2: i32, %arg3: memref<16x128xf32, #tpu.memory_space<vmem>>, %arg4: memref<32x8xf32, #tpu.memory_space<vmem>>, %arg5: memref<32x16xbf16, #tpu.memory_space<vmem>>, %arg6: memref<32x16xbf16, #tpu.memory_space<vmem>>, %arg7: memref<32x16xbf16, #tpu.memory_space<vmem>>, %arg8: memref<128x32xf32, #tpu.memory_space<vmem>>, %arg9: memref<1x32xf32, #tpu.memory_space<vmem>>, %arg10: memref<128x32xf32, #tpu.memory_space<vmem>>, %arg11: memref<1x32xf32, #tpu.memory_space<vmem>>, %arg12: memref<8x32xf32, #tpu.memory_space<vmem>>, %arg13: memref<32x1xf32, #tpu.memory_space<vmem>>, %arg14: memref<1x32xf32, #tpu.memory_space<vmem>>, %arg15: memref<1x32xf32, #tpu.memory_space<vmem>>, %arg16: memref<128x32xf32, #tpu.memory_space<vmem>>, %arg17: memref<1x32xf32, #tpu.memory_space<vmem>>, %arg18: memref<1x32xf32, #tpu.memory_space<vmem>>, %arg19: memref<1x32xf32, #tpu.memory_space<vmem>>, %arg20: memref<1x32xf32, #tpu.memory_space<vmem>>, %arg21: memref<1x32xf32, #tpu.memory_space<vmem>>, %arg22: memref<32x32xf32, #tpu.memory_space<vmem>>, %arg23: memref<32x1xf32, #tpu.memory_space<vmem>>, %arg24: memref<1x1xf32, #tpu.memory_space<vmem>>, %arg25: memref<16x1xf32, #tpu.memory_space<vmem>>, %arg26: memref<1x16xf32, #tpu.memory_space<vmem>>, %arg27: memref<16x1xf32, #tpu.memory_space<vmem>>, %arg28: memref<16x32xf32, #tpu.memory_space<vmem>>, %arg29: memref<16x32xf32, #tpu.memory_space<vmem>>, %arg30: memref<16x32xf32, #tpu.memory_space<vmem>>) attributes {dimension_semantics = [#tpu.dimension_semantics<parallel>, #tpu.dimension_semantics<arbitrary>, #tpu.dimension_semantics<arbitrary>], iteration_bounds = array<i64: 1, 2, 2>, scalar_prefetch = 0 : i64, scratch_operands = 5 : i64, tpu.core_type = #tpu.core_type<tc>, window_params = [{pipeline_mode = #tpu.pipeline_mode<synchronous>, transform_indices = @transform_0, window_bounds = array<i64: 16, 128>}, {transform_indices = @transform_1, window_bounds = array<i64: 32, 8>}, {transform_indices = @transform_2, window_bounds = array<i64: 32, 16>}, {transform_indices = @transform_3, window_bounds = array<i64: 32, 16>}, {transform_indices = @transform_4, window_bounds = array<i64: 32, 16>}, {pipeline_mode = #tpu.pipeline_mode<synchronous>, transform_indices = @transform_5, window_bounds = array<i64: 128, 32>}, {pipeline_mode = #tpu.pipeline_mode<synchronous>, transform_indices = @transform_6, window_bounds = array<i64: 1, 32>}, {pipeline_mode = #tpu.pipeline_mode<synchronous>, transform_indices = @transform_7, window_bounds = array<i64: 128, 32>}, {pipeline_mode = #tpu.pipeline_mode<synchronous>, transform_indices = @transform_8, window_bounds = array<i64: 1, 32>}, {pipeline_mode = #tpu.pipeline_mode<synchronous>, transform_indices = @transform_9, window_bounds = array<i64: 8, 32>}, {pipeline_mode = #tpu.pipeline_mode<synchronous>, transform_indices = @transform_10, window_bounds = array<i64: 32, 1>}, {pipeline_mode = #tpu.pipeline_mode<synchronous>, transform_indices = @transform_11, window_bounds = array<i64: 1, 32>}, {pipeline_mode = #tpu.pipeline_mode<synchronous>, transform_indices = @transform_12, window_bounds = array<i64: 1, 32>}, {pipeline_mode = #tpu.pipeline_mode<synchronous>, transform_indices = @transform_13, window_bounds = array<i64: 128, 32>}, {pipeline_mode = #tpu.pipeline_mode<synchronous>, transform_indices = @transform_14, window_bounds = array<i64: 1, 32>}, {pipeline_mode = #tpu.pipeline_mode<synchronous>, transform_indices = @transform_15, window_bounds = array<i64: 1, 32>}, {pipeline_mode = #tpu.pipeline_mode<synchronous>, transform_indices = @transform_16, window_bounds = array<i64: 1, 32>}, {pipeline_mode = #tpu.pipeline_mode<synchronous>, transform_indices = @transform_17, window_bounds = array<i64: 1, 32>}, {pipeline_mode = #tpu.pipeline_mode<synchronous>, transform_indices = @transform_18, window_bounds = array<i64: 1, 32>}, {pipeline_mode = #tpu.pipeline_mode<synchronous>, transform_indices = @transform_19, window_bounds = array<i64: 32, 32>}, {pipeline_mode = #tpu.pipeline_mode<synchronous>, transform_indices = @transform_20, window_bounds = array<i64: 32, 1>}, {pipeline_mode = #tpu.pipeline_mode<synchronous>, transform_indices = @transform_21, window_bounds = array<i64: 1, 1>}, {transform_indices = @transform_22, window_bounds = array<i64: 16, 1>}]} {
    %c0_i32 = arith.constant 0 : i32
    %0 = arith.cmpi eq, %arg1, %c0_i32 : i32
    %c0_i32_0 = arith.constant 0 : i32
    %1 = arith.cmpi eq, %arg2, %c0_i32_0 : i32
    %2 = arith.andi %0, %1 : i1
    %3 = arith.extui %2 : i1 to i32
    %c0_i32_1 = arith.constant 0 : i32
    %4 = arith.cmpi ne, %3, %c0_i32_1 : i32
    scf.if %4 {
      %c0_25 = arith.constant 0 : index
      %c0_26 = arith.constant 0 : index
      %33 = vector.load %arg3[%c0_25, %c0_26] : memref<16x128xf32, #tpu.memory_space<vmem>>, vector<16x128xf32>
      %c0_27 = arith.constant 0 : index
      %c0_28 = arith.constant 0 : index
      %34 = vector.load %arg8[%c0_27, %c0_28] : memref<128x32xf32, #tpu.memory_space<vmem>>, vector<128x32xf32>
      %cst_29 = arith.constant dense<0.000000e+00> : vector<16x32xf32>
      %35 = tpu.matmul %33, %34, %cst_29 {dimension_numbers = #tpu.dot_dimension_numbers<[1], [0], [0], [1], [0, 0, 1, 1], [], []>} : vector<16x128xf32>, vector<128x32xf32>, vector<16x32xf32> -> vector<16x32xf32>
      %c0_30 = arith.constant 0 : index
      %c0_31 = arith.constant 0 : index
      %36 = vector.load %arg9[%c0_30, %c0_31] : memref<1x32xf32, #tpu.memory_space<vmem>>, vector<1x32xf32>
      %37 = vector.broadcast %36 : vector<1x32xf32> to vector<16x32xf32>
      %38 = arith.addf %35, %37 : vector<16x32xf32>
      %c0_32 = arith.constant 0 : index
      %c0_33 = arith.constant 0 : index
      %39 = vector.load %arg29[%c0_32, %c0_33] : memref<16x32xf32, #tpu.memory_space<vmem>>, vector<16x32xf32>
      tpu.vector_store %arg29[%c0_32, %c0_33], %38 {strides = array<i32>} : memref<16x32xf32, #tpu.memory_space<vmem>>, vector<16x32xf32>,
      %c0_34 = arith.constant 0 : index
      %c0_35 = arith.constant 0 : index
      %40 = vector.load %arg10[%c0_34, %c0_35] : memref<128x32xf32, #tpu.memory_space<vmem>>, vector<128x32xf32>
      %cst_36 = arith.constant dense<0.000000e+00> : vector<16x32xf32>
      %41 = tpu.matmul %33, %40, %cst_36 {dimension_numbers = #tpu.dot_dimension_numbers<[1], [0], [0], [1], [0, 0, 1, 1], [], []>} : vector<16x128xf32>, vector<128x32xf32>, vector<16x32xf32> -> vector<16x32xf32>
      %c0_37 = arith.constant 0 : index
      %c0_38 = arith.constant 0 : index
      %42 = vector.load %arg11[%c0_37, %c0_38] : memref<1x32xf32, #tpu.memory_space<vmem>>, vector<1x32xf32>
      %43 = vector.broadcast %42 : vector<1x32xf32> to vector<16x32xf32>
      %44 = arith.addf %41, %43 : vector<16x32xf32>
      %c0_39 = arith.constant 0 : index
      %c0_40 = arith.constant 0 : index
      %45 = vector.load %arg30[%c0_39, %c0_40] : memref<16x32xf32, #tpu.memory_space<vmem>>, vector<16x32xf32>
      tpu.vector_store %arg30[%c0_39, %c0_40], %44 {strides = array<i32>} : memref<16x32xf32, #tpu.memory_space<vmem>>, vector<16x32xf32>,
      %cst_41 = arith.constant -1.000000e+30 : f32
      %46 = vector.broadcast %cst_41 : f32 to vector<1x16xf32>
      %c0_42 = arith.constant 0 : index
      %c0_43 = arith.constant 0 : index
      %47 = vector.load %arg26[%c0_42, %c0_43] : memref<1x16xf32, #tpu.memory_space<vmem>>, vector<1x16xf32>
      tpu.vector_store %arg26[%c0_42, %c0_43], %46 {strides = array<i32>} : memref<1x16xf32, #tpu.memory_space<vmem>>, vector<1x16xf32>,
    } else {
    }
    %c0 = arith.constant 0 : index
    %c0_2 = arith.constant 0 : index
    %5 = vector.load %arg5[%c0, %c0_2] : memref<32x16xbf16, #tpu.memory_space<vmem>>, vector<32x16xbf16>
    %6 = arith.extf %5 : vector<32x16xbf16> to vector<32x16xf32>
    %c0_3 = arith.constant 0 : index
    %c0_4 = arith.constant 0 : index
    %7 = vector.load %arg6[%c0_3, %c0_4] : memref<32x16xbf16, #tpu.memory_space<vmem>>, vector<32x16xbf16>
    %8 = arith.extf %7 : vector<32x16xbf16> to vector<32x16xf32>
    %c0_5 = arith.constant 0 : index
    %c0_6 = arith.constant 0 : index
    %9 = vector.load %arg7[%c0_5, %c0_6] : memref<32x16xbf16, #tpu.memory_space<vmem>>, vector<32x16xbf16>
    %10 = arith.extf %9 : vector<32x16xbf16> to vector<32x16xf32>
    %c0_7 = arith.constant 0 : index
    %c0_8 = arith.constant 0 : index
    %11 = vector.load %arg29[%c0_7, %c0_8] : memref<16x32xf32, #tpu.memory_space<vmem>>, vector<16x32xf32>
    %cst = arith.constant dense<0.000000e+00> : vector<32x32xf32>
    %12 = tpu.matmul %6, %11, %cst {dimension_numbers = #tpu.dot_dimension_numbers<[1], [0], [0], [1], [0, 0, 1, 1], [], []>} : vector<32x16xf32>, vector<16x32xf32>, vector<32x32xf32> -> vector<32x32xf32>
    %c0_9 = arith.constant 0 : index
    %c0_10 = arith.constant 0 : index
    %13 = vector.load %arg30[%c0_9, %c0_10] : memref<16x32xf32, #tpu.memory_space<vmem>>, vector<16x32xf32>
    %cst_11 = arith.constant dense<0.000000e+00> : vector<32x32xf32>
    %14 = tpu.matmul %8, %13, %cst_11 {dimension_numbers = #tpu.dot_dimension_numbers<[1], [0], [0], [1], [0, 0, 1, 1], [], []>} : vector<32x16xf32>, vector<16x32xf32>, vector<32x32xf32> -> vector<32x32xf32>
    %15 = arith.addf %12, %14 : vector<32x32xf32>
    %c0_12 = arith.constant 0 : index
    %c0_13 = arith.constant 0 : index
    %16 = vector.load %arg4[%c0_12, %c0_13] : memref<32x8xf32, #tpu.memory_space<vmem>>, vector<32x8xf32>
    %c0_14 = arith.constant 0 : index
    %c0_15 = arith.constant 0 : index
    %17 = vector.load %arg12[%c0_14, %c0_15] : memref<8x32xf32, #tpu.memory_space<vmem>>, vector<8x32xf32>
    %cst_16 = arith.constant dense<0.000000e+00> : vector<32x32xf32>
    %18 = tpu.matmul %16, %17, %cst_16 {dimension_numbers = #tpu.dot_dimension_numbers<[1], [0], [0], [1], [0, 0, 1, 1], [], []>} : vector<32x8xf32>, vector<8x32xf32>, vector<32x32xf32> -> vector<32x32xf32>
    %19 = arith.addf %15, %18 : vector<32x32xf32>
    %cst_17 = arith.constant 0.000000e+00 : f32
    %20 = vector.broadcast %cst_17 : f32 to vector<32x32xf32>
    %21 = arith.cmpf oge, %19, %20 : vector<32x32xf32>
    %cst_18 = arith.constant 2.000000e-01 : f32
    %22 = vector.broadcast %cst_18 : f32 to vector<32x32xf32>
    %23 = arith.mulf %22, %19 : vector<32x32xf32>
    %24 = arith.select %21, %19, %23 : vector<32x32xi1>, vector<32x32xf32>
    %c0_19 = arith.constant 0 : index
    %c0_20 = arith.constant 0 : index
    %25 = vector.load %arg13[%c0_19, %c0_20] : memref<32x1xf32, #tpu.memory_space<vmem>>, vector<32x1xf32>
    %cst_21 = arith.constant dense<0.000000e+00> : vector<32x1xf32>
    %26 = tpu.matmul %24, %25, %cst_21 {dimension_numbers = #tpu.dot_dimension_numbers<[1], [0], [0], [1], [0, 0, 1, 1], [], []>} : vector<32x32xf32>, vector<32x1xf32>, vector<32x1xf32> -> vector<32x1xf32>
    %c0_i32_22 = arith.constant 0 : i32
    %27 = arith.cmpi eq, %arg1, %c0_i32_22 : i32
    %28 = arith.extui %27 : i1 to i32
    %c0_i32_23 = arith.constant 0 : i32
    %29 = arith.cmpi ne, %28, %c0_i32_23 : i32
    scf.if %29 {
      %cst_25 = arith.constant 0.000000e+00 : f32
      %33 = vector.broadcast %cst_25 : f32 to vector<32x16xf32>
      %34 = arith.cmpf ogt, %10, %33 : vector<32x16xf32>
      %cst_26 = arith.constant -1.000000e+30 : f32
      %35 = vector.shape_cast %26 : vector<32x1xf32> to vector<32x1xf32>
      %36 = vector.broadcast %35 : vector<32x1xf32> to vector<32x16xf32>
      %37 = vector.broadcast %cst_26 : f32 to vector<32x16xf32>
      %38 = arith.select %34, %36, %37 : vector<32x16xi1>, vector<32x16xf32>
      %cst_27 = arith.constant dense<0xFF800000> : vector<16xf32>
      %39 = vector.multi_reduction <maximumf>, %38, %cst_27 [0] : vector<32x16xf32> to vector<16xf32>
      %40 = vector.shape_cast %39 : vector<16xf32> to vector<1x16xf32>
      %c0_28 = arith.constant 0 : index
      %c0_29 = arith.constant 0 : index
      %41 = vector.load %arg26[%c0_28, %c0_29] : memref<1x16xf32, #tpu.memory_space<vmem>>, vector<1x16xf32>
      %42 = arith.maximumf %41, %40 : vector<1x16xf32>
      %c0_30 = arith.constant 0 : index
      %c0_31 = arith.constant 0 : index
      %43 = vector.load %arg26[%c0_30, %c0_31] : memref<1x16xf32, #tpu.memory_space<vmem>>, vector<1x16xf32>
      tpu.vector_store %arg26[%c0_30, %c0_31], %42 {strides = array<i32>} : memref<1x16xf32, #tpu.memory_space<vmem>>, vector<1x16xf32>,
    } else {
    }
    %c1_i32 = arith.constant 1 : i32
    %30 = arith.cmpi eq, %arg1, %c1_i32 : i32
    %31 = arith.extui %30 : i1 to i32
    %c0_i32_24 = arith.constant 0 : i32
    %32 = arith.cmpi ne, %31, %c0_i32_24 : i32
    scf.if %32 {
      %c0_i32_25 = arith.constant 0 : i32
      %33 = arith.cmpi eq, %arg2, %c0_i32_25 : i32
      %34 = arith.extui %33 : i1 to i32
      %c0_i32_26 = arith.constant 0 : i32
      %35 = arith.cmpi ne, %34, %c0_i32_26 : i32
      scf.if %35 {
        %cst_46 = arith.constant 0.000000e+00 : f32
        %56 = vector.broadcast %cst_46 : f32 to vector<16x1xf32>
        %c0_47 = arith.constant 0 : index
        %c0_48 = arith.constant 0 : index
        %57 = vector.load %arg27[%c0_47, %c0_48] : memref<16x1xf32, #tpu.memory_space<vmem>>, vector<16x1xf32>
        tpu.vector_store %arg27[%c0_47, %c0_48], %56 {strides = array<i32>} : memref<16x1xf32, #tpu.memory_space<vmem>>, vector<16x1xf32>,
        %cst_49 = arith.constant 0.000000e+00 : f32
        %58 = vector.broadcast %cst_49 : f32 to vector<16x32xf32>
        %c0_50 = arith.constant 0 : index
        %c0_51 = arith.constant 0 : index
        %59 = vector.load %arg28[%c0_50, %c0_51] : memref<16x32xf32, #tpu.memory_space<vmem>>, vector<16x32xf32>
        tpu.vector_store %arg28[%c0_50, %c0_51], %58 {strides = array<i32>} : memref<16x32xf32, #tpu.memory_space<vmem>>, vector<16x32xf32>,
      } else {
      }
      %c0_27 = arith.constant 0 : index
      %c0_28 = arith.constant 0 : index
      %36 = vector.load %arg26[%c0_27, %c0_28] : memref<1x16xf32, #tpu.memory_space<vmem>>, vector<1x16xf32>
      %cst_29 = arith.constant dense<0.000000e+00> : vector<32x1xf32>
      %37 = tpu.matmul %10, %36, %cst_29 {dimension_numbers = #tpu.dot_dimension_numbers<[1], [1], [0], [0], [0, 0, 1, 0], [], []>} : vector<32x16xf32>, vector<1x16xf32>, vector<32x1xf32> -> vector<32x1xf32>
      %38 = arith.subf %26, %37 : vector<32x1xf32>
      %cst_30 = arith.constant 4.000000e+01 : f32
      %39 = vector.broadcast %cst_30 : f32 to vector<32x1xf32>
      %40 = arith.minimumf %38, %39 : vector<32x1xf32>
      %41 = math.exp %40 : vector<32x1xf32>
      %c0_31 = arith.constant 0 : index
      %c0_32 = arith.constant 0 : index
      %42 = vector.load %arg14[%c0_31, %c0_32] : memref<1x32xf32, #tpu.memory_space<vmem>>, vector<1x32xf32>
      %cst_33 = arith.constant dense<0.000000e+00> : vector<32x32xf32>
      %43 = tpu.matmul %41, %42, %cst_33 {dimension_numbers = #tpu.dot_dimension_numbers<[1], [0], [0], [1], [0, 0, 1, 1], [], []>} : vector<32x1xf32>, vector<1x32xf32>, vector<32x32xf32> -> vector<32x32xf32>
      %44 = arith.mulf %43, %12 : vector<32x32xf32>
      %c0_34 = arith.constant 0 : index
      %c0_35 = arith.constant 0 : index
      %45 = vector.load %arg27[%c0_34, %c0_35] : memref<16x1xf32, #tpu.memory_space<vmem>>, vector<16x1xf32>
      %cst_36 = arith.constant dense<0.000000e+00> : vector<16x1xf32>
      %46 = tpu.matmul %10, %41, %cst_36 {dimension_numbers = #tpu.dot_dimension_numbers<[0], [0], [1], [1], [0, 1, 1, 1], [], []>} : vector<32x16xf32>, vector<32x1xf32>, vector<16x1xf32> -> vector<16x1xf32>
      %47 = arith.addf %45, %46 : vector<16x1xf32>
      %c0_37 = arith.constant 0 : index
      %c0_38 = arith.constant 0 : index
      %48 = vector.load %arg27[%c0_37, %c0_38] : memref<16x1xf32, #tpu.memory_space<vmem>>, vector<16x1xf32>
      tpu.vector_store %arg27[%c0_37, %c0_38], %47 {strides = array<i32>} : memref<16x1xf32, #tpu.memory_space<vmem>>, vector<16x1xf32>,
      %c0_39 = arith.constant 0 : index
      %c0_40 = arith.constant 0 : index
      %49 = vector.load %arg28[%c0_39, %c0_40] : memref<16x32xf32, #tpu.memory_space<vmem>>, vector<16x32xf32>
      %cst_41 = arith.constant dense<0.000000e+00> : vector<16x32xf32>
      %50 = tpu.matmul %10, %44, %cst_41 {dimension_numbers = #tpu.dot_dimension_numbers<[0], [0], [1], [1], [0, 1, 1, 1], [], []>} : vector<32x16xf32>, vector<32x32xf32>, vector<16x32xf32> -> vector<16x32xf32>
      %51 = arith.addf %49, %50 : vector<16x32xf32>
      %c0_42 = arith.constant 0 : index
      %c0_43 = arith.constant 0 : index
      %52 = vector.load %arg28[%c0_42, %c0_43] : memref<16x32xf32, #tpu.memory_space<vmem>>, vector<16x32xf32>
      tpu.vector_store %arg28[%c0_42, %c0_43], %51 {strides = array<i32>} : memref<16x32xf32, #tpu.memory_space<vmem>>, vector<16x32xf32>,
      %c1_i32_44 = arith.constant 1 : i32
      %53 = arith.cmpi eq, %arg2, %c1_i32_44 : i32
      %54 = arith.extui %53 : i1 to i32
      %c0_i32_45 = arith.constant 0 : i32
      %55 = arith.cmpi ne, %54, %c0_i32_45 : i32
      scf.if %55 {
        %c0_46 = arith.constant 0 : index
        %c0_47 = arith.constant 0 : index
        %56 = vector.load %arg27[%c0_46, %c0_47] : memref<16x1xf32, #tpu.memory_space<vmem>>, vector<16x1xf32>
        %cst_48 = arith.constant 9.99999968E-21 : f32
        %57 = vector.broadcast %cst_48 : f32 to vector<16x1xf32>
        %58 = arith.maximumf %56, %57 : vector<16x1xf32>
        %59 = tpu.reciprocal %58 {approx = true} : vector<16x1xf32> -> vector<16x1xf32>
        %c0_49 = arith.constant 0 : index
        %c0_50 = arith.constant 0 : index
        %60 = vector.load %arg14[%c0_49, %c0_50] : memref<1x32xf32, #tpu.memory_space<vmem>>, vector<1x32xf32>
        %cst_51 = arith.constant dense<0.000000e+00> : vector<16x32xf32>
        %61 = tpu.matmul %59, %60, %cst_51 {dimension_numbers = #tpu.dot_dimension_numbers<[1], [0], [0], [1], [0, 0, 1, 1], [], []>} : vector<16x1xf32>, vector<1x32xf32>, vector<16x32xf32> -> vector<16x32xf32>
        %c0_52 = arith.constant 0 : index
        %c0_53 = arith.constant 0 : index
        %62 = vector.load %arg28[%c0_52, %c0_53] : memref<16x32xf32, #tpu.memory_space<vmem>>, vector<16x32xf32>
        %63 = arith.mulf %62, %61 : vector<16x32xf32>
        %c0_54 = arith.constant 0 : index
        %c0_55 = arith.constant 0 : index
        %64 = vector.load %arg22[%c0_54, %c0_55] : memref<32x32xf32, #tpu.memory_space<vmem>>, vector<32x32xf32>
        %cst_56 = arith.constant dense<0.000000e+00> : vector<16x32xf32>
        %65 = tpu.matmul %63, %64, %cst_56 {dimension_numbers = #tpu.dot_dimension_numbers<[1], [0], [0], [1], [0, 0, 1, 1], [], []>} : vector<16x32xf32>, vector<32x32xf32>, vector<16x32xf32> -> vector<16x32xf32>
        %c0_57 = arith.constant 0 : index
        %c0_58 = arith.constant 0 : index
        %66 = vector.load %arg15[%c0_57, %c0_58] : memref<1x32xf32, #tpu.memory_space<vmem>>, vector<1x32xf32>
        %67 = vector.broadcast %66 : vector<1x32xf32> to vector<16x32xf32>
        %68 = arith.addf %65, %67 : vector<16x32xf32>
        %c16_i32 = arith.constant 16 : i32
        %69 = arith.muli %arg0, %c16_i32 : i32
        %70 = arith.index_cast %69 : i32 to index
        %c0_59 = arith.constant 0 : index
        %71 = vector.load %arg3[%70, %c0_59] : memref<16x128xf32, #tpu.memory_space<vmem>>, vector<16x128xf32>
        %c0_60 = arith.constant 0 : index
        %c0_61 = arith.constant 0 : index
        %72 = vector.load %arg16[%c0_60, %c0_61] : memref<128x32xf32, #tpu.memory_space<vmem>>, vector<128x32xf32>
        %cst_62 = arith.constant dense<0.000000e+00> : vector<16x32xf32>
        %73 = tpu.matmul %71, %72, %cst_62 {dimension_numbers = #tpu.dot_dimension_numbers<[1], [0], [0], [1], [0, 0, 1, 1], [], []>} : vector<16x128xf32>, vector<128x32xf32>, vector<16x32xf32> -> vector<16x32xf32>
        %c0_63 = arith.constant 0 : index
        %c0_64 = arith.constant 0 : index
        %74 = vector.load %arg17[%c0_63, %c0_64] : memref<1x32xf32, #tpu.memory_space<vmem>>, vector<1x32xf32>
        %75 = vector.broadcast %74 : vector<1x32xf32> to vector<16x32xf32>
        %76 = arith.addf %73, %75 : vector<16x32xf32>
        %77 = arith.addf %68, %76 : vector<16x32xf32>
        %c0_65 = arith.constant 0 : index
        %c0_66 = arith.constant 0 : index
        %78 = vector.load %arg20[%c0_65, %c0_66] : memref<1x32xf32, #tpu.memory_space<vmem>>, vector<1x32xf32>
        %79 = vector.broadcast %78 : vector<1x32xf32> to vector<16x32xf32>
        %80 = arith.subf %77, %79 : vector<16x32xf32>
        %c0_67 = arith.constant 0 : index
        %c0_68 = arith.constant 0 : index
        %81 = vector.load %arg21[%c0_67, %c0_68] : memref<1x32xf32, #tpu.memory_space<vmem>>, vector<1x32xf32>
        %cst_69 = arith.constant 9.99999974E-6 : f32
        %82 = vector.broadcast %cst_69 : f32 to vector<1x32xf32>
        %83 = arith.addf %81, %82 : vector<1x32xf32>
        %84 = math.rsqrt %83 : vector<1x32xf32>
        %85 = vector.broadcast %84 : vector<1x32xf32> to vector<16x32xf32>
        %86 = arith.mulf %80, %85 : vector<16x32xf32>
        %c0_70 = arith.constant 0 : index
        %c0_71 = arith.constant 0 : index
        %87 = vector.load %arg18[%c0_70, %c0_71] : memref<1x32xf32, #tpu.memory_space<vmem>>, vector<1x32xf32>
        %88 = vector.broadcast %87 : vector<1x32xf32> to vector<16x32xf32>
        %89 = arith.mulf %86, %88 : vector<16x32xf32>
        %c0_72 = arith.constant 0 : index
        %c0_73 = arith.constant 0 : index
        %90 = vector.load %arg19[%c0_72, %c0_73] : memref<1x32xf32, #tpu.memory_space<vmem>>, vector<1x32xf32>
        %91 = vector.broadcast %90 : vector<1x32xf32> to vector<16x32xf32>
        %92 = arith.addf %89, %91 : vector<16x32xf32>
        %cst_74 = arith.constant 0.000000e+00 : f32
        %93 = vector.broadcast %cst_74 : f32 to vector<16x32xf32>
        %94 = arith.maximumf %92, %93 : vector<16x32xf32>
        %c0_75 = arith.constant 0 : index
        %c0_76 = arith.constant 0 : index
        %95 = vector.load %arg23[%c0_75, %c0_76] : memref<32x1xf32, #tpu.memory_space<vmem>>, vector<32x1xf32>
        %cst_77 = arith.constant dense<0.000000e+00> : vector<16x1xf32>
        %96 = tpu.matmul %94, %95, %cst_77 {dimension_numbers = #tpu.dot_dimension_numbers<[1], [0], [0], [1], [0, 0, 1, 1], [], []>} : vector<16x32xf32>, vector<32x1xf32>, vector<16x1xf32> -> vector<16x1xf32>
        %c0_78 = arith.constant 0 : index
        %c0_79 = arith.constant 0 : index
        %97 = vector.load %arg24[%c0_78, %c0_79] : memref<1x1xf32, #tpu.memory_space<vmem>>, vector<1x1xf32>
        %98 = vector.broadcast %97 : vector<1x1xf32> to vector<16x1xf32>
        %99 = arith.addf %96, %98 : vector<16x1xf32>
        %c0_80 = arith.constant 0 : index
        %c0_81 = arith.constant 0 : index
        %100 = vector.load %arg25[%c0_80, %c0_81] : memref<16x1xf32, #tpu.memory_space<vmem>>, vector<16x1xf32>
        tpu.vector_store %arg25[%c0_80, %c0_81], %99 {strides = array<i32>} : memref<16x1xf32, #tpu.memory_space<vmem>>, vector<16x1xf32>,
      } else {
      }
    } else {
    }
    return
  }
  func.func @transform_0(%arg0: i32, %arg1: i32, %arg2: i32) -> (i32, i32) {
    %c0_i32 = arith.constant 0 : i32
    %c0_i32_0 = arith.constant 0 : i32
    %c0_i32_1 = arith.constant 0 : i32
    return %c0_i32, %c0_i32_0 : i32, i32
  }
  func.func @transform_1(%arg0: i32, %arg1: i32, %arg2: i32) -> (i32, i32) {
    %c0_i32 = arith.constant 0 : i32
    %c0_i32_0 = arith.constant 0 : i32
    return %arg2, %c0_i32 : i32, i32
  }
  func.func @transform_2(%arg0: i32, %arg1: i32, %arg2: i32) -> (i32, i32) {
    %c0_i32 = arith.constant 0 : i32
    %c0_i32_0 = arith.constant 0 : i32
    return %arg2, %c0_i32 : i32, i32
  }
  func.func @transform_3(%arg0: i32, %arg1: i32, %arg2: i32) -> (i32, i32) {
    %c0_i32 = arith.constant 0 : i32
    %c0_i32_0 = arith.constant 0 : i32
    return %arg2, %c0_i32 : i32, i32
  }
  func.func @transform_4(%arg0: i32, %arg1: i32, %arg2: i32) -> (i32, i32) {
    %c0_i32 = arith.constant 0 : i32
    return %arg2, %arg0 : i32, i32
  }
  func.func @transform_5(%arg0: i32, %arg1: i32, %arg2: i32) -> (i32, i32) {
    %c0_i32 = arith.constant 0 : i32
    %c0_i32_0 = arith.constant 0 : i32
    %c0_i32_1 = arith.constant 0 : i32
    return %c0_i32, %c0_i32_0 : i32, i32
  }
  func.func @transform_6(%arg0: i32, %arg1: i32, %arg2: i32) -> (i32, i32) {
    %c0_i32 = arith.constant 0 : i32
    %c0_i32_0 = arith.constant 0 : i32
    %c0_i32_1 = arith.constant 0 : i32
    return %c0_i32, %c0_i32_0 : i32, i32
  }
  func.func @transform_7(%arg0: i32, %arg1: i32, %arg2: i32) -> (i32, i32) {
    %c0_i32 = arith.constant 0 : i32
    %c0_i32_0 = arith.constant 0 : i32
    %c0_i32_1 = arith.constant 0 : i32
    return %c0_i32, %c0_i32_0 : i32, i32
  }
  func.func @transform_8(%arg0: i32, %arg1: i32, %arg2: i32) -> (i32, i32) {
    %c0_i32 = arith.constant 0 : i32
    %c0_i32_0 = arith.constant 0 : i32
    %c0_i32_1 = arith.constant 0 : i32
    return %c0_i32, %c0_i32_0 : i32, i32
  }
  func.func @transform_9(%arg0: i32, %arg1: i32, %arg2: i32) -> (i32, i32) {
    %c0_i32 = arith.constant 0 : i32
    %c0_i32_0 = arith.constant 0 : i32
    %c0_i32_1 = arith.constant 0 : i32
    return %c0_i32, %c0_i32_0 : i32, i32
  }
  func.func @transform_10(%arg0: i32, %arg1: i32, %arg2: i32) -> (i32, i32) {
    %c0_i32 = arith.constant 0 : i32
    %c0_i32_0 = arith.constant 0 : i32
    %c0_i32_1 = arith.constant 0 : i32
    return %c0_i32, %c0_i32_0 : i32, i32
  }
  func.func @transform_11(%arg0: i32, %arg1: i32, %arg2: i32) -> (i32, i32) {
    %c0_i32 = arith.constant 0 : i32
    %c0_i32_0 = arith.constant 0 : i32
    %c0_i32_1 = arith.constant 0 : i32
    return %c0_i32, %c0_i32_0 : i32, i32
  }
  func.func @transform_12(%arg0: i32, %arg1: i32, %arg2: i32) -> (i32, i32) {
    %c0_i32 = arith.constant 0 : i32
    %c0_i32_0 = arith.constant 0 : i32
    %c0_i32_1 = arith.constant 0 : i32
    return %c0_i32, %c0_i32_0 : i32, i32
  }
  func.func @transform_13(%arg0: i32, %arg1: i32, %arg2: i32) -> (i32, i32) {
    %c0_i32 = arith.constant 0 : i32
    %c0_i32_0 = arith.constant 0 : i32
    %c0_i32_1 = arith.constant 0 : i32
    return %c0_i32, %c0_i32_0 : i32, i32
  }
  func.func @transform_14(%arg0: i32, %arg1: i32, %arg2: i32) -> (i32, i32) {
    %c0_i32 = arith.constant 0 : i32
    %c0_i32_0 = arith.constant 0 : i32
    %c0_i32_1 = arith.constant 0 : i32
    return %c0_i32, %c0_i32_0 : i32, i32
  }
  func.func @transform_15(%arg0: i32, %arg1: i32, %arg2: i32) -> (i32, i32) {
    %c0_i32 = arith.constant 0 : i32
    %c0_i32_0 = arith.constant 0 : i32
    %c0_i32_1 = arith.constant 0 : i32
    return %c0_i32, %c0_i32_0 : i32, i32
  }
  func.func @transform_16(%arg0: i32, %arg1: i32, %arg2: i32) -> (i32, i32) {
    %c0_i32 = arith.constant 0 : i32
    %c0_i32_0 = arith.constant 0 : i32
    %c0_i32_1 = arith.constant 0 : i32
    return %c0_i32, %c0_i32_0 : i32, i32
  }
  func.func @transform_17(%arg0: i32, %arg1: i32, %arg2: i32) -> (i32, i32) {
    %c0_i32 = arith.constant 0 : i32
    %c0_i32_0 = arith.constant 0 : i32
    %c0_i32_1 = arith.constant 0 : i32
    return %c0_i32, %c0_i32_0 : i32, i32
  }
  func.func @transform_18(%arg0: i32, %arg1: i32, %arg2: i32) -> (i32, i32) {
    %c0_i32 = arith.constant 0 : i32
    %c0_i32_0 = arith.constant 0 : i32
    %c0_i32_1 = arith.constant 0 : i32
    return %c0_i32, %c0_i32_0 : i32, i32
  }
  func.func @transform_19(%arg0: i32, %arg1: i32, %arg2: i32) -> (i32, i32) {
    %c0_i32 = arith.constant 0 : i32
    %c0_i32_0 = arith.constant 0 : i32
    %c0_i32_1 = arith.constant 0 : i32
    return %c0_i32, %c0_i32_0 : i32, i32
  }
  func.func @transform_20(%arg0: i32, %arg1: i32, %arg2: i32) -> (i32, i32) {
    %c0_i32 = arith.constant 0 : i32
    %c0_i32_0 = arith.constant 0 : i32
    %c0_i32_1 = arith.constant 0 : i32
    return %c0_i32, %c0_i32_0 : i32, i32
  }
  func.func @transform_21(%arg0: i32, %arg1: i32, %arg2: i32) -> (i32, i32) {
    %c0_i32 = arith.constant 0 : i32
    %c0_i32_0 = arith.constant 0 : i32
    %c0_i32_1 = arith.constant 0 : i32
    return %c0_i32, %c0_i32_0 : i32, i32
  }
  func.func @transform_22(%arg0: i32, %arg1: i32, %arg2: i32) -> (i32, i32) {
    %c0_i32 = arith.constant 0 : i32
    %c0_i32_0 = arith.constant 0 : i32
    return %arg0, %c0_i32 : i32, i32
  }
}

module attributes {stable_mosaic.version = 11 : i64} {
  func.func @kernel(%arg0: i32, %arg1: i32, %arg2: i32, %arg3: memref<16x8xf32, #tpu.memory_space<vmem>>, %arg4: memref<32x8xf32, #tpu.memory_space<vmem>>, %arg5: memref<32x16xbf16, #tpu.memory_space<vmem>>, %arg6: memref<32x16xbf16, #tpu.memory_space<vmem>>, %arg7: memref<32x16xbf16, #tpu.memory_space<vmem>>, %arg8: memref<32x128xf32, #tpu.memory_space<vmem>>, %arg9: memref<1x128xf32, #tpu.memory_space<vmem>>, %arg10: memref<32x128xf32, #tpu.memory_space<vmem>>, %arg11: memref<1x128xf32, #tpu.memory_space<vmem>>, %arg12: memref<8x128xf32, #tpu.memory_space<vmem>>, %arg13: memref<128x4xf32, #tpu.memory_space<vmem>>, %arg14: memref<4x128xf32, #tpu.memory_space<vmem>>, %arg15: memref<1x128xf32, #tpu.memory_space<vmem>>, %arg16: memref<32x128xf32, #tpu.memory_space<vmem>>, %arg17: memref<1x128xf32, #tpu.memory_space<vmem>>, %arg18: memref<1x128xf32, #tpu.memory_space<vmem>>, %arg19: memref<1x128xf32, #tpu.memory_space<vmem>>, %arg20: memref<1x128xf32, #tpu.memory_space<vmem>>, %arg21: memref<1x128xf32, #tpu.memory_space<vmem>>, %arg22: memref<8x32xf32, #tpu.memory_space<vmem>>, %arg23: memref<1x32xf32, #tpu.memory_space<vmem>>, %arg24: memref<16x128xf32, #tpu.memory_space<vmem>>, %arg25: memref<4x16xf32, #tpu.memory_space<vmem>>, %arg26: memref<16x4xf32, #tpu.memory_space<vmem>>, %arg27: memref<16x128xf32, #tpu.memory_space<vmem>>, %arg28: memref<16x32xf32, #tpu.memory_space<vmem>>) attributes {dimension_semantics = [#tpu.dimension_semantics<parallel>, #tpu.dimension_semantics<arbitrary>, #tpu.dimension_semantics<arbitrary>], iteration_bounds = array<i64: 1, 2, 2>, scalar_prefetch = 0 : i64, scratch_operands = 4 : i64, tpu.core_type = #tpu.core_type<tc>, window_params = [{pipeline_mode = #tpu.pipeline_mode<synchronous>, transform_indices = @transform_0, window_bounds = array<i64: 16, 8>}, {transform_indices = @transform_1, window_bounds = array<i64: 32, 8>}, {transform_indices = @transform_2, window_bounds = array<i64: 32, 16>}, {transform_indices = @transform_3, window_bounds = array<i64: 32, 16>}, {transform_indices = @transform_4, window_bounds = array<i64: 32, 16>}, {pipeline_mode = #tpu.pipeline_mode<synchronous>, transform_indices = @transform_5, window_bounds = array<i64: 32, 128>}, {pipeline_mode = #tpu.pipeline_mode<synchronous>, transform_indices = @transform_6, window_bounds = array<i64: 1, 128>}, {pipeline_mode = #tpu.pipeline_mode<synchronous>, transform_indices = @transform_7, window_bounds = array<i64: 32, 128>}, {pipeline_mode = #tpu.pipeline_mode<synchronous>, transform_indices = @transform_8, window_bounds = array<i64: 1, 128>}, {pipeline_mode = #tpu.pipeline_mode<synchronous>, transform_indices = @transform_9, window_bounds = array<i64: 8, 128>}, {pipeline_mode = #tpu.pipeline_mode<synchronous>, transform_indices = @transform_10, window_bounds = array<i64: 128, 4>}, {pipeline_mode = #tpu.pipeline_mode<synchronous>, transform_indices = @transform_11, window_bounds = array<i64: 4, 128>}, {pipeline_mode = #tpu.pipeline_mode<synchronous>, transform_indices = @transform_12, window_bounds = array<i64: 1, 128>}, {pipeline_mode = #tpu.pipeline_mode<synchronous>, transform_indices = @transform_13, window_bounds = array<i64: 32, 128>}, {pipeline_mode = #tpu.pipeline_mode<synchronous>, transform_indices = @transform_14, window_bounds = array<i64: 1, 128>}, {pipeline_mode = #tpu.pipeline_mode<synchronous>, transform_indices = @transform_15, window_bounds = array<i64: 1, 128>}, {pipeline_mode = #tpu.pipeline_mode<synchronous>, transform_indices = @transform_16, window_bounds = array<i64: 1, 128>}, {pipeline_mode = #tpu.pipeline_mode<synchronous>, transform_indices = @transform_17, window_bounds = array<i64: 1, 128>}, {pipeline_mode = #tpu.pipeline_mode<synchronous>, transform_indices = @transform_18, window_bounds = array<i64: 1, 128>}, {pipeline_mode = #tpu.pipeline_mode<synchronous>, transform_indices = @transform_19, window_bounds = array<i64: 8, 32>}, {pipeline_mode = #tpu.pipeline_mode<synchronous>, transform_indices = @transform_20, window_bounds = array<i64: 1, 32>}, {transform_indices = @transform_21, window_bounds = array<i64: 16, 128>}]} {
    %c0_i32 = arith.constant 0 : i32
    %0 = arith.cmpi eq, %arg1, %c0_i32 : i32
    %c0_i32_0 = arith.constant 0 : i32
    %1 = arith.cmpi eq, %arg2, %c0_i32_0 : i32
    %2 = arith.andi %0, %1 : i1
    %3 = arith.extui %2 : i1 to i32
    %c0_i32_1 = arith.constant 0 : i32
    %4 = arith.cmpi ne, %3, %c0_i32_1 : i32
    scf.if %4 {
      %c0_33 = arith.constant 0 : index
      %c0_34 = arith.constant 0 : index
      %42 = vector.load %arg3[%c0_33, %c0_34] : memref<16x8xf32, #tpu.memory_space<vmem>>, vector<16x8xf32>
      %c0_35 = arith.constant 0 : index
      %c0_36 = arith.constant 0 : index
      %43 = vector.load %arg22[%c0_35, %c0_36] : memref<8x32xf32, #tpu.memory_space<vmem>>, vector<8x32xf32>
      %cst_37 = arith.constant dense<0.000000e+00> : vector<16x32xf32>
      %44 = tpu.matmul %42, %43, %cst_37 {dimension_numbers = #tpu.dot_dimension_numbers<[1], [0], [0], [1], [0, 0, 1, 1], [], []>} : vector<16x8xf32>, vector<8x32xf32>, vector<16x32xf32> -> vector<16x32xf32>
      %c0_38 = arith.constant 0 : index
      %c0_39 = arith.constant 0 : index
      %45 = vector.load %arg23[%c0_38, %c0_39] : memref<1x32xf32, #tpu.memory_space<vmem>>, vector<1x32xf32>
      %46 = vector.broadcast %45 : vector<1x32xf32> to vector<16x32xf32>
      %47 = arith.addf %44, %46 : vector<16x32xf32>
      %cst_40 = arith.constant 0.000000e+00 : f32
      %48 = vector.broadcast %cst_40 : f32 to vector<16x32xf32>
      %49 = arith.maximumf %47, %48 : vector<16x32xf32>
      %c0_41 = arith.constant 0 : index
      %c0_42 = arith.constant 0 : index
      %50 = vector.load %arg28[%c0_41, %c0_42] : memref<16x32xf32, #tpu.memory_space<vmem>>, vector<16x32xf32>
      tpu.vector_store %arg28[%c0_41, %c0_42], %49 {strides = array<i32>} : memref<16x32xf32, #tpu.memory_space<vmem>>, vector<16x32xf32>,
      %cst_43 = arith.constant -1.000000e+30 : f32
      %51 = vector.broadcast %cst_43 : f32 to vector<4x16xf32>
      %c0_44 = arith.constant 0 : index
      %c0_45 = arith.constant 0 : index
      %52 = vector.load %arg25[%c0_44, %c0_45] : memref<4x16xf32, #tpu.memory_space<vmem>>, vector<4x16xf32>
      tpu.vector_store %arg25[%c0_44, %c0_45], %51 {strides = array<i32>} : memref<4x16xf32, #tpu.memory_space<vmem>>, vector<4x16xf32>,
    } else {
    }
    %c0 = arith.constant 0 : index
    %c0_2 = arith.constant 0 : index
    %5 = vector.load %arg5[%c0, %c0_2] : memref<32x16xbf16, #tpu.memory_space<vmem>>, vector<32x16xbf16>
    %6 = arith.extf %5 : vector<32x16xbf16> to vector<32x16xf32>
    %c0_3 = arith.constant 0 : index
    %c0_4 = arith.constant 0 : index
    %7 = vector.load %arg6[%c0_3, %c0_4] : memref<32x16xbf16, #tpu.memory_space<vmem>>, vector<32x16xbf16>
    %8 = arith.extf %7 : vector<32x16xbf16> to vector<32x16xf32>
    %c0_5 = arith.constant 0 : index
    %c0_6 = arith.constant 0 : index
    %9 = vector.load %arg7[%c0_5, %c0_6] : memref<32x16xbf16, #tpu.memory_space<vmem>>, vector<32x16xbf16>
    %10 = arith.extf %9 : vector<32x16xbf16> to vector<32x16xf32>
    %c0_7 = arith.constant 0 : index
    %c0_8 = arith.constant 0 : index
    %11 = vector.load %arg28[%c0_7, %c0_8] : memref<16x32xf32, #tpu.memory_space<vmem>>, vector<16x32xf32>
    %cst = arith.constant dense<0.000000e+00> : vector<32x32xf32>
    %12 = tpu.matmul %6, %11, %cst {dimension_numbers = #tpu.dot_dimension_numbers<[1], [0], [0], [1], [0, 0, 1, 1], [], []>} : vector<32x16xf32>, vector<16x32xf32>, vector<32x32xf32> -> vector<32x32xf32>
    %c0_9 = arith.constant 0 : index
    %c0_10 = arith.constant 0 : index
    %13 = vector.load %arg8[%c0_9, %c0_10] : memref<32x128xf32, #tpu.memory_space<vmem>>, vector<32x128xf32>
    %cst_11 = arith.constant dense<0.000000e+00> : vector<32x128xf32>
    %14 = tpu.matmul %12, %13, %cst_11 {dimension_numbers = #tpu.dot_dimension_numbers<[1], [0], [0], [1], [0, 0, 1, 1], [], []>} : vector<32x32xf32>, vector<32x128xf32>, vector<32x128xf32> -> vector<32x128xf32>
    %c0_12 = arith.constant 0 : index
    %c0_13 = arith.constant 0 : index
    %15 = vector.load %arg9[%c0_12, %c0_13] : memref<1x128xf32, #tpu.memory_space<vmem>>, vector<1x128xf32>
    %16 = vector.broadcast %15 : vector<1x128xf32> to vector<32x128xf32>
    %17 = arith.addf %14, %16 : vector<32x128xf32>
    %cst_14 = arith.constant dense<0.000000e+00> : vector<32x32xf32>
    %18 = tpu.matmul %8, %11, %cst_14 {dimension_numbers = #tpu.dot_dimension_numbers<[1], [0], [0], [1], [0, 0, 1, 1], [], []>} : vector<32x16xf32>, vector<16x32xf32>, vector<32x32xf32> -> vector<32x32xf32>
    %c0_15 = arith.constant 0 : index
    %c0_16 = arith.constant 0 : index
    %19 = vector.load %arg10[%c0_15, %c0_16] : memref<32x128xf32, #tpu.memory_space<vmem>>, vector<32x128xf32>
    %cst_17 = arith.constant dense<0.000000e+00> : vector<32x128xf32>
    %20 = tpu.matmul %18, %19, %cst_17 {dimension_numbers = #tpu.dot_dimension_numbers<[1], [0], [0], [1], [0, 0, 1, 1], [], []>} : vector<32x32xf32>, vector<32x128xf32>, vector<32x128xf32> -> vector<32x128xf32>
    %c0_18 = arith.constant 0 : index
    %c0_19 = arith.constant 0 : index
    %21 = vector.load %arg11[%c0_18, %c0_19] : memref<1x128xf32, #tpu.memory_space<vmem>>, vector<1x128xf32>
    %22 = vector.broadcast %21 : vector<1x128xf32> to vector<32x128xf32>
    %23 = arith.addf %20, %22 : vector<32x128xf32>
    %24 = arith.addf %17, %23 : vector<32x128xf32>
    %c0_20 = arith.constant 0 : index
    %c0_21 = arith.constant 0 : index
    %25 = vector.load %arg4[%c0_20, %c0_21] : memref<32x8xf32, #tpu.memory_space<vmem>>, vector<32x8xf32>
    %c0_22 = arith.constant 0 : index
    %c0_23 = arith.constant 0 : index
    %26 = vector.load %arg12[%c0_22, %c0_23] : memref<8x128xf32, #tpu.memory_space<vmem>>, vector<8x128xf32>
    %cst_24 = arith.constant dense<0.000000e+00> : vector<32x128xf32>
    %27 = tpu.matmul %25, %26, %cst_24 {dimension_numbers = #tpu.dot_dimension_numbers<[1], [0], [0], [1], [0, 0, 1, 1], [], []>} : vector<32x8xf32>, vector<8x128xf32>, vector<32x128xf32> -> vector<32x128xf32>
    %28 = arith.addf %24, %27 : vector<32x128xf32>
    %cst_25 = arith.constant 0.000000e+00 : f32
    %29 = vector.broadcast %cst_25 : f32 to vector<32x128xf32>
    %30 = arith.cmpf oge, %28, %29 : vector<32x128xf32>
    %cst_26 = arith.constant 2.000000e-01 : f32
    %31 = vector.broadcast %cst_26 : f32 to vector<32x128xf32>
    %32 = arith.mulf %31, %28 : vector<32x128xf32>
    %33 = arith.select %30, %28, %32 : vector<32x128xi1>, vector<32x128xf32>
    %c0_27 = arith.constant 0 : index
    %c0_28 = arith.constant 0 : index
    %34 = vector.load %arg13[%c0_27, %c0_28] : memref<128x4xf32, #tpu.memory_space<vmem>>, vector<128x4xf32>
    %cst_29 = arith.constant dense<0.000000e+00> : vector<32x4xf32>
    %35 = tpu.matmul %33, %34, %cst_29 {dimension_numbers = #tpu.dot_dimension_numbers<[1], [0], [0], [1], [0, 0, 1, 1], [], []>} : vector<32x128xf32>, vector<128x4xf32>, vector<32x4xf32> -> vector<32x4xf32>
    %c0_i32_30 = arith.constant 0 : i32
    %36 = arith.cmpi eq, %arg1, %c0_i32_30 : i32
    %37 = arith.extui %36 : i1 to i32
    %c0_i32_31 = arith.constant 0 : i32
    %38 = arith.cmpi ne, %37, %c0_i32_31 : i32
    scf.if %38 {
      %cst_33 = arith.constant 0.000000e+00 : f32
      %42 = vector.broadcast %cst_33 : f32 to vector<32x16xf32>
      %43 = arith.cmpf ogt, %10, %42 : vector<32x16xf32>
      %44 = vector.extract_strided_slice %35 {offsets = [0, 0], sizes = [32, 1], strides = [1, 1]} : vector<32x4xf32> to vector<32x1xf32>
      %cst_34 = arith.constant -1.000000e+30 : f32
      %45 = vector.shape_cast %44 : vector<32x1xf32> to vector<32x1xf32>
      %46 = vector.broadcast %45 : vector<32x1xf32> to vector<32x16xf32>
      %47 = vector.broadcast %cst_34 : f32 to vector<32x16xf32>
      %48 = arith.select %43, %46, %47 : vector<32x16xi1>, vector<32x16xf32>
      %cst_35 = arith.constant dense<0xFF800000> : vector<16xf32>
      %49 = vector.multi_reduction <maximumf>, %48, %cst_35 [0] : vector<32x16xf32> to vector<16xf32>
      %50 = vector.shape_cast %49 : vector<16xf32> to vector<1x16xf32>
      %c0_36 = arith.constant 0 : index
      %c0_37 = arith.constant 0 : index
      %51 = vector.load %arg25[%c0_36, %c0_37] : memref<4x16xf32, #tpu.memory_space<vmem>>, vector<1x16xf32>
      %52 = arith.maximumf %51, %50 : vector<1x16xf32>
      %c0_38 = arith.constant 0 : index
      %c0_39 = arith.constant 0 : index
      %53 = vector.load %arg25[%c0_38, %c0_39] : memref<4x16xf32, #tpu.memory_space<vmem>>, vector<1x16xf32>
      tpu.vector_store %arg25[%c0_38, %c0_39], %52 {strides = array<i32>} : memref<4x16xf32, #tpu.memory_space<vmem>>, vector<1x16xf32>,
      %cst_40 = arith.constant 0.000000e+00 : f32
      %54 = vector.broadcast %cst_40 : f32 to vector<32x16xf32>
      %55 = arith.cmpf ogt, %10, %54 : vector<32x16xf32>
      %56 = vector.extract_strided_slice %35 {offsets = [0, 1], sizes = [32, 1], strides = [1, 1]} : vector<32x4xf32> to vector<32x1xf32>
      %cst_41 = arith.constant -1.000000e+30 : f32
      %57 = vector.shape_cast %56 : vector<32x1xf32> to vector<32x1xf32>
      %58 = vector.broadcast %57 : vector<32x1xf32> to vector<32x16xf32>
      %59 = vector.broadcast %cst_41 : f32 to vector<32x16xf32>
      %60 = arith.select %55, %58, %59 : vector<32x16xi1>, vector<32x16xf32>
      %cst_42 = arith.constant dense<0xFF800000> : vector<16xf32>
      %61 = vector.multi_reduction <maximumf>, %60, %cst_42 [0] : vector<32x16xf32> to vector<16xf32>
      %62 = vector.shape_cast %61 : vector<16xf32> to vector<1x16xf32>
      %c1 = arith.constant 1 : index
      %c0_43 = arith.constant 0 : index
      %63 = vector.load %arg25[%c1, %c0_43] : memref<4x16xf32, #tpu.memory_space<vmem>>, vector<1x16xf32>
      %64 = arith.maximumf %63, %62 : vector<1x16xf32>
      %c1_44 = arith.constant 1 : index
      %c0_45 = arith.constant 0 : index
      %65 = vector.load %arg25[%c1_44, %c0_45] : memref<4x16xf32, #tpu.memory_space<vmem>>, vector<1x16xf32>
      tpu.vector_store %arg25[%c1_44, %c0_45], %64 {strides = array<i32>} : memref<4x16xf32, #tpu.memory_space<vmem>>, vector<1x16xf32>,
      %cst_46 = arith.constant 0.000000e+00 : f32
      %66 = vector.broadcast %cst_46 : f32 to vector<32x16xf32>
      %67 = arith.cmpf ogt, %10, %66 : vector<32x16xf32>
      %68 = vector.extract_strided_slice %35 {offsets = [0, 2], sizes = [32, 1], strides = [1, 1]} : vector<32x4xf32> to vector<32x1xf32>
      %cst_47 = arith.constant -1.000000e+30 : f32
      %69 = vector.shape_cast %68 : vector<32x1xf32> to vector<32x1xf32>
      %70 = vector.broadcast %69 : vector<32x1xf32> to vector<32x16xf32>
      %71 = vector.broadcast %cst_47 : f32 to vector<32x16xf32>
      %72 = arith.select %67, %70, %71 : vector<32x16xi1>, vector<32x16xf32>
      %cst_48 = arith.constant dense<0xFF800000> : vector<16xf32>
      %73 = vector.multi_reduction <maximumf>, %72, %cst_48 [0] : vector<32x16xf32> to vector<16xf32>
      %74 = vector.shape_cast %73 : vector<16xf32> to vector<1x16xf32>
      %c2 = arith.constant 2 : index
      %c0_49 = arith.constant 0 : index
      %75 = vector.load %arg25[%c2, %c0_49] : memref<4x16xf32, #tpu.memory_space<vmem>>, vector<1x16xf32>
      %76 = arith.maximumf %75, %74 : vector<1x16xf32>
      %c2_50 = arith.constant 2 : index
      %c0_51 = arith.constant 0 : index
      %77 = vector.load %arg25[%c2_50, %c0_51] : memref<4x16xf32, #tpu.memory_space<vmem>>, vector<1x16xf32>
      tpu.vector_store %arg25[%c2_50, %c0_51], %76 {strides = array<i32>} : memref<4x16xf32, #tpu.memory_space<vmem>>, vector<1x16xf32>,
      %cst_52 = arith.constant 0.000000e+00 : f32
      %78 = vector.broadcast %cst_52 : f32 to vector<32x16xf32>
      %79 = arith.cmpf ogt, %10, %78 : vector<32x16xf32>
      %80 = vector.extract_strided_slice %35 {offsets = [0, 3], sizes = [32, 1], strides = [1, 1]} : vector<32x4xf32> to vector<32x1xf32>
      %cst_53 = arith.constant -1.000000e+30 : f32
      %81 = vector.shape_cast %80 : vector<32x1xf32> to vector<32x1xf32>
      %82 = vector.broadcast %81 : vector<32x1xf32> to vector<32x16xf32>
      %83 = vector.broadcast %cst_53 : f32 to vector<32x16xf32>
      %84 = arith.select %79, %82, %83 : vector<32x16xi1>, vector<32x16xf32>
      %cst_54 = arith.constant dense<0xFF800000> : vector<16xf32>
      %85 = vector.multi_reduction <maximumf>, %84, %cst_54 [0] : vector<32x16xf32> to vector<16xf32>
      %86 = vector.shape_cast %85 : vector<16xf32> to vector<1x16xf32>
      %c3 = arith.constant 3 : index
      %c0_55 = arith.constant 0 : index
      %87 = vector.load %arg25[%c3, %c0_55] : memref<4x16xf32, #tpu.memory_space<vmem>>, vector<1x16xf32>
      %88 = arith.maximumf %87, %86 : vector<1x16xf32>
      %c3_56 = arith.constant 3 : index
      %c0_57 = arith.constant 0 : index
      %89 = vector.load %arg25[%c3_56, %c0_57] : memref<4x16xf32, #tpu.memory_space<vmem>>, vector<1x16xf32>
      tpu.vector_store %arg25[%c3_56, %c0_57], %88 {strides = array<i32>} : memref<4x16xf32, #tpu.memory_space<vmem>>, vector<1x16xf32>,
    } else {
    }
    %c1_i32 = arith.constant 1 : i32
    %39 = arith.cmpi eq, %arg1, %c1_i32 : i32
    %40 = arith.extui %39 : i1 to i32
    %c0_i32_32 = arith.constant 0 : i32
    %41 = arith.cmpi ne, %40, %c0_i32_32 : i32
    scf.if %41 {
      %c0_i32_33 = arith.constant 0 : i32
      %42 = arith.cmpi eq, %arg2, %c0_i32_33 : i32
      %43 = arith.extui %42 : i1 to i32
      %c0_i32_34 = arith.constant 0 : i32
      %44 = arith.cmpi ne, %43, %c0_i32_34 : i32
      scf.if %44 {
        %cst_54 = arith.constant 0.000000e+00 : f32
        %65 = vector.broadcast %cst_54 : f32 to vector<16x4xf32>
        %c0_55 = arith.constant 0 : index
        %c0_56 = arith.constant 0 : index
        %66 = vector.load %arg26[%c0_55, %c0_56] : memref<16x4xf32, #tpu.memory_space<vmem>>, vector<16x4xf32>
        tpu.vector_store %arg26[%c0_55, %c0_56], %65 {strides = array<i32>} : memref<16x4xf32, #tpu.memory_space<vmem>>, vector<16x4xf32>,
        %cst_57 = arith.constant 0.000000e+00 : f32
        %67 = vector.broadcast %cst_57 : f32 to vector<16x128xf32>
        %c0_58 = arith.constant 0 : index
        %c0_59 = arith.constant 0 : index
        %68 = vector.load %arg27[%c0_58, %c0_59] : memref<16x128xf32, #tpu.memory_space<vmem>>, vector<16x128xf32>
        tpu.vector_store %arg27[%c0_58, %c0_59], %67 {strides = array<i32>} : memref<16x128xf32, #tpu.memory_space<vmem>>, vector<16x128xf32>,
      } else {
      }
      %c0_35 = arith.constant 0 : index
      %c0_36 = arith.constant 0 : index
      %45 = vector.load %arg25[%c0_35, %c0_36] : memref<4x16xf32, #tpu.memory_space<vmem>>, vector<4x16xf32>
      %cst_37 = arith.constant dense<0.000000e+00> : vector<32x4xf32>
      %46 = tpu.matmul %10, %45, %cst_37 {dimension_numbers = #tpu.dot_dimension_numbers<[1], [1], [0], [0], [0, 0, 1, 0], [], []>} : vector<32x16xf32>, vector<4x16xf32>, vector<32x4xf32> -> vector<32x4xf32>
      %47 = arith.subf %35, %46 : vector<32x4xf32>
      %cst_38 = arith.constant 4.000000e+01 : f32
      %48 = vector.broadcast %cst_38 : f32 to vector<32x4xf32>
      %49 = arith.minimumf %47, %48 : vector<32x4xf32>
      %50 = math.exp %49 : vector<32x4xf32>
      %c0_39 = arith.constant 0 : index
      %c0_40 = arith.constant 0 : index
      %51 = vector.load %arg14[%c0_39, %c0_40] : memref<4x128xf32, #tpu.memory_space<vmem>>, vector<4x128xf32>
      %cst_41 = arith.constant dense<0.000000e+00> : vector<32x128xf32>
      %52 = tpu.matmul %50, %51, %cst_41 {dimension_numbers = #tpu.dot_dimension_numbers<[1], [0], [0], [1], [0, 0, 1, 1], [], []>} : vector<32x4xf32>, vector<4x128xf32>, vector<32x128xf32> -> vector<32x128xf32>
      %53 = arith.mulf %52, %17 : vector<32x128xf32>
      %c0_42 = arith.constant 0 : index
      %c0_43 = arith.constant 0 : index
      %54 = vector.load %arg26[%c0_42, %c0_43] : memref<16x4xf32, #tpu.memory_space<vmem>>, vector<16x4xf32>
      %cst_44 = arith.constant dense<0.000000e+00> : vector<16x4xf32>
      %55 = tpu.matmul %10, %50, %cst_44 {dimension_numbers = #tpu.dot_dimension_numbers<[0], [0], [1], [1], [0, 1, 1, 1], [], []>} : vector<32x16xf32>, vector<32x4xf32>, vector<16x4xf32> -> vector<16x4xf32>
      %56 = arith.addf %54, %55 : vector<16x4xf32>
      %c0_45 = arith.constant 0 : index
      %c0_46 = arith.constant 0 : index
      %57 = vector.load %arg26[%c0_45, %c0_46] : memref<16x4xf32, #tpu.memory_space<vmem>>, vector<16x4xf32>
      tpu.vector_store %arg26[%c0_45, %c0_46], %56 {strides = array<i32>} : memref<16x4xf32, #tpu.memory_space<vmem>>, vector<16x4xf32>,
      %c0_47 = arith.constant 0 : index
      %c0_48 = arith.constant 0 : index
      %58 = vector.load %arg27[%c0_47, %c0_48] : memref<16x128xf32, #tpu.memory_space<vmem>>, vector<16x128xf32>
      %cst_49 = arith.constant dense<0.000000e+00> : vector<16x128xf32>
      %59 = tpu.matmul %10, %53, %cst_49 {dimension_numbers = #tpu.dot_dimension_numbers<[0], [0], [1], [1], [0, 1, 1, 1], [], []>} : vector<32x16xf32>, vector<32x128xf32>, vector<16x128xf32> -> vector<16x128xf32>
      %60 = arith.addf %58, %59 : vector<16x128xf32>
      %c0_50 = arith.constant 0 : index
      %c0_51 = arith.constant 0 : index
      %61 = vector.load %arg27[%c0_50, %c0_51] : memref<16x128xf32, #tpu.memory_space<vmem>>, vector<16x128xf32>
      tpu.vector_store %arg27[%c0_50, %c0_51], %60 {strides = array<i32>} : memref<16x128xf32, #tpu.memory_space<vmem>>, vector<16x128xf32>,
      %c1_i32_52 = arith.constant 1 : i32
      %62 = arith.cmpi eq, %arg2, %c1_i32_52 : i32
      %63 = arith.extui %62 : i1 to i32
      %c0_i32_53 = arith.constant 0 : i32
      %64 = arith.cmpi ne, %63, %c0_i32_53 : i32
      scf.if %64 {
        %c0_54 = arith.constant 0 : index
        %c0_55 = arith.constant 0 : index
        %65 = vector.load %arg26[%c0_54, %c0_55] : memref<16x4xf32, #tpu.memory_space<vmem>>, vector<16x4xf32>
        %cst_56 = arith.constant 9.99999968E-21 : f32
        %66 = vector.broadcast %cst_56 : f32 to vector<16x4xf32>
        %67 = arith.maximumf %65, %66 : vector<16x4xf32>
        %68 = tpu.reciprocal %67 {approx = true} : vector<16x4xf32> -> vector<16x4xf32>
        %c0_57 = arith.constant 0 : index
        %c0_58 = arith.constant 0 : index
        %69 = vector.load %arg14[%c0_57, %c0_58] : memref<4x128xf32, #tpu.memory_space<vmem>>, vector<4x128xf32>
        %cst_59 = arith.constant dense<0.000000e+00> : vector<16x128xf32>
        %70 = tpu.matmul %68, %69, %cst_59 {dimension_numbers = #tpu.dot_dimension_numbers<[1], [0], [0], [1], [0, 0, 1, 1], [], []>} : vector<16x4xf32>, vector<4x128xf32>, vector<16x128xf32> -> vector<16x128xf32>
        %c0_60 = arith.constant 0 : index
        %c0_61 = arith.constant 0 : index
        %71 = vector.load %arg27[%c0_60, %c0_61] : memref<16x128xf32, #tpu.memory_space<vmem>>, vector<16x128xf32>
        %72 = arith.mulf %71, %70 : vector<16x128xf32>
        %c0_62 = arith.constant 0 : index
        %c0_63 = arith.constant 0 : index
        %73 = vector.load %arg15[%c0_62, %c0_63] : memref<1x128xf32, #tpu.memory_space<vmem>>, vector<1x128xf32>
        %74 = vector.broadcast %73 : vector<1x128xf32> to vector<16x128xf32>
        %75 = arith.addf %72, %74 : vector<16x128xf32>
        %c16_i32 = arith.constant 16 : i32
        %76 = arith.muli %arg0, %c16_i32 : i32
        %77 = arith.index_cast %76 : i32 to index
        %c0_64 = arith.constant 0 : index
        %78 = vector.load %arg28[%77, %c0_64] : memref<16x32xf32, #tpu.memory_space<vmem>>, vector<16x32xf32>
        %c0_65 = arith.constant 0 : index
        %c0_66 = arith.constant 0 : index
        %79 = vector.load %arg16[%c0_65, %c0_66] : memref<32x128xf32, #tpu.memory_space<vmem>>, vector<32x128xf32>
        %cst_67 = arith.constant dense<0.000000e+00> : vector<16x128xf32>
        %80 = tpu.matmul %78, %79, %cst_67 {dimension_numbers = #tpu.dot_dimension_numbers<[1], [0], [0], [1], [0, 0, 1, 1], [], []>} : vector<16x32xf32>, vector<32x128xf32>, vector<16x128xf32> -> vector<16x128xf32>
        %c0_68 = arith.constant 0 : index
        %c0_69 = arith.constant 0 : index
        %81 = vector.load %arg17[%c0_68, %c0_69] : memref<1x128xf32, #tpu.memory_space<vmem>>, vector<1x128xf32>
        %82 = vector.broadcast %81 : vector<1x128xf32> to vector<16x128xf32>
        %83 = arith.addf %80, %82 : vector<16x128xf32>
        %84 = arith.addf %75, %83 : vector<16x128xf32>
        %c0_70 = arith.constant 0 : index
        %c0_71 = arith.constant 0 : index
        %85 = vector.load %arg20[%c0_70, %c0_71] : memref<1x128xf32, #tpu.memory_space<vmem>>, vector<1x128xf32>
        %86 = vector.broadcast %85 : vector<1x128xf32> to vector<16x128xf32>
        %87 = arith.subf %84, %86 : vector<16x128xf32>
        %c0_72 = arith.constant 0 : index
        %c0_73 = arith.constant 0 : index
        %88 = vector.load %arg21[%c0_72, %c0_73] : memref<1x128xf32, #tpu.memory_space<vmem>>, vector<1x128xf32>
        %cst_74 = arith.constant 9.99999974E-6 : f32
        %89 = vector.broadcast %cst_74 : f32 to vector<1x128xf32>
        %90 = arith.addf %88, %89 : vector<1x128xf32>
        %91 = math.rsqrt %90 : vector<1x128xf32>
        %92 = vector.broadcast %91 : vector<1x128xf32> to vector<16x128xf32>
        %93 = arith.mulf %87, %92 : vector<16x128xf32>
        %c0_75 = arith.constant 0 : index
        %c0_76 = arith.constant 0 : index
        %94 = vector.load %arg18[%c0_75, %c0_76] : memref<1x128xf32, #tpu.memory_space<vmem>>, vector<1x128xf32>
        %95 = vector.broadcast %94 : vector<1x128xf32> to vector<16x128xf32>
        %96 = arith.mulf %93, %95 : vector<16x128xf32>
        %c0_77 = arith.constant 0 : index
        %c0_78 = arith.constant 0 : index
        %97 = vector.load %arg19[%c0_77, %c0_78] : memref<1x128xf32, #tpu.memory_space<vmem>>, vector<1x128xf32>
        %98 = vector.broadcast %97 : vector<1x128xf32> to vector<16x128xf32>
        %99 = arith.addf %96, %98 : vector<16x128xf32>
        %cst_79 = arith.constant 0.000000e+00 : f32
        %100 = vector.broadcast %cst_79 : f32 to vector<16x128xf32>
        %101 = arith.maximumf %99, %100 : vector<16x128xf32>
        %c0_80 = arith.constant 0 : index
        %c0_81 = arith.constant 0 : index
        %102 = vector.load %arg24[%c0_80, %c0_81] : memref<16x128xf32, #tpu.memory_space<vmem>>, vector<16x128xf32>
        tpu.vector_store %arg24[%c0_80, %c0_81], %101 {strides = array<i32>} : memref<16x128xf32, #tpu.memory_space<vmem>>, vector<16x128xf32>,
      } else {
      }
    } else {
    }
    return
  }
  func.func @transform_0(%arg0: i32, %arg1: i32, %arg2: i32) -> (i32, i32) {
    %c0_i32 = arith.constant 0 : i32
    %c0_i32_0 = arith.constant 0 : i32
    %c0_i32_1 = arith.constant 0 : i32
    return %c0_i32, %c0_i32_0 : i32, i32
  }
  func.func @transform_1(%arg0: i32, %arg1: i32, %arg2: i32) -> (i32, i32) {
    %c0_i32 = arith.constant 0 : i32
    %c0_i32_0 = arith.constant 0 : i32
    return %arg2, %c0_i32 : i32, i32
  }
  func.func @transform_2(%arg0: i32, %arg1: i32, %arg2: i32) -> (i32, i32) {
    %c0_i32 = arith.constant 0 : i32
    %c0_i32_0 = arith.constant 0 : i32
    return %arg2, %c0_i32 : i32, i32
  }
  func.func @transform_3(%arg0: i32, %arg1: i32, %arg2: i32) -> (i32, i32) {
    %c0_i32 = arith.constant 0 : i32
    %c0_i32_0 = arith.constant 0 : i32
    return %arg2, %c0_i32 : i32, i32
  }
  func.func @transform_4(%arg0: i32, %arg1: i32, %arg2: i32) -> (i32, i32) {
    %c0_i32 = arith.constant 0 : i32
    return %arg2, %arg0 : i32, i32
  }
  func.func @transform_5(%arg0: i32, %arg1: i32, %arg2: i32) -> (i32, i32) {
    %c0_i32 = arith.constant 0 : i32
    %c0_i32_0 = arith.constant 0 : i32
    %c0_i32_1 = arith.constant 0 : i32
    return %c0_i32, %c0_i32_0 : i32, i32
  }
  func.func @transform_6(%arg0: i32, %arg1: i32, %arg2: i32) -> (i32, i32) {
    %c0_i32 = arith.constant 0 : i32
    %c0_i32_0 = arith.constant 0 : i32
    %c0_i32_1 = arith.constant 0 : i32
    return %c0_i32, %c0_i32_0 : i32, i32
  }
  func.func @transform_7(%arg0: i32, %arg1: i32, %arg2: i32) -> (i32, i32) {
    %c0_i32 = arith.constant 0 : i32
    %c0_i32_0 = arith.constant 0 : i32
    %c0_i32_1 = arith.constant 0 : i32
    return %c0_i32, %c0_i32_0 : i32, i32
  }
  func.func @transform_8(%arg0: i32, %arg1: i32, %arg2: i32) -> (i32, i32) {
    %c0_i32 = arith.constant 0 : i32
    %c0_i32_0 = arith.constant 0 : i32
    %c0_i32_1 = arith.constant 0 : i32
    return %c0_i32, %c0_i32_0 : i32, i32
  }
  func.func @transform_9(%arg0: i32, %arg1: i32, %arg2: i32) -> (i32, i32) {
    %c0_i32 = arith.constant 0 : i32
    %c0_i32_0 = arith.constant 0 : i32
    %c0_i32_1 = arith.constant 0 : i32
    return %c0_i32, %c0_i32_0 : i32, i32
  }
  func.func @transform_10(%arg0: i32, %arg1: i32, %arg2: i32) -> (i32, i32) {
    %c0_i32 = arith.constant 0 : i32
    %c0_i32_0 = arith.constant 0 : i32
    %c0_i32_1 = arith.constant 0 : i32
    return %c0_i32, %c0_i32_0 : i32, i32
  }
  func.func @transform_11(%arg0: i32, %arg1: i32, %arg2: i32) -> (i32, i32) {
    %c0_i32 = arith.constant 0 : i32
    %c0_i32_0 = arith.constant 0 : i32
    %c0_i32_1 = arith.constant 0 : i32
    return %c0_i32, %c0_i32_0 : i32, i32
  }
  func.func @transform_12(%arg0: i32, %arg1: i32, %arg2: i32) -> (i32, i32) {
    %c0_i32 = arith.constant 0 : i32
    %c0_i32_0 = arith.constant 0 : i32
    %c0_i32_1 = arith.constant 0 : i32
    return %c0_i32, %c0_i32_0 : i32, i32
  }
  func.func @transform_13(%arg0: i32, %arg1: i32, %arg2: i32) -> (i32, i32) {
    %c0_i32 = arith.constant 0 : i32
    %c0_i32_0 = arith.constant 0 : i32
    %c0_i32_1 = arith.constant 0 : i32
    return %c0_i32, %c0_i32_0 : i32, i32
  }
  func.func @transform_14(%arg0: i32, %arg1: i32, %arg2: i32) -> (i32, i32) {
    %c0_i32 = arith.constant 0 : i32
    %c0_i32_0 = arith.constant 0 : i32
    %c0_i32_1 = arith.constant 0 : i32
    return %c0_i32, %c0_i32_0 : i32, i32
  }
  func.func @transform_15(%arg0: i32, %arg1: i32, %arg2: i32) -> (i32, i32) {
    %c0_i32 = arith.constant 0 : i32
    %c0_i32_0 = arith.constant 0 : i32
    %c0_i32_1 = arith.constant 0 : i32
    return %c0_i32, %c0_i32_0 : i32, i32
  }
  func.func @transform_16(%arg0: i32, %arg1: i32, %arg2: i32) -> (i32, i32) {
    %c0_i32 = arith.constant 0 : i32
    %c0_i32_0 = arith.constant 0 : i32
    %c0_i32_1 = arith.constant 0 : i32
    return %c0_i32, %c0_i32_0 : i32, i32
  }
  func.func @transform_17(%arg0: i32, %arg1: i32, %arg2: i32) -> (i32, i32) {
    %c0_i32 = arith.constant 0 : i32
    %c0_i32_0 = arith.constant 0 : i32
    %c0_i32_1 = arith.constant 0 : i32
    return %c0_i32, %c0_i32_0 : i32, i32
  }
  func.func @transform_18(%arg0: i32, %arg1: i32, %arg2: i32) -> (i32, i32) {
    %c0_i32 = arith.constant 0 : i32
    %c0_i32_0 = arith.constant 0 : i32
    %c0_i32_1 = arith.constant 0 : i32
    return %c0_i32, %c0_i32_0 : i32, i32
  }
  func.func @transform_19(%arg0: i32, %arg1: i32, %arg2: i32) -> (i32, i32) {
    %c0_i32 = arith.constant 0 : i32
    %c0_i32_0 = arith.constant 0 : i32
    %c0_i32_1 = arith.constant 0 : i32
    return %c0_i32, %c0_i32_0 : i32, i32
  }
  func.func @transform_20(%arg0: i32, %arg1: i32, %arg2: i32) -> (i32, i32) {
    %c0_i32 = arith.constant 0 : i32
    %c0_i32_0 = arith.constant 0 : i32
    %c0_i32_1 = arith.constant 0 : i32
    return %c0_i32, %c0_i32_0 : i32, i32
  }
  func.func @transform_21(%arg0: i32, %arg1: i32, %arg2: i32) -> (i32, i32) {
    %c0_i32 = arith.constant 0 : i32
    %c0_i32_0 = arith.constant 0 : i32
    return %arg0, %c0_i32 : i32, i32
  }
}

</mosaic_0001>

<llo_original>
// kernel: _lambda_.2
$region0: #{_lambda_.2}
  #allocation0 [shape = 'u32[]', space=smem, size = 0x4, offset = 0x4, fixed_abs, tag = 'smem constant byte address 0x4 - core index']
  #allocation1 [shape = 'u32[144,128]{1,0:T(1,128)}', space=vmem, size = 0x12000, scoped, tag = 'internal scratch']
  #allocation2 [shape = 'f32[4,16]{1,0:T(4,128)}', space=vmem, size = 0x800, scoped, tag = 'scratch operand']
  #allocation3 [shape = 'f32[16,4]{1,0:T(8,128)}', space=vmem, size = 0x2000, scoped, tag = 'scratch operand']
  #allocation4 [shape = 'f32[16,128]{1,0:T(8,128)}', space=vmem, size = 0x2000, scoped, tag = 'scratch operand']
  #allocation5 [shape = 'f32[16,32]{1,0:T(8,128)}', space=vmem, size = 0x2000, scoped, tag = 'scratch operand']
  %s0 = inlined_call_operand.vmem [shape: f32[16,8], index: 0, kind: input, shape index: {}]
  %s1 = inlined_call_operand.vmem [shape: f32[64,8], index: 1, kind: input, shape index: {}]
  %s2 = inlined_call_operand.vmem [shape: bf16[64,16], index: 2, kind: input, shape index: {}]
  %s3 = inlined_call_operand.vmem [shape: bf16[64,16], index: 3, kind: input, shape index: {}, may-alias: {3,4}]
  %s4 = inlined_call_operand.vmem [shape: bf16[64,16], index: 4, kind: input, shape index: {}, may-alias: {3,4}]
  %s5 = inlined_call_operand.vmem [shape: f32[32,128], index: 5, kind: input, shape index: {}]
  %s6 = inlined_call_operand.vmem [shape: f32[1,128], index: 6, kind: input, shape index: {}]
  %s7 = inlined_call_operand.vmem [shape: f32[32,128], index: 7, kind: input, shape index: {}]
  %s8 = inlined_call_operand.vmem [shape: f32[1,128], index: 8, kind: input, shape index: {}]
  %s9 = inlined_call_operand.vmem [shape: f32[8,128], index: 9, kind: input, shape index: {}]
  %s10 = inlined_call_operand.vmem [shape: f32[128,4], index: 10, kind: input, shape index: {}]
  %s11 = inlined_call_operand.vmem [shape: f32[4,128], index: 11, kind: input, shape index: {}]
  %s12 = inlined_call_operand.vmem [shape: f32[1,128], index: 12, kind: input, shape index: {}]
  %s13 = inlined_call_operand.vmem [shape: f32[32,128], index: 13, kind: input, shape index: {}]
  %s14 = inlined_call_operand.vmem [shape: f32[1,128], index: 14, kind: input, shape index: {}]
  %s15 = inlined_call_operand.vmem [shape: f32[1,128], index: 15, kind: input, shape index: {}]
  %s16 = inlined_call_operand.vmem [shape: f32[1,128], index: 16, kind: input, shape index: {}]
  %s17 = inlined_call_operand.vmem [shape: f32[1,128], index: 17, kind: input, shape index: {}]
  %s18 = inlined_call_operand.vmem [shape: f32[1,128], index: 18, kind: input, shape index: {}]
  %s19 = inlined_call_operand.vmem [shape: f32[8,32], index: 19, kind: input, shape index: {}]
  %s20 = inlined_call_operand.vmem [shape: f32[1,32], index: 20, kind: input, shape index: {}]
  %s21 = inlined_call_operand.vmem [shape: f32[16,128], index: 21, kind: output, shape index: {}]
  %s22 = sld [smem:[#allocation0]]
  $region137: #{_lambda_.2} parent=0
    _
  %s24 = ssub.s32 1, %s22
  %s25 = scalar_select 0, %s24, %s22
  loop: start=0, step=1, limit=6
  $region2: #{_lambda_.2} parent=0 // loop_pre_header
    _
  $region3: #{_lambda_.2} parent=0 // loop_header
    %s27 = sphi 0, %s31
    %p28 = scmp.ge.s32.totalorder %s27, 6
    %s34 = sphi 0, %s53
    %s35 = sphi 0, %s49
    %s36 = sphi 0, %s45
    %s37 = sphi 0, %s34
    %s38 = sphi 0, %s35
    %s39 = sphi 0, %s36
    %s40 = sphi 0, %s37
    %s41 = sphi 0, %s38
    %s42 = sphi 0, %s39
    %s54 = sphi 0, %s54
    %s56 = sphi 0, %s54
    %s57 = sphi 0, %s56
    %s71 = sphi 0, %s57
    %s77 = sphi 0, %s79
    %s80 = sphi 0, %s77
    %s81 = sphi 0, %s80
    %s97 = sphi 0, %s81
    %s103 = sphi 0, %s105
    %s106 = sphi 0, %s103
    %s107 = sphi 0, %s106
    %s123 = sphi 0, %s107
    %s129 = sphi 0, %s131
    %s132 = sphi 0, %s129
    %s133 = sphi 0, %s132
    %s149 = sphi 0, %s133
    %s157 = sphi 0, %s159
    %s160 = sphi 0, %s157
    %s161 = sphi 0, %s160
    %s177 = sphi 0, %s161
    %s181 = sphi 0, %s181
    %s183 = sphi 0, %s181
    %s184 = sphi 0, %s183
    %s198 = sphi 0, %s184
    %s202 = sphi 0, %s202
    %s204 = sphi 0, %s202
    %s205 = sphi 0, %s204
    %s219 = sphi 0, %s205
    %s223 = sphi 0, %s223
    %s225 = sphi 0, %s223
    %s226 = sphi 0, %s225
    %s240 = sphi 0, %s226
    %s244 = sphi 0, %s244
    %s246 = sphi 0, %s244
    %s247 = sphi 0, %s246
    %s261 = sphi 0, %s247
    %s265 = sphi 0, %s265
    %s267 = sphi 0, %s265
    %s268 = sphi 0, %s267
    %s282 = sphi 0, %s268
    %s286 = sphi 0, %s286
    %s288 = sphi 0, %s286
    %s289 = sphi 0, %s288
    %s303 = sphi 0, %s289
    %s307 = sphi 0, %s307
    %s309 = sphi 0, %s307
    %s310 = sphi 0, %s309
    %s324 = sphi 0, %s310
    %s328 = sphi 0, %s328
    %s330 = sphi 0, %s328
    %s331 = sphi 0, %s330
    %s345 = sphi 0, %s331
    %s349 = sphi 0, %s349
    %s351 = sphi 0, %s349
    %s352 = sphi 0, %s351
    %s366 = sphi 0, %s352
    %s370 = sphi 0, %s370
    %s372 = sphi 0, %s370
    %s373 = sphi 0, %s372
    %s387 = sphi 0, %s373
    %s391 = sphi 0, %s391
    %s393 = sphi 0, %s391
    %s394 = sphi 0, %s393
    %s408 = sphi 0, %s394
    %s412 = sphi 0, %s412
    %s414 = sphi 0, %s412
    %s415 = sphi 0, %s414
    %s429 = sphi 0, %s415
    %s433 = sphi 0, %s433
    %s435 = sphi 0, %s433
    %s436 = sphi 0, %s435
    %s450 = sphi 0, %s436
    %s454 = sphi 0, %s454
    %s456 = sphi 0, %s454
    %s457 = sphi 0, %s456
    %s471 = sphi 0, %s457
    %s475 = sphi 0, %s475
    %s477 = sphi 0, %s475
    %s478 = sphi 0, %s477
    %s492 = sphi 0, %s478
    %s496 = sphi 0, %s496
    %s498 = sphi 0, %s496
    %s499 = sphi 0, %s498
    %s513 = sphi 0, %s499
    %s519 = sphi 0, %s521
    %s522 = sphi 0, %s519
    %s523 = sphi 0, %s522
    %s539 = sphi 0, %s523
  $region4: #{_lambda_.2} parent=0 // loop_header_branch
    %30 = sbr.rel (%p28) target = $region8
  $region5: #{_lambda_.2} parent=0 // loop_body
    %s32 = ssub.s32 %s27, 1
    %s33 = ssub.s32 %s27, 2
    %s43 = sadd.s32 1, %s36
    %p44 = scmp.ge.s32.totalorder %s43, 2
    %s45 = scalar_select %p44, 0, %s43
    %s46 = sadd.s32 1, %s35
    %s47 = scalar_select %p44, %s46, %s35
    %p48 = scmp.ge.s32.totalorder %s47, 2
    %s49 = scalar_select %p48, 0, %s47
    %s50 = sadd.s32 1, %s34
    %s51 = scalar_select %p48, %s50, %s34
    %p52 = scmp.ge.s32.totalorder %s51, 1
    %s53 = scalar_select %p52, 0, %s51
    %s55 = sadd.s32 %s54, 1
    %p58 = scmp.eq.s32.totalorder %s27, 3
    %p59 = scmp.ne.s32.totalorder %s54, %s56
    %p60 = scmp.eq.s32.totalorder %s27, 0
    %p61 = por %p59, %p60
    %p62 = scmp.ne.s32.totalorder %s54, %s56
    %p63 = scmp.eq.s32.totalorder %s32, 3
    %p64 = por %p62, %p63
    %p65 = scmp.ne.s32.totalorder %s56, %s57
    %p66 = scmp.eq.s32.totalorder %s32, 0
    %p67 = por %p65, %p66
    %p68 = scmp.ne.s32.totalorder %s56, %s57
    %p69 = scmp.eq.s32.totalorder %s33, 3
    %p70 = por %p68, %p69
    %p72 = scmp.ne.s32.totalorder %s57, %s71
    %p73 = scmp.eq.s32.totalorder %s33, 0
    %p74 = por %p72, %p73
    %s75 = ssub.s32 %s36, %s45
    %p76 = scmp.eq.s32.totalorder %s75, 0
    %s78 = sadd.s32 %s77, 1
    %s79 = scalar_select %p76, %s77, %s78
    %p82 = pneg %p76
    %p83 = scmp.eq.s32.totalorder %s27, 3
    %p84 = por %p82, %p83
    %p85 = scmp.ne.s32.totalorder %s77, %s80
    %p86 = scmp.eq.s32.totalorder %s27, 0
    %p87 = por %p85, %p86
    %p88 = scmp.ne.s32.totalorder %s77, %s80
    %p89 = scmp.eq.s32.totalorder %s32, 3
    %p90 = por %p88, %p89
    %p91 = scmp.ne.s32.totalorder %s80, %s81
    %p92 = scmp.eq.s32.totalorder %s32, 0
    %p93 = por %p91, %p92
    %p94 = scmp.ne.s32.totalorder %s80, %s81
    %p95 = scmp.eq.s32.totalorder %s33, 3
    %p96 = por %p94, %p95
    %p98 = scmp.ne.s32.totalorder %s81, %s97
    %p99 = scmp.eq.s32.totalorder %s33, 0
    %p100 = por %p98, %p99
    %s101 = ssub.s32 %s36, %s45
    %p102 = scmp.eq.s32.totalorder %s101, 0
    %s104 = sadd.s32 %s103, 1
    %s105 = scalar_select %p102, %s103, %s104
    %p108 = pneg %p102
    %p109 = scmp.eq.s32.totalorder %s27, 3
    %p110 = por %p108, %p109
    %p111 = scmp.ne.s32.totalorder %s103, %s106
    %p112 = scmp.eq.s32.totalorder %s27, 0
    %p113 = por %p111, %p112
    %p114 = scmp.ne.s32.totalorder %s103, %s106
    %p115 = scmp.eq.s32.totalorder %s32, 3
    %p116 = por %p114, %p115
    %p117 = scmp.ne.s32.totalorder %s106, %s107
    %p118 = scmp.eq.s32.totalorder %s32, 0
    %p119 = por %p117, %p118
    %p120 = scmp.ne.s32.totalorder %s106, %s107
    %p121 = scmp.eq.s32.totalorder %s33, 3
    %p122 = por %p120, %p121
    %p124 = scmp.ne.s32.totalorder %s107, %s123
    %p125 = scmp.eq.s32.totalorder %s33, 0
    %p126 = por %p124, %p125
    %s127 = ssub.s32 %s36, %s45
    %p128 = scmp.eq.s32.totalorder %s127, 0
    %s130 = sadd.s32 %s129, 1
    %s131 = scalar_select %p128, %s129, %s130
    %p134 = pneg %p128
    %p135 = scmp.eq.s32.totalorder %s27, 3
    %p136 = por %p134, %p135
    %p137 = scmp.ne.s32.totalorder %s129, %s132
    %p138 = scmp.eq.s32.totalorder %s27, 0
    %p139 = por %p137, %p138
    %p140 = scmp.ne.s32.totalorder %s129, %s132
    %p141 = scmp.eq.s32.totalorder %s32, 3
    %p142 = por %p140, %p141
    %p143 = scmp.ne.s32.totalorder %s132, %s133
    %p144 = scmp.eq.s32.totalorder %s32, 0
    %p145 = por %p143, %p144
    %p146 = scmp.ne.s32.totalorder %s132, %s133
    %p147 = scmp.eq.s32.totalorder %s33, 3
    %p148 = por %p146, %p147
    %p150 = scmp.ne.s32.totalorder %s133, %s149
    %p151 = scmp.eq.s32.totalorder %s33, 0
    %p152 = por %p150, %p151
    %s153 = ssub.s32 %s36, %s45
    %s154 = ssub.s32 %s34, %s53
    %s155 = sor.u32 %s153, %s154
    %p156 = scmp.eq.s32.totalorder %s155, 0
    %s158 = sadd.s32 %s157, 1
    %s159 = scalar_select %p156, %s157, %s158
    %p162 = pneg %p156
    %p163 = scmp.eq.s32.totalorder %s27, 3
    %p164 = por %p162, %p163
    %p165 = scmp.ne.s32.totalorder %s157, %s160
    %p166 = scmp.eq.s32.totalorder %s27, 0
    %p167 = por %p165, %p166
    %p168 = scmp.ne.s32.totalorder %s157, %s160
    %p169 = scmp.eq.s32.totalorder %s32, 3
    %p170 = por %p168, %p169
    %p171 = scmp.ne.s32.totalorder %s160, %s161
    %p172 = scmp.eq.s32.totalorder %s32, 0
    %p173 = por %p171, %p172
    %p174 = scmp.ne.s32.totalorder %s160, %s161
    %p175 = scmp.eq.s32.totalorder %s33, 3
    %p176 = por %p174, %p175
    %p178 = scmp.ne.s32.totalorder %s161, %s177
    %p179 = scmp.eq.s32.totalorder %s33, 0
    %p180 = por %p178, %p179
    %s182 = sadd.s32 %s181, 1
    %p185 = scmp.eq.s32.totalorder %s27, 3
    %p186 = scmp.ne.s32.totalorder %s181, %s183
    %p187 = scmp.eq.s32.totalorder %s27, 0
    %p188 = por %p186, %p187
    %p189 = scmp.ne.s32.totalorder %s181, %s183
    %p190 = scmp.eq.s32.totalorder %s32, 3
    %p191 = por %p189, %p190
    %p192 = scmp.ne.s32.totalorder %s183, %s184
    %p193 = scmp.eq.s32.totalorder %s32, 0
    %p194 = por %p192, %p193
    %p195 = scmp.ne.s32.totalorder %s183, %s184
    %p196 = scmp.eq.s32.totalorder %s33, 3
    %p197 = por %p195, %p196
    %p199 = scmp.ne.s32.totalorder %s184, %s198
    %p200 = scmp.eq.s32.totalorder %s33, 0
    %p201 = por %p199, %p200
    %s203 = sadd.s32 %s202, 1
    %p206 = scmp.eq.s32.totalorder %s27, 3
    %p207 = scmp.ne.s32.totalorder %s202, %s204
    %p208 = scmp.eq.s32.totalorder %s27, 0
    %p209 = por %p207, %p208
    %p210 = scmp.ne.s32.totalorder %s202, %s204
    %p211 = scmp.eq.s32.totalorder %s32, 3
    %p212 = por %p210, %p211
    %p213 = scmp.ne.s32.totalorder %s204, %s205
    %p214 = scmp.eq.s32.totalorder %s32, 0
    %p215 = por %p213, %p214
    %p216 = scmp.ne.s32.totalorder %s204, %s205
    %p217 = scmp.eq.s32.totalorder %s33, 3
    %p218 = por %p216, %p217
    %p220 = scmp.ne.s32.totalorder %s205, %s219
    %p221 = scmp.eq.s32.totalorder %s33, 0
    %p222 = por %p220, %p221
    %s224 = sadd.s32 %s223, 1
    %p227 = scmp.eq.s32.totalorder %s27, 3
    %p228 = scmp.ne.s32.totalorder %s223, %s225
    %p229 = scmp.eq.s32.totalorder %s27, 0
    %p230 = por %p228, %p229
    %p231 = scmp.ne.s32.totalorder %s223, %s225
    %p232 = scmp.eq.s32.totalorder %s32, 3
    %p233 = por %p231, %p232
    %p234 = scmp.ne.s32.totalorder %s225, %s226
    %p235 = scmp.eq.s32.totalorder %s32, 0
    %p236 = por %p234, %p235
    %p237 = scmp.ne.s32.totalorder %s225, %s226
    %p238 = scmp.eq.s32.totalorder %s33, 3
    %p239 = por %p237, %p238
    %p241 = scmp.ne.s32.totalorder %s226, %s240
    %p242 = scmp.eq.s32.totalorder %s33, 0
    %p243 = por %p241, %p242
    %s245 = sadd.s32 %s244, 1
    %p248 = scmp.eq.s32.totalorder %s27, 3
    %p249 = scmp.ne.s32.totalorder %s244, %s246
    %p250 = scmp.eq.s32.totalorder %s27, 0
    %p251 = por %p249, %p250
    %p252 = scmp.ne.s32.totalorder %s244, %s246
    %p253 = scmp.eq.s32.totalorder %s32, 3
    %p254 = por %p252, %p253
    %p255 = scmp.ne.s32.totalorder %s246, %s247
    %p256 = scmp.eq.s32.totalorder %s32, 0
    %p257 = por %p255, %p256
    %p258 = scmp.ne.s32.totalorder %s246, %s247
    %p259 = scmp.eq.s32.totalorder %s33, 3
    %p260 = por %p258, %p259
    %p262 = scmp.ne.s32.totalorder %s247, %s261
    %p263 = scmp.eq.s32.totalorder %s33, 0
    %p264 = por %p262, %p263
    %s266 = sadd.s32 %s265, 1
    %p269 = scmp.eq.s32.totalorder %s27, 3
    %p270 = scmp.ne.s32.totalorder %s265, %s267
    %p271 = scmp.eq.s32.totalorder %s27, 0
    %p272 = por %p270, %p271
    %p273 = scmp.ne.s32.totalorder %s265, %s267
    %p274 = scmp.eq.s32.totalorder %s32, 3
    %p275 = por %p273, %p274
    %p276 = scmp.ne.s32.totalorder %s267, %s268
    %p277 = scmp.eq.s32.totalorder %s32, 0
    %p278 = por %p276, %p277
    %p279 = scmp.ne.s32.totalorder %s267, %s268
    %p280 = scmp.eq.s32.totalorder %s33, 3
    %p281 = por %p279, %p280
    %p283 = scmp.ne.s32.totalorder %s268, %s282
    %p284 = scmp.eq.s32.totalorder %s33, 0
    %p285 = por %p283, %p284
    %s287 = sadd.s32 %s286, 1
    %p290 = scmp.eq.s32.totalorder %s27, 3
    %p291 = scmp.ne.s32.totalorder %s286, %s288
    %p292 = scmp.eq.s32.totalorder %s27, 0
    %p293 = por %p291, %p292
    %p294 = scmp.ne.s32.totalorder %s286, %s288
    %p295 = scmp.eq.s32.totalorder %s32, 3
    %p296 = por %p294, %p295
    %p297 = scmp.ne.s32.totalorder %s288, %s289
    %p298 = scmp.eq.s32.totalorder %s32, 0
    %p299 = por %p297, %p298
    %p300 = scmp.ne.s32.totalorder %s288, %s289
    %p301 = scmp.eq.s32.totalorder %s33, 3
    %p302 = por %p300, %p301
    %p304 = scmp.ne.s32.totalorder %s289, %s303
    %p305 = scmp.eq.s32.totalorder %s33, 0
    %p306 = por %p304, %p305
    %s308 = sadd.s32 %s307, 1
    %p311 = scmp.eq.s32.totalorder %s27, 3
    %p312 = scmp.ne.s32.totalorder %s307, %s309
    %p313 = scmp.eq.s32.totalorder %s27, 0
    %p314 = por %p312, %p313
    %p315 = scmp.ne.s32.totalorder %s307, %s309
    %p316 = scmp.eq.s32.totalorder %s32, 3
    %p317 = por %p315, %p316
    %p318 = scmp.ne.s32.totalorder %s309, %s310
    %p319 = scmp.eq.s32.totalorder %s32, 0
    %p320 = por %p318, %p319
    %p321 = scmp.ne.s32.totalorder %s309, %s310
    %p322 = scmp.eq.s32.totalorder %s33, 3
    %p323 = por %p321, %p322
    %p325 = scmp.ne.s32.totalorder %s310, %s324
    %p326 = scmp.eq.s32.totalorder %s33, 0
    %p327 = por %p325, %p326
    %s329 = sadd.s32 %s328, 1
    %p332 = scmp.eq.s32.totalorder %s27, 3
    %p333 = scmp.ne.s32.totalorder %s328, %s330
    %p334 = scmp.eq.s32.totalorder %s27, 0
    %p335 = por %p333, %p334
    %p336 = scmp.ne.s32.totalorder %s328, %s330
    %p337 = scmp.eq.s32.totalorder %s32, 3
    %p338 = por %p336, %p337
    %p339 = scmp.ne.s32.totalorder %s330, %s331
    %p340 = scmp.eq.s32.totalorder %s32, 0
    %p341 = por %p339, %p340
    %p342 = scmp.ne.s32.totalorder %s330, %s331
    %p343 = scmp.eq.s32.totalorder %s33, 3
    %p344 = por %p342, %p343
    %p346 = scmp.ne.s32.totalorder %s331, %s345
    %p347 = scmp.eq.s32.totalorder %s33, 0
    %p348 = por %p346, %p347
    %s350 = sadd.s32 %s349, 1
    %p353 = scmp.eq.s32.totalorder %s27, 3
    %p354 = scmp.ne.s32.totalorder %s349, %s351
    %p355 = scmp.eq.s32.totalorder %s27, 0
    %p356 = por %p354, %p355
    %p357 = scmp.ne.s32.totalorder %s349, %s351
    %p358 = scmp.eq.s32.totalorder %s32, 3
    %p359 = por %p357, %p358
    %p360 = scmp.ne.s32.totalorder %s351, %s352
    %p361 = scmp.eq.s32.totalorder %s32, 0
    %p362 = por %p360, %p361
    %p363 = scmp.ne.s32.totalorder %s351, %s352
    %p364 = scmp.eq.s32.totalorder %s33, 3
    %p365 = por %p363, %p364
    %p367 = scmp.ne.s32.totalorder %s352, %s366
    %p368 = scmp.eq.s32.totalorder %s33, 0
    %p369 = por %p367, %p368
    %s371 = sadd.s32 %s370, 1
    %p374 = scmp.eq.s32.totalorder %s27, 3
    %p375 = scmp.ne.s32.totalorder %s370, %s372
    %p376 = scmp.eq.s32.totalorder %s27, 0
    %p377 = por %p375, %p376
    %p378 = scmp.ne.s32.totalorder %s370, %s372
    %p379 = scmp.eq.s32.totalorder %s32, 3
    %p380 = por %p378, %p379
    %p381 = scmp.ne.s32.totalorder %s372, %s373
    %p382 = scmp.eq.s32.totalorder %s32, 0
    %p383 = por %p381, %p382
    %p384 = scmp.ne.s32.totalorder %s372, %s373
    %p385 = scmp.eq.s32.totalorder %s33, 3
    %p386 = por %p384, %p385
    %p388 = scmp.ne.s32.totalorder %s373, %s387
    %p389 = scmp.eq.s32.totalorder %s33, 0
    %p390 = por %p388, %p389
    %s392 = sadd.s32 %s391, 1
    %p395 = scmp.eq.s32.totalorder %s27, 3
    %p396 = scmp.ne.s32.totalorder %s391, %s393
    %p397 = scmp.eq.s32.totalorder %s27, 0
    %p398 = por %p396, %p397
    %p399 = scmp.ne.s32.totalorder %s391, %s393
    %p400 = scmp.eq.s32.totalorder %s32, 3
    %p401 = por %p399, %p400
    %p402 = scmp.ne.s32.totalorder %s393, %s394
    %p403 = scmp.eq.s32.totalorder %s32, 0
    %p404 = por %p402, %p403
    %p405 = scmp.ne.s32.totalorder %s393, %s394
    %p406 = scmp.eq.s32.totalorder %s33, 3
    %p407 = por %p405, %p406
    %p409 = scmp.ne.s32.totalorder %s394, %s408
    %p410 = scmp.eq.s32.totalorder %s33, 0
    %p411 = por %p409, %p410
    %s413 = sadd.s32 %s412, 1
    %p416 = scmp.eq.s32.totalorder %s27, 3
    %p417 = scmp.ne.s32.totalorder %s412, %s414
    %p418 = scmp.eq.s32.totalorder %s27, 0
    %p419 = por %p417, %p418
    %p420 = scmp.ne.s32.totalorder %s412, %s414
    %p421 = scmp.eq.s32.totalorder %s32, 3
    %p422 = por %p420, %p421
    %p423 = scmp.ne.s32.totalorder %s414, %s415
    %p424 = scmp.eq.s32.totalorder %s32, 0
    %p425 = por %p423, %p424
    %p426 = scmp.ne.s32.totalorder %s414, %s415
    %p427 = scmp.eq.s32.totalorder %s33, 3
    %p428 = por %p426, %p427
    %p430 = scmp.ne.s32.totalorder %s415, %s429
    %p431 = scmp.eq.s32.totalorder %s33, 0
    %p432 = por %p430, %p431
    %s434 = sadd.s32 %s433, 1
    %p437 = scmp.eq.s32.totalorder %s27, 3
    %p438 = scmp.ne.s32.totalorder %s433, %s435
    %p439 = scmp.eq.s32.totalorder %s27, 0
    %p440 = por %p438, %p439
    %p441 = scmp.ne.s32.totalorder %s433, %s435
    %p442 = scmp.eq.s32.totalorder %s32, 3
    %p443 = por %p441, %p442
    %p444 = scmp.ne.s32.totalorder %s435, %s436
    %p445 = scmp.eq.s32.totalorder %s32, 0
    %p446 = por %p444, %p445
    %p447 = scmp.ne.s32.totalorder %s435, %s436
    %p448 = scmp.eq.s32.totalorder %s33, 3
    %p449 = por %p447, %p448
    %p451 = scmp.ne.s32.totalorder %s436, %s450
    %p452 = scmp.eq.s32.totalorder %s33, 0
    %p453 = por %p451, %p452
    %s455 = sadd.s32 %s454, 1
    %p458 = scmp.eq.s32.totalorder %s27, 3
    %p459 = scmp.ne.s32.totalorder %s454, %s456
    %p460 = scmp.eq.s32.totalorder %s27, 0
    %p461 = por %p459, %p460
    %p462 = scmp.ne.s32.totalorder %s454, %s456
    %p463 = scmp.eq.s32.totalorder %s32, 3
    %p464 = por %p462, %p463
    %p465 = scmp.ne.s32.totalorder %s456, %s457
    %p466 = scmp.eq.s32.totalorder %s32, 0
    %p467 = por %p465, %p466
    %p468 = scmp.ne.s32.totalorder %s456, %s457
    %p469 = scmp.eq.s32.totalorder %s33, 3
    %p470 = por %p468, %p469
    %p472 = scmp.ne.s32.totalorder %s457, %s471
    %p473 = scmp.eq.s32.totalorder %s33, 0
    %p474 = por %p472, %p473
    %s476 = sadd.s32 %s475, 1
    %p479 = scmp.eq.s32.totalorder %s27, 3
    %p480 = scmp.ne.s32.totalorder %s475, %s477
    %p481 = scmp.eq.s32.totalorder %s27, 0
    %p482 = por %p480, %p481
    %p483 = scmp.ne.s32.totalorder %s475, %s477
    %p484 = scmp.eq.s32.totalorder %s32, 3
    %p485 = por %p483, %p484
    %p486 = scmp.ne.s32.totalorder %s477, %s478
    %p487 = scmp.eq.s32.totalorder %s32, 0
    %p488 = por %p486, %p487
    %p489 = scmp.ne.s32.totalorder %s477, %s478
    %p490 = scmp.eq.s32.totalorder %s33, 3
    %p491 = por %p489, %p490
    %p493 = scmp.ne.s32.totalorder %s478, %s492
    %p494 = scmp.eq.s32.totalorder %s33, 0
    %p495 = por %p493, %p494
    %s497 = sadd.s32 %s496, 1
    %p500 = scmp.eq.s32.totalorder %s27, 3
    %p501 = scmp.ne.s32.totalorder %s496, %s498
    %p502 = scmp.eq.s32.totalorder %s27, 0
    %p503 = por %p501, %p502
    %p504 = scmp.ne.s32.totalorder %s496, %s498
    %p505 = scmp.eq.s32.totalorder %s32, 3
    %p506 = por %p504, %p505
    %p507 = scmp.ne.s32.totalorder %s498, %s499
    %p508 = scmp.eq.s32.totalorder %s32, 0
    %p509 = por %p507, %p508
    %p510 = scmp.ne.s32.totalorder %s498, %s499
    %p511 = scmp.eq.s32.totalorder %s33, 3
    %p512 = por %p510, %p511
    %p514 = scmp.ne.s32.totalorder %s499, %s513
    %p515 = scmp.eq.s32.totalorder %s33, 0
    %p516 = por %p514, %p515
    %s517 = ssub.s32 %s34, %s53
    %p518 = scmp.eq.s32.totalorder %s517, 0
    %s520 = sadd.s32 %s519, 1
    %s521 = scalar_select %p518, %s519, %s520
    %p524 = pneg %p518
    %p525 = scmp.eq.s32.totalorder %s27, 3
    %p526 = por %p524, %p525
    %p527 = scmp.ne.s32.totalorder %s519, %s522
    %p528 = scmp.eq.s32.totalorder %s27, 0
    %p529 = por %p527, %p528
    %p530 = scmp.ne.s32.totalorder %s519, %s522
    %p531 = scmp.eq.s32.totalorder %s32, 3
    %p532 = por %p530, %p531
    %p533 = scmp.ne.s32.totalorder %s522, %s523
    %p534 = scmp.eq.s32.totalorder %s32, 0
    %p535 = por %p533, %p534
    %p536 = scmp.ne.s32.totalorder %s522, %s523
    %p537 = scmp.eq.s32.totalorder %s33, 3
    %p538 = por %p536, %p537
    %p540 = scmp.ne.s32.totalorder %s523, %s539
    %p541 = scmp.eq.s32.totalorder %s33, 0
    %p542 = por %p540, %p541
    %p543 = scmp.le.s32.totalorder 1, %s27
    %p544 = scmp.lt.s32.totalorder %s27, 5
    %p545 = pnand %p543, %p544
    %p546 = pneg %p545
    // Predicated region
    $region9: #{_lambda_.2} parent=5 // pred_check
      _
    $region10: #{_lambda_.2} parent=5 // pred_check_branch
      %548 = sbr.rel (%p545) target = $region12
    $region11: #{_lambda_.2} parent=5 // pred_region
      %s549 = ssub.s32 %s27, 1
      // Predicated region
      $region13: #{_lambda_.2} parent=11 // pred_check
        %p550 = pneg %p67
      $region14: #{_lambda_.2} parent=11 // pred_check_branch
        %552 = sbr.rel (%p550) target = $region16
      $region15: #{_lambda_.2} parent=11 // pred_region
        _
      $region16: #{_lambda_.2} parent=11 // pred_fallthru
        _
      // Predicated region
      $region17: #{_lambda_.2} parent=11 // pred_check
        %p553 = pneg %p194
      $region18: #{_lambda_.2} parent=11 // pred_check_branch
        %555 = sbr.rel (%p553) target = $region20
      $region19: #{_lambda_.2} parent=11 // pred_region
        _
      $region20: #{_lambda_.2} parent=11 // pred_fallthru
        _
      // Predicated region
      $region21: #{_lambda_.2} parent=11 // pred_check
        %p556 = pneg %p215
      $region22: #{_lambda_.2} parent=11 // pred_check_branch
        %558 = sbr.rel (%p556) target = $region24
      $region23: #{_lambda_.2} parent=11 // pred_region
        _
      $region24: #{_lambda_.2} parent=11 // pred_fallthru
        _
      // Predicated region
      $region25: #{_lambda_.2} parent=11 // pred_check
        %p559 = pneg %p236
      $region26: #{_lambda_.2} parent=11 // pred_check_branch
        %561 = sbr.rel (%p559) target = $region28
      $region27: #{_lambda_.2} parent=11 // pred_region
        _
      $region28: #{_lambda_.2} parent=11 // pred_fallthru
        _
      // Predicated region
      $region29: #{_lambda_.2} parent=11 // pred_check
        %p562 = pneg %p257
      $region30: #{_lambda_.2} parent=11 // pred_check_branch
        %564 = sbr.rel (%p562) target = $region32
      $region31: #{_lambda_.2} parent=11 // pred_region
        _
      $region32: #{_lambda_.2} parent=11 // pred_fallthru
        _
      // Predicated region
      $region33: #{_lambda_.2} parent=11 // pred_check
        %p565 = pneg %p278
      $region34: #{_lambda_.2} parent=11 // pred_check_branch
        %567 = sbr.rel (%p565) target = $region36
      $region35: #{_lambda_.2} parent=11 // pred_region
        _
      $region36: #{_lambda_.2} parent=11 // pred_fallthru
        _
      // Predicated region
      $region37: #{_lambda_.2} parent=11 // pred_check
        %p568 = pneg %p299
      $region38: #{_lambda_.2} parent=11 // pred_check_branch
        %570 = sbr.rel (%p568) target = $region40
      $region39: #{_lambda_.2} parent=11 // pred_region
        _
      $region40: #{_lambda_.2} parent=11 // pred_fallthru
        _
      // Predicated region
      $region41: #{_lambda_.2} parent=11 // pred_check
        %p571 = pneg %p320
      $region42: #{_lambda_.2} parent=11 // pred_check_branch
        %573 = sbr.rel (%p571) target = $region44
      $region43: #{_lambda_.2} parent=11 // pred_region
        _
      $region44: #{_lambda_.2} parent=11 // pred_fallthru
        _
      // Predicated region
      $region45: #{_lambda_.2} parent=11 // pred_check
        %p574 = pneg %p341
      $region46: #{_lambda_.2} parent=11 // pred_check_branch
        %576 = sbr.rel (%p574) target = $region48
      $region47: #{_lambda_.2} parent=11 // pred_region
        _
      $region48: #{_lambda_.2} parent=11 // pred_fallthru
        _
      // Predicated region
      $region49: #{_lambda_.2} parent=11 // pred_check
        %p577 = pneg %p362
      $region50: #{_lambda_.2} parent=11 // pred_check_branch
        %579 = sbr.rel (%p577) target = $region52
      $region51: #{_lambda_.2} parent=11 // pred_region
        _
      $region52: #{_lambda_.2} parent=11 // pred_fallthru
        _
      // Predicated region
      $region53: #{_lambda_.2} parent=11 // pred_check
        %p580 = pneg %p383
      $region54: #{_lambda_.2} parent=11 // pred_check_branch
        %582 = sbr.rel (%p580) target = $region56
      $region55: #{_lambda_.2} parent=11 // pred_region
        _
      $region56: #{_lambda_.2} parent=11 // pred_fallthru
        _
      // Predicated region
      $region57: #{_lambda_.2} parent=11 // pred_check
        %p583 = pneg %p404
      $region58: #{_lambda_.2} parent=11 // pred_check_branch
        %585 = sbr.rel (%p583) target = $region60
      $region59: #{_lambda_.2} parent=11 // pred_region
        _
      $region60: #{_lambda_.2} parent=11 // pred_fallthru
        _
      // Predicated region
      $region61: #{_lambda_.2} parent=11 // pred_check
        %p586 = pneg %p425
      $region62: #{_lambda_.2} parent=11 // pred_check_branch
        %588 = sbr.rel (%p586) target = $region64
      $region63: #{_lambda_.2} parent=11 // pred_region
        _
      $region64: #{_lambda_.2} parent=11 // pred_fallthru
        _
      // Predicated region
      $region65: #{_lambda_.2} parent=11 // pred_check
        %p589 = pneg %p446
      $region66: #{_lambda_.2} parent=11 // pred_check_branch
        %591 = sbr.rel (%p589) target = $region68
      $region67: #{_lambda_.2} parent=11 // pred_region
        _
      $region68: #{_lambda_.2} parent=11 // pred_fallthru
        _
      // Predicated region
      $region69: #{_lambda_.2} parent=11 // pred_check
        %p592 = pneg %p467
      $region70: #{_lambda_.2} parent=11 // pred_check_branch
        %594 = sbr.rel (%p592) target = $region72
      $region71: #{_lambda_.2} parent=11 // pred_region
        _
      $region72: #{_lambda_.2} parent=11 // pred_fallthru
        _
      // Predicated region
      $region73: #{_lambda_.2} parent=11 // pred_check
        %p595 = pneg %p488
      $region74: #{_lambda_.2} parent=11 // pred_check_branch
        %597 = sbr.rel (%p595) target = $region76
      $region75: #{_lambda_.2} parent=11 // pred_region
        _
      $region76: #{_lambda_.2} parent=11 // pred_fallthru
        _
      // Predicated region
      $region77: #{_lambda_.2} parent=11 // pred_check
        %p598 = pneg %p509
      $region78: #{_lambda_.2} parent=11 // pred_check_branch
        %600 = sbr.rel (%p598) target = $region80
      $region79: #{_lambda_.2} parent=11 // pred_region
        _
      $region80: #{_lambda_.2} parent=11 // pred_fallthru
        _
    $region12: #{_lambda_.2} parent=5 // pred_fallthru
      _
    %p601 = scmp.lt.s32.totalorder %s27, 4
    // Predicated region
    $region81: #{_lambda_.2} parent=5 // pred_check
      %p602 = pneg %p601
    $region82: #{_lambda_.2} parent=5 // pred_check_branch
      %604 = sbr.rel (%p602) target = $region84
    $region83: #{_lambda_.2} parent=5 // pred_region
      // Predicated region
      $region85: #{_lambda_.2} parent=83 // pred_check
        %p605 = pneg %p87
      $region86: #{_lambda_.2} parent=83 // pred_check_branch
        %607 = sbr.rel (%p605) target = $region88
      $region87: #{_lambda_.2} parent=83 // pred_region
        %s608 = smul.u32 4, %s36
        %p609 = scmp.lt.s32.totalorder %s608, 7
        %s610 = scalar_select %p609, %s608, 7
        %s611 = smul.addr %s610, 8
        %s612 = scalar_lea.vmem %s1, %s611
        %s613 = smul.u32 4, %s36
      $region88: #{_lambda_.2} parent=83 // pred_fallthru
        _
      // Predicated region
      $region89: #{_lambda_.2} parent=83 // pred_check
        %p614 = pneg %p113
      $region90: #{_lambda_.2} parent=83 // pred_check_branch
        %616 = sbr.rel (%p614) target = $region92
      $region91: #{_lambda_.2} parent=83 // pred_region
        %s617 = smul.u32 4, %s36
        %p618 = scmp.lt.s32.totalorder %s617, 7
        %s619 = scalar_select %p618, %s617, 7
        %s620 = smul.addr %s619, 4
        %s621 = scalar_lea.vmem %s2, %s620
        %s622 = smul.u32 4, %s36
      $region92: #{_lambda_.2} parent=83 // pred_fallthru
        _
      // Predicated region
      $region93: #{_lambda_.2} parent=83 // pred_check
        %p623 = pneg %p139
      $region94: #{_lambda_.2} parent=83 // pred_check_branch
        %625 = sbr.rel (%p623) target = $region96
      $region95: #{_lambda_.2} parent=83 // pred_region
        %s626 = smul.u32 4, %s36
        %p627 = scmp.lt.s32.totalorder %s626, 7
        %s628 = scalar_select %p627, %s626, 7
        %s629 = smul.addr %s628, 4
        %s630 = scalar_lea.vmem %s3, %s629
        %s631 = smul.u32 4, %s36
      $region96: #{_lambda_.2} parent=83 // pred_fallthru
        _
      // Predicated region
      $region97: #{_lambda_.2} parent=83 // pred_check
        %p632 = pneg %p167
      $region98: #{_lambda_.2} parent=83 // pred_check_branch
        %634 = sbr.rel (%p632) target = $region100
      $region99: #{_lambda_.2} parent=83 // pred_region
        %s635 = smul.u32 4, %s36
        %p636 = scmp.lt.s32.totalorder %s635, 7
        %s637 = scalar_select %p636, %s635, 7
        %p638 = scmp.lt.s32.totalorder %s34, 0
        %s639 = scalar_select %p638, %s34, 0
        %s640 = sadd.s32 %s639, %s637
        %s641 = smul.addr %s640, 4
        %s642 = scalar_lea.vmem %s4, %s641
        %s643 = smul.u32 4, %s36
      $region100: #{_lambda_.2} parent=83 // pred_fallthru
        _
    $region84: #{_lambda_.2} parent=5 // pred_fallthru
      _
    %p644 = scmp.le.s32.totalorder 1, %s27
    %p645 = scmp.lt.s32.totalorder %s27, 5
    %p646 = pnand %p644, %p645
    %p647 = pneg %p646
    // Predicated region
    $region101: #{_lambda_.2} parent=5 // pred_check
      _
    $region102: #{_lambda_.2} parent=5 // pred_check_branch
      %649 = sbr.rel (%p646) target = $region104
    $region103: #{_lambda_.2} parent=5 // pred_region
      %s650 = ssub.s32 %s27, 1
      %p651 = pneg %p67
      %p652 = pneg %p64
      %s653 = smul.u32 4, %s39
      %p654 = scmp.lt.s32.totalorder %s653, 7
      %s655 = scalar_select %p654, %s653, 7
      %s656 = smul.addr %s655, 8
      %s657 = scalar_lea.vmem %s1, %s656
      %p658 = pneg %p93
      %p659 = pneg %p90
      %s660 = smul.u32 4, %s39
      %p661 = scmp.lt.s32.totalorder %s660, 7
      %s662 = scalar_select %p661, %s660, 7
      %s663 = smul.addr %s662, 4
      %s664 = scalar_lea.vmem %s2, %s663
      %p665 = pneg %p119
      %p666 = pneg %p116
      %s667 = smul.u32 4, %s39
      %p668 = scmp.lt.s32.totalorder %s667, 7
      %s669 = scalar_select %p668, %s667, 7
      %s670 = smul.addr %s669, 4
      %s671 = scalar_lea.vmem %s3, %s670
      %p672 = pneg %p145
      %p673 = pneg %p142
      %s674 = smul.u32 4, %s39
      %p675 = scmp.lt.s32.totalorder %s674, 7
      %s676 = scalar_select %p675, %s674, 7
      %p677 = scmp.lt.s32.totalorder %s37, 0
      %s678 = scalar_select %p677, %s37, 0
      %s679 = sadd.s32 %s678, %s676
      %s680 = smul.addr %s679, 4
      %s681 = scalar_lea.vmem %s4, %s680
      %p682 = pneg %p173
      %p683 = pneg %p170
      %p684 = pneg %p194
      %p685 = pneg %p191
      %p686 = pneg %p215
      %p687 = pneg %p212
      %p688 = pneg %p236
      %p689 = pneg %p233
      %p690 = pneg %p257
      %p691 = pneg %p254
      %p692 = pneg %p278
      %p693 = pneg %p275
      %p694 = pneg %p299
      %p695 = pneg %p296
      %p696 = pneg %p320
      %p697 = pneg %p317
      %p698 = pneg %p341
      %p699 = pneg %p338
      %p700 = pneg %p362
      %p701 = pneg %p359
      %p702 = pneg %p383
      %p703 = pneg %p380
      %p704 = pneg %p404
      %p705 = pneg %p401
      %p706 = pneg %p425
      %p707 = pneg %p422
      %p708 = pneg %p446
      %p709 = pneg %p443
      %p710 = pneg %p467
      %p711 = pneg %p464
      %p712 = pneg %p488
      %p713 = pneg %p485
      %p714 = pneg %p509
      %p715 = pneg %p506
      %p716 = pneg %p535
      %p717 = pneg %p532
      %s718 = smul.u32 2, %s37
      %p719 = scmp.lt.s32.totalorder %s718, 1
      %s720 = scalar_select %p719, %s718, 1
      %s721 = smul.addr %s720, 8
      %s722 = scalar_lea.vmem %s21, %s721
      %s723 = smul.u32 4, %s39
      %p724 = scmp.lt.s32.totalorder %s723, 7
      %s725 = scalar_select %p724, %s723, 7
      %s726 = smul.addr %s725, 8
      %s727 = scalar_lea.vmem %s1, %s726
      %s728 = smul.u32 4, %s39
      %s729 = smul.u32 4, %s39
      %p730 = scmp.lt.s32.totalorder %s729, 7
      %s731 = scalar_select %p730, %s729, 7
      %s732 = smul.addr %s731, 4
      %s733 = scalar_lea.vmem %s2, %s732
      %s734 = smul.u32 4, %s39
      %s735 = smul.u32 4, %s39
      %p736 = scmp.lt.s32.totalorder %s735, 7
      %s737 = scalar_select %p736, %s735, 7
      %s738 = smul.addr %s737, 4
      %s739 = scalar_lea.vmem %s3, %s738
      %s740 = smul.u32 4, %s39
      %s741 = smul.u32 4, %s39
      %p742 = scmp.lt.s32.totalorder %s741, 7
      %s743 = scalar_select %p742, %s741, 7
      %p744 = scmp.lt.s32.totalorder %s37, 0
      %s745 = scalar_select %p744, %s37, 0
      %s746 = sadd.s32 %s745, %s743
      %s747 = smul.addr %s746, 4
      %s748 = scalar_lea.vmem %s4, %s747
      %s749 = smul.u32 4, %s39
      %s750 = smul.u32 2, %s37
      %p751 = scmp.lt.s32.totalorder %s750, 1
      %s752 = scalar_select %p751, %s750, 1
      %s753 = smul.addr %s752, 8
      %s754 = scalar_lea.vmem %s21, %s753
      %s755 = smul.u32 2, %s37
      %p756 = scmp.eq.s32.totalorder %s38, 0
      %p757 = scmp.eq.s32.totalorder %s39, 0
      %p758 = pnand %p756, %p757
      %p759 = pneg %p758
      // Predicated region
      $region105: #{_lambda_.2} parent=103 // pred_check
        _
      $region106: #{_lambda_.2} parent=103 // pred_check_branch
        %761 = sbr.rel (%p758) target = $region108
      $region107: #{_lambda_.2} parent=103 // pred_region
        %v762 = vld [vmem:[%s0] sm:$0xff]
        %v763 = vld [vmem:[%s0 + $0x8] sm:$0xff]
        %v764 = vld [vmem:[%s19] sm:$0xff]
        %v765 = vld [vmem:[%s20] sm:$0x1]
        %v767 = vlaneseq
        %v768 = vshrl.u32 %v767, 7
        %v769 = vsub.s32 0, %v768
        %v770 = vrot.slane %v765, %v769
        %vm772 = vcmask 64512
        %v774 = vsel %vm772, %v762, 0
        %v777 = vsel %vm772, %v763, 0
        %779 = vmatprep.subr.mxu0 0.0
        %780 = vmatpush1.msra.mxu0 0.0
        %781 = vmatprep.subr.mxu0 0.0
        %782 = vmatpush1.msra.mxu0 0.0
        %783 = vmatprep.subr.mxu0 0.0
        %784 = vmatpush1.msra.mxu0 0.0
        %785 = vmatprep.subr.mxu0 0.0
        %786 = vmatpush1.msra.mxu0 0.0
        %787 = vmatprep.subr.mxu0 0.0
        %788 = vmatpush1.msra.mxu0 0.0
        %789 = vmatprep.subr.mxu0 0.0
        %790 = vmatpush1.msra.mxu0 0.0
        %791 = vmatprep.subr.mxu0 0.0
        %792 = vmatpush1.msra.mxu0 0.0
        %793 = vmatprep.subr.mxu0 0.0
        %794 = vmatpush1.msra.mxu0 0.0
        %795 = vmatprep.subr.mxu0 0.0
        %796 = vmatpush1.msra.mxu0 0.0
        %797 = vmatprep.subr.mxu0 0.0
        %798 = vmatpush1.msra.mxu0 0.0
        %799 = vmatprep.subr.mxu0 0.0
        %800 = vmatpush1.msra.mxu0 0.0
        %801 = vmatprep.subr.mxu0 0.0
        %802 = vmatpush1.msra.mxu0 0.0
        %803 = vmatprep.subr.mxu0 0.0
        %804 = vmatpush1.msra.mxu0 0.0
        %805 = vmatprep.subr.mxu0 0.0
        %806 = vmatpush1.msra.mxu0 0.0
        %807 = vmatprep.subr.mxu0 0.0
        %808 = vmatpush1.msra.mxu0 0.0
        %809 = vmatprep.subr.mxu0 0.0
        %810 = vmatpush1.msra.mxu0 %v764
        %811 = vmatprep.subr.mxu0 0.0
        %812 = vmatpush2.msra.mxu0 0.0
        %813 = vmatprep.subr.mxu0 0.0
        %814 = vmatpush2.msra.mxu0 0.0
        %815 = vmatprep.subr.mxu0 0.0
        %816 = vmatpush2.msra.mxu0 0.0
        %817 = vmatprep.subr.mxu0 0.0
        %818 = vmatpush2.msra.mxu0 0.0
        %819 = vmatprep.subr.mxu0 0.0
        %820 = vmatpush2.msra.mxu0 0.0
        %821 = vmatprep.subr.mxu0 0.0
        %822 = vmatpush2.msra.mxu0 0.0
        %823 = vmatprep.subr.mxu0 0.0
        %824 = vmatpush2.msra.mxu0 0.0
        %825 = vmatprep.subr.mxu0 0.0
        %826 = vmatpush2.msra.mxu0 0.0
        %827 = vmatprep.subr.mxu0 0.0
        %828 = vmatpush2.msra.mxu0 0.0
        %829 = vmatprep.subr.mxu0 0.0
        %830 = vmatpush2.msra.mxu0 0.0
        %831 = vmatprep.subr.mxu0 0.0
        %832 = vmatpush2.msra.mxu0 0.0
        %833 = vmatprep.subr.mxu0 0.0
        %834 = vmatpush2.msra.mxu0 0.0
        %835 = vmatprep.subr.mxu0 0.0
        %836 = vmatpush2.msra.mxu0 0.0
        %837 = vmatprep.subr.mxu0 0.0
        %838 = vmatpush2.msra.mxu0 0.0
        %839 = vmatprep.subr.mxu0 0.0
        %840 = vmatpush2.msra.mxu0 0.0
        %841 = vmatprep.subr.mxu0 0.0
        %842 = vmatpush2.msra.mxu0 0.0
        %843 = vmatprep.mubr.f32.mxu0 0.0
        %844 = vmatmul.mubr.f32.gmra.mxu0 %v774
        %v845 = vpop.f32.mrf.mxu0
        %v846 = vadd.f32 %v770, %v845
        %v847 = vpop.f32.mrf.mxu0
        %848 = vmatprep.mubr.f32.mxu0 0.0
        %849 = vmatmul.mubr.f32.gmra.mxu0 %v777
        %v850 = vpop.f32.mrf.mxu0
        %v851 = vadd.f32 %v770, %v850
        %v852 = vpop.f32.mrf.mxu0
        %853 = vdwg.mxu0
        %v854 = vmax.f32 %v846, 0.0
        %v855 = vmax.f32 %v851, 0.0
        %vm856 = vcmask 261120
        %857 = vst.msk [vmem:[#allocation5] sm:$0xff] %vm856, %v854
        %858 = vst.msk [vmem:[#allocation5 + $0x8] sm:$0xff] %vm856, %v855
        %vm859 = vcmask 125952
        %860 = vst.msk [vmem:[#allocation2] sm:$0xf] %vm859, -1e+30
      $region108: #{_lambda_.2} parent=103 // pred_fallthru
        _
      %v861 = vld [vmem:[%s733] sm:$0xf]
      %v862 = vld [vmem:[%s733 + $0x4] sm:$0xf]
      %v863 = vld [vmem:[%s733 + $0x8] sm:$0xf]
      %v864 = vld [vmem:[%s733 + $0xc] sm:$0xf]
      %v865 = vunpack.c.l.bf16 %v861
      %v866 = vunpack.c.l.bf16 %v862
      %v867 = vunpack.c.l.bf16 %v863
      %v868 = vunpack.c.l.bf16 %v864
      %v869 = vld [vmem:[%s739] sm:$0xf]
      %v870 = vld [vmem:[%s739 + $0x4] sm:$0xf]
      %v871 = vld [vmem:[%s739 + $0x8] sm:$0xf]
      %v872 = vld [vmem:[%s739 + $0xc] sm:$0xf]
      %v873 = vunpack.c.l.bf16 %v869
      %v874 = vunpack.c.l.bf16 %v870
      %v875 = vunpack.c.l.bf16 %v871
      %v876 = vunpack.c.l.bf16 %v872
      %v877 = vld [vmem:[%s748] sm:$0xf]
      %v878 = vld [vmem:[%s748 + $0x4] sm:$0xf]
      %v879 = vld [vmem:[%s748 + $0x8] sm:$0xf]
      %v880 = vld [vmem:[%s748 + $0xc] sm:$0xf]
      %v881 = vunpack.c.l.bf16 %v877
      %v882 = vunpack.c.l.bf16 %v878
      %v883 = vunpack.c.l.bf16 %v879
      %v884 = vunpack.c.l.bf16 %v880
      %v885 = vld [vmem:[#allocation5] sm:$0xff]
      %v886 = vld [vmem:[#allocation5 + $0x8] sm:$0xff]
      %vm887 = vcmask 130048
      %v889 = vsel %vm887, %v865, 0
      %v892 = vsel %vm887, %v866, 0
      %v895 = vsel %vm887, %v867, 0
      %v898 = vsel %vm887, %v868, 0
      %900 = vmatprep.subr.mxu0 0.0
      %901 = vmatpush1.msra.mxu0 0.0
      %902 = vmatprep.subr.mxu0 0.0
      %903 = vmatpush1.msra.mxu0 0.0
      %904 = vmatprep.subr.mxu0 0.0
      %905 = vmatpush1.msra.mxu0 0.0
      %906 = vmatprep.subr.mxu0 0.0
      %907 = vmatpush1.msra.mxu0 0.0
      %908 = vmatprep.subr.mxu0 0.0
      %909 = vmatpush1.msra.mxu0 0.0
      %910 = vmatprep.subr.mxu0 0.0
      %911 = vmatpush1.msra.mxu0 0.0
      %912 = vmatprep.subr.mxu0 0.0
      %913 = vmatpush1.msra.mxu0 0.0
      %914 = vmatprep.subr.mxu0 0.0
      %915 = vmatpush1.msra.mxu0 0.0
      %916 = vmatprep.subr.mxu0 0.0
      %917 = vmatpush1.msra.mxu0 0.0
      %918 = vmatprep.subr.mxu0 0.0
      %919 = vmatpush1.msra.mxu0 0.0
      %920 = vmatprep.subr.mxu0 0.0
      %921 = vmatpush1.msra.mxu0 0.0
      %922 = vmatprep.subr.mxu0 0.0
      %923 = vmatpush1.msra.mxu0 0.0
      %924 = vmatprep.subr.mxu0 0.0
      %925 = vmatpush1.msra.mxu0 0.0
      %926 = vmatprep.subr.mxu0 0.0
      %927 = vmatpush1.msra.mxu0 0.0
      %928 = vmatprep.subr.mxu0 0.0
      %929 = vmatpush1.msra.mxu0 %v886
      %930 = vmatprep.subr.mxu0 0.0
      %931 = vmatpush1.msra.mxu0 %v885
      %932 = vmatprep.subr.mxu0 0.0
      %933 = vmatpush2.msra.mxu0 0.0
      %934 = vmatprep.subr.mxu0 0.0
      %935 = vmatpush2.msra.mxu0 0.0
      %936 = vmatprep.subr.mxu0 0.0
      %937 = vmatpush2.msra.mxu0 0.0
      %938 = vmatprep.subr.mxu0 0.0
      %939 = vmatpush2.msra.mxu0 0.0
      %940 = vmatprep.subr.mxu0 0.0
      %941 = vmatpush2.msra.mxu0 0.0
      %942 = vmatprep.subr.mxu0 0.0
      %943 = vmatpush2.msra.mxu0 0.0
      %944 = vmatprep.subr.mxu0 0.0
      %945 = vmatpush2.msra.mxu0 0.0
      %946 = vmatprep.subr.mxu0 0.0
      %947 = vmatpush2.msra.mxu0 0.0
      %948 = vmatprep.subr.mxu0 0.0
      %949 = vmatpush2.msra.mxu0 0.0
      %950 = vmatprep.subr.mxu0 0.0
      %951 = vmatpush2.msra.mxu0 0.0
      %952 = vmatprep.subr.mxu0 0.0
      %953 = vmatpush2.msra.mxu0 0.0
      %954 = vmatprep.subr.mxu0 0.0
      %955 = vmatpush2.msra.mxu0 0.0
      %956 = vmatprep.subr.mxu0 0.0
      %957 = vmatpush2.msra.mxu0 0.0
      %958 = vmatprep.subr.mxu0 0.0
      %959 = vmatpush2.msra.mxu0 0.0
      %960 = vmatprep.subr.mxu0 0.0
      %961 = vmatpush2.msra.mxu0 0.0
      %962 = vmatprep.subr.mxu0 0.0
      %963 = vmatpush2.msra.mxu0 0.0
      %964 = vmatprep.mubr.f32.mxu0 0.0
      %965 = vmatmul.mubr.f32.gmra.mxu0 %v889
      %v966 = vpop.f32.mrf.mxu0
      %v967 = vadd.f32 0.0, %v966
      %v968 = vpop.f32.mrf.mxu0
      %969 = vmatprep.mubr.f32.mxu0 0.0
      %970 = vmatmul.mubr.f32.gmra.mxu0 %v892
      %v971 = vpop.f32.mrf.mxu0
      %v972 = vadd.f32 0.0, %v971
      %v973 = vpop.f32.mrf.mxu0
      %974 = vmatprep.mubr.f32.mxu0 0.0
      %975 = vmatmul.mubr.f32.gmra.mxu0 %v895
      %v976 = vpop.f32.mrf.mxu0
      %v977 = vadd.f32 0.0, %v976
      %v978 = vpop.f32.mrf.mxu0
      %979 = vmatprep.mubr.f32.mxu0 0.0
      %980 = vmatmul.mubr.f32.gmra.mxu0 %v898
      %v981 = vpop.f32.mrf.mxu0
      %v982 = vadd.f32 0.0, %v981
      %v983 = vpop.f32.mrf.mxu0
      %984 = vdwg.mxu0
      %v985 = vld [vmem:[%s5] sm:$0xff]
      %v986 = vld [vmem:[%s5 + $0x8] sm:$0xff]
      %v987 = vld [vmem:[%s5 + $0x10] sm:$0xff]
      %v988 = vld [vmem:[%s5 + $0x18] sm:$0xff]
      %v989 = vld [vmem:[%s6] sm:$0x1]
      %v991 = vlaneseq
      %v992 = vshrl.u32 %v991, 7
      %v993 = vsub.s32 0, %v992
      %v994 = vrot.slane %v989, %v993
      %vm996 = vcmask 261120
      %v998 = vsel %vm996, %v967, 0
      %v1001 = vsel %vm996, %v972, 0
      %v1004 = vsel %vm996, %v977, 0
      %v1007 = vsel %vm996, %v982, 0
      %1009 = vmatprep.subr.mxu0 0.0
      %1010 = vmatpush1.msra.mxu0 0.0
      %1011 = vmatprep.subr.mxu0 0.0
      %1012 = vmatpush1.msra.mxu0 0.0
      %1013 = vmatprep.subr.mxu0 0.0
      %1014 = vmatpush1.msra.mxu0 0.0
      %1015 = vmatprep.subr.mxu0 0.0
      %1016 = vmatpush1.msra.mxu0 0.0
      %1017 = vmatprep.subr.mxu0 0.0
      %1018 = vmatpush1.msra.mxu0 0.0
      %1019 = vmatprep.subr.mxu0 0.0
      %1020 = vmatpush1.msra.mxu0 0.0
      %1021 = vmatprep.subr.mxu0 0.0
      %1022 = vmatpush1.msra.mxu0 0.0
      %1023 = vmatprep.subr.mxu0 0.0
      %1024 = vmatpush1.msra.mxu0 0.0
      %1025 = vmatprep.subr.mxu0 0.0
      %1026 = vmatpush1.msra.mxu0 0.0
      %1027 = vmatprep.subr.mxu0 0.0
      %1028 = vmatpush1.msra.mxu0 0.0
      %1029 = vmatprep.subr.mxu0 0.0
      %1030 = vmatpush1.msra.mxu0 0.0
      %1031 = vmatprep.subr.mxu0 0.0
      %1032 = vmatpush1.msra.mxu0 0.0
      %1033 = vmatprep.subr.mxu0 0.0
      %1034 = vmatpush1.msra.mxu0 %v988
      %1035 = vmatprep.subr.mxu0 0.0
      %1036 = vmatpush1.msra.mxu0 %v987
      %1037 = vmatprep.subr.mxu0 0.0
      %1038 = vmatpush1.msra.mxu0 %v986
      %1039 = vmatprep.subr.mxu0 0.0
      %1040 = vmatpush1.msra.mxu0 %v985
      %1041 = vmatprep.subr.mxu0 0.0
      %1042 = vmatpush2.msra.mxu0 0.0
      %1043 = vmatprep.subr.mxu0 0.0
      %1044 = vmatpush2.msra.mxu0 0.0
      %1045 = vmatprep.subr.mxu0 0.0
      %1046 = vmatpush2.msra.mxu0 0.0
      %1047 = vmatprep.subr.mxu0 0.0
      %1048 = vmatpush2.msra.mxu0 0.0
      %1049 = vmatprep.subr.mxu0 0.0
      %1050 = vmatpush2.msra.mxu0 0.0
      %1051 = vmatprep.subr.mxu0 0.0
      %1052 = vmatpush2.msra.mxu0 0.0
      %1053 = vmatprep.subr.mxu0 0.0
      %1054 = vmatpush2.msra.mxu0 0.0
      %1055 = vmatprep.subr.mxu0 0.0
      %1056 = vmatpush2.msra.mxu0 0.0
      %1057 = vmatprep.subr.mxu0 0.0
      %1058 = vmatpush2.msra.mxu0 0.0
      %1059 = vmatprep.subr.mxu0 0.0
      %1060 = vmatpush2.msra.mxu0 0.0
      %1061 = vmatprep.subr.mxu0 0.0
      %1062 = vmatpush2.msra.mxu0 0.0
      %1063 = vmatprep.subr.mxu0 0.0
      %1064 = vmatpush2.msra.mxu0 0.0
      %1065 = vmatprep.subr.mxu0 0.0
      %1066 = vmatpush2.msra.mxu0 0.0
      %1067 = vmatprep.subr.mxu0 0.0
      %1068 = vmatpush2.msra.mxu0 0.0
      %1069 = vmatprep.subr.mxu0 0.0
      %1070 = vmatpush2.msra.mxu0 0.0
      %1071 = vmatprep.subr.mxu0 0.0
      %1072 = vmatpush2.msra.mxu0 0.0
      %1073 = vmatprep.mubr.f32.mxu0 0.0
      %1074 = vmatmul.mubr.f32.gmra.mxu0 %v998
      %v1075 = vpop.f32.mrf.mxu0
      %v1076 = vadd.f32 %v994, %v1075
      %v1077 = vpop.f32.mrf.mxu0
      %1078 = vmatprep.mubr.f32.mxu0 0.0
      %1079 = vmatmul.mubr.f32.gmra.mxu0 %v1001
      %v1080 = vpop.f32.mrf.mxu0
      %v1081 = vadd.f32 %v994, %v1080
      %v1082 = vpop.f32.mrf.mxu0
      %1083 = vmatprep.mubr.f32.mxu0 0.0
      %1084 = vmatmul.mubr.f32.gmra.mxu0 %v1004
      %v1085 = vpop.f32.mrf.mxu0
      %v1086 = vadd.f32 %v994, %v1085
      %v1087 = vpop.f32.mrf.mxu0
      %1088 = vmatprep.mubr.f32.mxu0 0.0
      %1089 = vmatmul.mubr.f32.gmra.mxu0 %v1007
      %v1090 = vpop.f32.mrf.mxu0
      %v1091 = vadd.f32 %v994, %v1090
      %v1092 = vpop.f32.mrf.mxu0
      %1093 = vdwg.mxu0
      %v1095 = vsel %vm887, %v873, 0
      %v1098 = vsel %vm887, %v874, 0
      %v1101 = vsel %vm887, %v875, 0
      %v1104 = vsel %vm887, %v876, 0
      %1106 = vmatprep.subr.mxu0 0.0
      %1107 = vmatpush1.msra.mxu0 0.0
      %1108 = vmatprep.subr.mxu0 0.0
      %1109 = vmatpush1.msra.mxu0 0.0
      %1110 = vmatprep.subr.mxu0 0.0
      %1111 = vmatpush1.msra.mxu0 0.0
      %1112 = vmatprep.subr.mxu0 0.0
      %1113 = vmatpush1.msra.mxu0 0.0
      %1114 = vmatprep.subr.mxu0 0.0
      %1115 = vmatpush1.msra.mxu0 0.0
      %1116 = vmatprep.subr.mxu0 0.0
      %1117 = vmatpush1.msra.mxu0 0.0
      %1118 = vmatprep.subr.mxu0 0.0
      %1119 = vmatpush1.msra.mxu0 0.0
      %1120 = vmatprep.subr.mxu0 0.0
      %1121 = vmatpush1.msra.mxu0 0.0
      %1122 = vmatprep.subr.mxu0 0.0
      %1123 = vmatpush1.msra.mxu0 0.0
      %1124 = vmatprep.subr.mxu0 0.0
      %1125 = vmatpush1.msra.mxu0 0.0
      %1126 = vmatprep.subr.mxu0 0.0
      %1127 = vmatpush1.msra.mxu0 0.0
      %1128 = vmatprep.subr.mxu0 0.0
      %1129 = vmatpush1.msra.mxu0 0.0
      %1130 = vmatprep.subr.mxu0 0.0
      %1131 = vmatpush1.msra.mxu0 0.0
      %1132 = vmatprep.subr.mxu0 0.0
      %1133 = vmatpush1.msra.mxu0 0.0
      %1134 = vmatprep.subr.mxu0 0.0
      %1135 = vmatpush1.msra.mxu0 %v886
      %1136 = vmatprep.subr.mxu0 0.0
      %1137 = vmatpush1.msra.mxu0 %v885
      %1138 = vmatprep.subr.mxu0 0.0
      %1139 = vmatpush2.msra.mxu0 0.0
      %1140 = vmatprep.subr.mxu0 0.0
      %1141 = vmatpush2.msra.mxu0 0.0
      %1142 = vmatprep.subr.mxu0 0.0
      %1143 = vmatpush2.msra.mxu0 0.0
      %1144 = vmatprep.subr.mxu0 0.0
      %1145 = vmatpush2.msra.mxu0 0.0
      %1146 = vmatprep.subr.mxu0 0.0
      %1147 = vmatpush2.msra.mxu0 0.0
      %1148 = vmatprep.subr.mxu0 0.0
      %1149 = vmatpush2.msra.mxu0 0.0
      %1150 = vmatprep.subr.mxu0 0.0
      %1151 = vmatpush2.msra.mxu0 0.0
      %1152 = vmatprep.subr.mxu0 0.0
      %1153 = vmatpush2.msra.mxu0 0.0
      %1154 = vmatprep.subr.mxu0 0.0
      %1155 = vmatpush2.msra.mxu0 0.0
      %1156 = vmatprep.subr.mxu0 0.0
      %1157 = vmatpush2.msra.mxu0 0.0
      %1158 = vmatprep.subr.mxu0 0.0
      %1159 = vmatpush2.msra.mxu0 0.0
      %1160 = vmatprep.subr.mxu0 0.0
      %1161 = vmatpush2.msra.mxu0 0.0
      %1162 = vmatprep.subr.mxu0 0.0
      %1163 = vmatpush2.msra.mxu0 0.0
      %1164 = vmatprep.subr.mxu0 0.0
      %1165 = vmatpush2.msra.mxu0 0.0
      %1166 = vmatprep.subr.mxu0 0.0
      %1167 = vmatpush2.msra.mxu0 0.0
      %1168 = vmatprep.subr.mxu0 0.0
      %1169 = vmatpush2.msra.mxu0 0.0
      %1170 = vmatprep.mubr.f32.mxu0 0.0
      %1171 = vmatmul.mubr.f32.gmra.mxu0 %v1095
      %v1172 = vpop.f32.mrf.mxu0
      %v1173 = vadd.f32 0.0, %v1172
      %v1174 = vpop.f32.mrf.mxu0
      %1175 = vmatprep.mubr.f32.mxu0 0.0
      %1176 = vmatmul.mubr.f32.gmra.mxu0 %v1098
      %v1177 = vpop.f32.mrf.mxu0
      %v1178 = vadd.f32 0.0, %v1177
      %v1179 = vpop.f32.mrf.mxu0
      %1180 = vmatprep.mubr.f32.mxu0 0.0
      %1181 = vmatmul.mubr.f32.gmra.mxu0 %v1101
      %v1182 = vpop.f32.mrf.mxu0
      %v1183 = vadd.f32 0.0, %v1182
      %v1184 = vpop.f32.mrf.mxu0
      %1185 = vmatprep.mubr.f32.mxu0 0.0
      %1186 = vmatmul.mubr.f32.gmra.mxu0 %v1104
      %v1187 = vpop.f32.mrf.mxu0
      %v1188 = vadd.f32 0.0, %v1187
      %v1189 = vpop.f32.mrf.mxu0
      %1190 = vdwg.mxu0
      %v1191 = vld [vmem:[%s7] sm:$0xff]
      %v1192 = vld [vmem:[%s7 + $0x8] sm:$0xff]
      %v1193 = vld [vmem:[%s7 + $0x10] sm:$0xff]
      %v1194 = vld [vmem:[%s7 + $0x18] sm:$0xff]
      %v1195 = vld [vmem:[%s8] sm:$0x1]
      %v1197 = vlaneseq
      %v1198 = vshrl.u32 %v1197, 7
      %v1199 = vsub.s32 0, %v1198
      %v1200 = vrot.slane %v1195, %v1199
      %v1203 = vsel %vm996, %v1173, 0
      %v1206 = vsel %vm996, %v1178, 0
      %v1209 = vsel %vm996, %v1183, 0
      %v1212 = vsel %vm996, %v1188, 0
      %1214 = vmatprep.subr.mxu0 0.0
      %1215 = vmatpush1.msra.mxu0 0.0
      %1216 = vmatprep.subr.mxu0 0.0
      %1217 = vmatpush1.msra.mxu0 0.0
      %1218 = vmatprep.subr.mxu0 0.0
      %1219 = vmatpush1.msra.mxu0 0.0
      %1220 = vmatprep.subr.mxu0 0.0
      %1221 = vmatpush1.msra.mxu0 0.0
      %1222 = vmatprep.subr.mxu0 0.0
      %1223 = vmatpush1.msra.mxu0 0.0
      %1224 = vmatprep.subr.mxu0 0.0
      %1225 = vmatpush1.msra.mxu0 0.0
      %1226 = vmatprep.subr.mxu0 0.0
      %1227 = vmatpush1.msra.mxu0 0.0
      %1228 = vmatprep.subr.mxu0 0.0
      %1229 = vmatpush1.msra.mxu0 0.0
      %1230 = vmatprep.subr.mxu0 0.0
      %1231 = vmatpush1.msra.mxu0 0.0
      %1232 = vmatprep.subr.mxu0 0.0
      %1233 = vmatpush1.msra.mxu0 0.0
      %1234 = vmatprep.subr.mxu0 0.0
      %1235 = vmatpush1.msra.mxu0 0.0
      %1236 = vmatprep.subr.mxu0 0.0
      %1237 = vmatpush1.msra.mxu0 0.0
      %1238 = vmatprep.subr.mxu0 0.0
      %1239 = vmatpush1.msra.mxu0 %v1194
      %1240 = vmatprep.subr.mxu0 0.0
      %1241 = vmatpush1.msra.mxu0 %v1193
      %1242 = vmatprep.subr.mxu0 0.0
      %1243 = vmatpush1.msra.mxu0 %v1192
      %1244 = vmatprep.subr.mxu0 0.0
      %1245 = vmatpush1.msra.mxu0 %v1191
      %1246 = vmatprep.subr.mxu0 0.0
      %1247 = vmatpush2.msra.mxu0 0.0
      %1248 = vmatprep.subr.mxu0 0.0
      %1249 = vmatpush2.msra.mxu0 0.0
      %1250 = vmatprep.subr.mxu0 0.0
      %1251 = vmatpush2.msra.mxu0 0.0
      %1252 = vmatprep.subr.mxu0 0.0
      %1253 = vmatpush2.msra.mxu0 0.0
      %1254 = vmatprep.subr.mxu0 0.0
      %1255 = vmatpush2.msra.mxu0 0.0
      %1256 = vmatprep.subr.mxu0 0.0
      %1257 = vmatpush2.msra.mxu0 0.0
      %1258 = vmatprep.subr.mxu0 0.0
      %1259 = vmatpush2.msra.mxu0 0.0
      %1260 = vmatprep.subr.mxu0 0.0
      %1261 = vmatpush2.msra.mxu0 0.0
      %1262 = vmatprep.subr.mxu0 0.0
      %1263 = vmatpush2.msra.mxu0 0.0
      %1264 = vmatprep.subr.mxu0 0.0
      %1265 = vmatpush2.msra.mxu0 0.0
      %1266 = vmatprep.subr.mxu0 0.0
      %1267 = vmatpush2.msra.mxu0 0.0
      %1268 = vmatprep.subr.mxu0 0.0
      %1269 = vmatpush2.msra.mxu0 0.0
      %1270 = vmatprep.subr.mxu0 0.0
      %1271 = vmatpush2.msra.mxu0 0.0
      %1272 = vmatprep.subr.mxu0 0.0
      %1273 = vmatpush2.msra.mxu0 0.0
      %1274 = vmatprep.subr.mxu0 0.0
      %1275 = vmatpush2.msra.mxu0 0.0
      %1276 = vmatprep.subr.mxu0 0.0
      %1277 = vmatpush2.msra.mxu0 0.0
      %1278 = vmatprep.mubr.f32.mxu0 0.0
      %1279 = vmatmul.mubr.f32.gmra.mxu0 %v1203
      %v1280 = vpop.f32.mrf.mxu0
      %v1281 = vadd.f32 %v1200, %v1280
      %v1282 = vpop.f32.mrf.mxu0
      %1283 = vmatprep.mubr.f32.mxu0 0.0
      %1284 = vmatmul.mubr.f32.gmra.mxu0 %v1206
      %v1285 = vpop.f32.mrf.mxu0
      %v1286 = vadd.f32 %v1200, %v1285
      %v1287 = vpop.f32.mrf.mxu0
      %1288 = vmatprep.mubr.f32.mxu0 0.0
      %1289 = vmatmul.mubr.f32.gmra.mxu0 %v1209
      %v1290 = vpop.f32.mrf.mxu0
      %v1291 = vadd.f32 %v1200, %v1290
      %v1292 = vpop.f32.mrf.mxu0
      %1293 = vmatprep.mubr.f32.mxu0 0.0
      %1294 = vmatmul.mubr.f32.gmra.mxu0 %v1212
      %v1295 = vpop.f32.mrf.mxu0
      %v1296 = vadd.f32 %v1200, %v1295
      %v1297 = vpop.f32.mrf.mxu0
      %1298 = vdwg.mxu0
      %v1299 = vadd.f32 %v1076, %v1281
      %v1300 = vadd.f32 %v1081, %v1286
      %v1301 = vadd.f32 %v1086, %v1291
      %v1302 = vadd.f32 %v1091, %v1296
      %v1303 = vld [vmem:[%s727] sm:$0xff]
      %v1304 = vld [vmem:[%s727 + $0x8] sm:$0xff]
      %v1305 = vld [vmem:[%s727 + $0x10] sm:$0xff]
      %v1306 = vld [vmem:[%s727 + $0x18] sm:$0xff]
      %v1307 = vld [vmem:[%s9] sm:$0xff]
      %vm1308 = vcmask 64512
      %v1310 = vsel %vm1308, %v1303, 0
      %v1313 = vsel %vm1308, %v1304, 0
      %v1316 = vsel %vm1308, %v1305, 0
      %v1319 = vsel %vm1308, %v1306, 0
      %1321 = vmatprep.subr.mxu0 0.0
      %1322 = vmatpush1.msra.mxu0 0.0
      %1323 = vmatprep.subr.mxu0 0.0
      %1324 = vmatpush1.msra.mxu0 0.0
      %1325 = vmatprep.subr.mxu0 0.0
      %1326 = vmatpush1.msra.mxu0 0.0
      %1327 = vmatprep.subr.mxu0 0.0
      %1328 = vmatpush1.msra.mxu0 0.0
      %1329 = vmatprep.subr.mxu0 0.0
      %1330 = vmatpush1.msra.mxu0 0.0
      %1331 = vmatprep.subr.mxu0 0.0
      %1332 = vmatpush1.msra.mxu0 0.0
      %1333 = vmatprep.subr.mxu0 0.0
      %1334 = vmatpush1.msra.mxu0 0.0
      %1335 = vmatprep.subr.mxu0 0.0
      %1336 = vmatpush1.msra.mxu0 0.0
      %1337 = vmatprep.subr.mxu0 0.0
      %1338 = vmatpush1.msra.mxu0 0.0
      %1339 = vmatprep.subr.mxu0 0.0
      %1340 = vmatpush1.msra.mxu0 0.0
      %1341 = vmatprep.subr.mxu0 0.0
      %1342 = vmatpush1.msra.mxu0 0.0
      %1343 = vmatprep.subr.mxu0 0.0
      %1344 = vmatpush1.msra.mxu0 0.0
      %1345 = vmatprep.subr.mxu0 0.0
      %1346 = vmatpush1.msra.mxu0 0.0
      %1347 = vmatprep.subr.mxu0 0.0
      %1348 = vmatpush1.msra.mxu0 0.0
      %1349 = vmatprep.subr.mxu0 0.0
      %1350 = vmatpush1.msra.mxu0 0.0
      %1351 = vmatprep.subr.mxu0 0.0
      %1352 = vmatpush1.msra.mxu0 %v1307
      %1353 = vmatprep.subr.mxu0 0.0
      %1354 = vmatpush2.msra.mxu0 0.0
      %1355 = vmatprep.subr.mxu0 0.0
      %1356 = vmatpush2.msra.mxu0 0.0
      %1357 = vmatprep.subr.mxu0 0.0
      %1358 = vmatpush2.msra.mxu0 0.0
      %1359 = vmatprep.subr.mxu0 0.0
      %1360 = vmatpush2.msra.mxu0 0.0
      %1361 = vmatprep.subr.mxu0 0.0
      %1362 = vmatpush2.msra.mxu0 0.0
      %1363 = vmatprep.subr.mxu0 0.0
      %1364 = vmatpush2.msra.mxu0 0.0
      %1365 = vmatprep.subr.mxu0 0.0
      %1366 = vmatpush2.msra.mxu0 0.0
      %1367 = vmatprep.subr.mxu0 0.0
      %1368 = vmatpush2.msra.mxu0 0.0
      %1369 = vmatprep.subr.mxu0 0.0
      %1370 = vmatpush2.msra.mxu0 0.0
      %1371 = vmatprep.subr.mxu0 0.0
      %1372 = vmatpush2.msra.mxu0 0.0
      %1373 = vmatprep.subr.mxu0 0.0
      %1374 = vmatpush2.msra.mxu0 0.0
      %1375 = vmatprep.subr.mxu0 0.0
      %1376 = vmatpush2.msra.mxu0 0.0
      %1377 = vmatprep.subr.mxu0 0.0
      %1378 = vmatpush2.msra.mxu0 0.0
      %1379 = vmatprep.subr.mxu0 0.0
      %1380 = vmatpush2.msra.mxu0 0.0
      %1381 = vmatprep.subr.mxu0 0.0
      %1382 = vmatpush2.msra.mxu0 0.0
      %1383 = vmatprep.subr.mxu0 0.0
      %1384 = vmatpush2.msra.mxu0 0.0
      %1385 = vmatprep.mubr.f32.mxu0 0.0
      %1386 = vmatmul.mubr.f32.gmra.mxu0 %v1310
      %v1387 = vpop.f32.mrf.mxu0
      %v1388 = vadd.f32 0.0, %v1387
      %v1389 = vpop.f32.mrf.mxu0
      %1390 = vmatprep.mubr.f32.mxu0 0.0
      %1391 = vmatmul.mubr.f32.gmra.mxu0 %v1313
      %v1392 = vpop.f32.mrf.mxu0
      %v1393 = vadd.f32 0.0, %v1392
      %v1394 = vpop.f32.mrf.mxu0
      %1395 = vmatprep.mubr.f32.mxu0 0.0
      %1396 = vmatmul.mubr.f32.gmra.mxu0 %v1316
      %v1397 = vpop.f32.mrf.mxu0
      %v1398 = vadd.f32 0.0, %v1397
      %v1399 = vpop.f32.mrf.mxu0
      %1400 = vmatprep.mubr.f32.mxu0 0.0
      %1401 = vmatmul.mubr.f32.gmra.mxu0 %v1319
      %v1402 = vpop.f32.mrf.mxu0
      %v1403 = vadd.f32 0.0, %v1402
      %v1404 = vpop.f32.mrf.mxu0
      %1405 = vdwg.mxu0
      %v1406 = vadd.f32 %v1299, %v1388
      %v1407 = vadd.f32 %v1300, %v1393
      %v1408 = vadd.f32 %v1301, %v1398
      %v1409 = vadd.f32 %v1302, %v1403
      %vm1410 = vcmp.ge.f32.partialorder %v1406, 0.0
      %vm1411 = vcmp.ge.f32.partialorder %v1407, 0.0
      %vm1412 = vcmp.ge.f32.partialorder %v1408, 0.0
      %vm1413 = vcmp.ge.f32.partialorder %v1409, 0.0
      %v1414 = vmul.f32 %v1406, 0.2
      %v1415 = vmul.f32 %v1407, 0.2
      %v1416 = vmul.f32 %v1408, 0.2
      %v1417 = vmul.f32 %v1409, 0.2
      %v1418 = vsel %vm1410, %v1406, %v1414
      %v1419 = vsel %vm1411, %v1407, %v1415
      %v1420 = vsel %vm1412, %v1408, %v1416
      %v1421 = vsel %vm1413, %v1409, %v1417
      %v1422 = vld [vmem:[%s10] sm:$0xff]
      %v1423 = vld [vmem:[%s10 + $0x8] sm:$0xff]
      %v1424 = vld [vmem:[%s10 + $0x10] sm:$0xff]
      %v1425 = vld [vmem:[%s10 + $0x18] sm:$0xff]
      %v1426 = vld [vmem:[%s10 + $0x20] sm:$0xff]
      %v1427 = vld [vmem:[%s10 + $0x28] sm:$0xff]
      %v1428 = vld [vmem:[%s10 + $0x30] sm:$0xff]
      %v1429 = vld [vmem:[%s10 + $0x38] sm:$0xff]
      %v1430 = vld [vmem:[%s10 + $0x40] sm:$0xff]
      %v1431 = vld [vmem:[%s10 + $0x48] sm:$0xff]
      %v1432 = vld [vmem:[%s10 + $0x50] sm:$0xff]
      %v1433 = vld [vmem:[%s10 + $0x58] sm:$0xff]
      %v1434 = vld [vmem:[%s10 + $0x60] sm:$0xff]
      %v1435 = vld [vmem:[%s10 + $0x68] sm:$0xff]
      %v1436 = vld [vmem:[%s10 + $0x70] sm:$0xff]
      %v1437 = vld [vmem:[%s10 + $0x78] sm:$0xff]
      %1438 = vmatprep.subr.mxu0 0.0
      %1439 = vmatpush1.msra.mxu0 %v1437
      %1440 = vmatprep.subr.mxu0 0.0
      %1441 = vmatpush1.msra.mxu0 %v1436
      %1442 = vmatprep.subr.mxu0 0.0
      %1443 = vmatpush1.msra.mxu0 %v1435
      %1444 = vmatprep.subr.mxu0 0.0
      %1445 = vmatpush1.msra.mxu0 %v1434
      %1446 = vmatprep.subr.mxu0 0.0
      %1447 = vmatpush1.msra.mxu0 %v1433
      %1448 = vmatprep.subr.mxu0 0.0
      %1449 = vmatpush1.msra.mxu0 %v1432
      %1450 = vmatprep.subr.mxu0 0.0
      %1451 = vmatpush1.msra.mxu0 %v1431
      %1452 = vmatprep.subr.mxu0 0.0
      %1453 = vmatpush1.msra.mxu0 %v1430
      %1454 = vmatprep.subr.mxu0 0.0
      %1455 = vmatpush1.msra.mxu0 %v1429
      %1456 = vmatprep.subr.mxu0 0.0
      %1457 = vmatpush1.msra.mxu0 %v1428
      %1458 = vmatprep.subr.mxu0 0.0
      %1459 = vmatpush1.msra.mxu0 %v1427
      %1460 = vmatprep.subr.mxu0 0.0
      %1461 = vmatpush1.msra.mxu0 %v1426
      %1462 = vmatprep.subr.mxu0 0.0
      %1463 = vmatpush1.msra.mxu0 %v1425
      %1464 = vmatprep.subr.mxu0 0.0
      %1465 = vmatpush1.msra.mxu0 %v1424
      %1466 = vmatprep.subr.mxu0 0.0
      %1467 = vmatpush1.msra.mxu0 %v1423
      %1468 = vmatprep.subr.mxu0 0.0
      %1469 = vmatpush1.msra.mxu0 %v1422
      %1470 = vmatprep.subr.mxu0 0.0
      %1471 = vmatpush2.msra.mxu0 0.0
      %1472 = vmatprep.subr.mxu0 0.0
      %1473 = vmatpush2.msra.mxu0 0.0
      %1474 = vmatprep.subr.mxu0 0.0
      %1475 = vmatpush2.msra.mxu0 0.0
      %1476 = vmatprep.subr.mxu0 0.0
      %1477 = vmatpush2.msra.mxu0 0.0
      %1478 = vmatprep.subr.mxu0 0.0
      %1479 = vmatpush2.msra.mxu0 0.0
      %1480 = vmatprep.subr.mxu0 0.0
      %1481 = vmatpush2.msra.mxu0 0.0
      %1482 = vmatprep.subr.mxu0 0.0
      %1483 = vmatpush2.msra.mxu0 0.0
      %1484 = vmatprep.subr.mxu0 0.0
      %1485 = vmatpush2.msra.mxu0 0.0
      %1486 = vmatprep.subr.mxu0 0.0
      %1487 = vmatpush2.msra.mxu0 0.0
      %1488 = vmatprep.subr.mxu0 0.0
      %1489 = vmatpush2.msra.mxu0 0.0
      %1490 = vmatprep.subr.mxu0 0.0
      %1491 = vmatpush2.msra.mxu0 0.0
      %1492 = vmatprep.subr.mxu0 0.0
      %1493 = vmatpush2.msra.mxu0 0.0
      %1494 = vmatprep.subr.mxu0 0.0
      %1495 = vmatpush2.msra.mxu0 0.0
      %1496 = vmatprep.subr.mxu0 0.0
      %1497 = vmatpush2.msra.mxu0 0.0
      %1498 = vmatprep.subr.mxu0 0.0
      %1499 = vmatpush2.msra.mxu0 0.0
      %1500 = vmatprep.subr.mxu0 0.0
      %1501 = vmatpush2.msra.mxu0 0.0
      %1502 = vmatprep.mubr.f32.mxu0 0.0
      %1503 = vmatmul.mubr.f32.gmra.mxu0 %v1418
      %v1504 = vpop.f32.mrf.mxu0
      %v1505 = vadd.f32 0.0, %v1504
      %v1506 = vpop.f32.mrf.mxu0
      %1507 = vmatprep.mubr.f32.mxu0 0.0
      %1508 = vmatmul.mubr.f32.gmra.mxu0 %v1419
      %v1509 = vpop.f32.mrf.mxu0
      %v1510 = vadd.f32 0.0, %v1509
      %v1511 = vpop.f32.mrf.mxu0
      %1512 = vmatprep.mubr.f32.mxu0 0.0
      %1513 = vmatmul.mubr.f32.gmra.mxu0 %v1420
      %v1514 = vpop.f32.mrf.mxu0
      %v1515 = vadd.f32 0.0, %v1514
      %v1516 = vpop.f32.mrf.mxu0
      %1517 = vmatprep.mubr.f32.mxu0 0.0
      %1518 = vmatmul.mubr.f32.gmra.mxu0 %v1421
      %v1519 = vpop.f32.mrf.mxu0
      %v1520 = vadd.f32 0.0, %v1519
      %v1521 = vpop.f32.mrf.mxu0
      %1522 = vdwg.mxu0
      // Predicated region
      $region109: #{_lambda_.2} parent=103 // pred_check
        %p1523 = pneg %p756
      $region110: #{_lambda_.2} parent=103 // pred_check_branch
        %1525 = sbr.rel (%p1523) target = $region112
      $region111: #{_lambda_.2} parent=103 // pred_region
        %vm1526 = vcmp.gt.f32.partialorder %v881, 0.0
        %vm1527 = vcmp.gt.f32.partialorder %v882, 0.0
        %vm1528 = vcmp.gt.f32.partialorder %v883, 0.0
        %vm1529 = vcmp.gt.f32.partialorder %v884, 0.0
        %1531 = vset.pattern.permute.xlu0 0
        %1532 = vperm.xlu0 %1531, %v1505
        %v1533 = vpop.permute.xlu0 %1532
        %1536 = vset.pattern.permute.xlu0 0
        %1537 = vperm.xlu0 %1536, %v1510
        %v1538 = vpop.permute.xlu0 %1537
        %1541 = vset.pattern.permute.xlu0 0
        %1542 = vperm.xlu0 %1541, %v1515
        %v1543 = vpop.permute.xlu0 %1542
        %1546 = vset.pattern.permute.xlu0 0
        %1547 = vperm.xlu0 %1546, %v1520
        %v1548 = vpop.permute.xlu0 %1547
        %v1550 = vsel %vm1526, %v1533, -1e+30
        %v1551 = vsel %vm1527, %v1538, -1e+30
        %v1552 = vsel %vm1528, %v1543, -1e+30
        %v1553 = vsel %vm1529, %v1548, -1e+30
        %v1554 = vsel %vm887, %v1550, -inf
        %v1555 = vsel %vm887, %v1551, -inf
        %v1556 = vsel %vm887, %v1552, -inf
        %v1557 = vsel %vm887, %v1553, -inf
        %v1558 = vmax.f32 %v1554, %v1555
        %v1559 = vmax.f32 %v1556, %v1557
        %v1560 = vmax.f32 %v1558, %v1559
        %v1561 = vrot.slane %v1560, 4
        %v1562 = vmax.f32 %v1560, %v1561
        %v1563 = vrot.slane %v1562, 2
        %v1564 = vmax.f32 %v1562, %v1563
        %v1565 = vrot.slane %v1564, 1
        %v1566 = vmax.f32 %v1564, %v1565
        %v1567 = vld [vmem:[#allocation2] sm:$0x1]
        %v1568 = vmax.f32 %v1567, %v1566
        %vm1569 = vcmask 122880
        %1570 = vst.msk [vmem:[#allocation2] sm:$0x1] %vm1569, %v1568
        %1571 = vset.pattern.permute.xlu0 1
        %1572 = vperm.xlu0 %1571, %v1505
        %v1573 = vpop.permute.xlu0 %1572
        %1575 = vset.pattern.permute.xlu0 1
        %1576 = vperm.xlu0 %1575, %v1510
        %v1577 = vpop.permute.xlu0 %1576
        %1579 = vset.pattern.permute.xlu0 1
        %1580 = vperm.xlu0 %1579, %v1515
        %v1581 = vpop.permute.xlu0 %1580
        %1583 = vset.pattern.permute.xlu0 1
        %1584 = vperm.xlu0 %1583, %v1520
        %v1585 = vpop.permute.xlu0 %1584
        %v1587 = vsel %vm1526, %v1573, -1e+30
        %v1588 = vsel %vm1527, %v1577, -1e+30
        %v1589 = vsel %vm1528, %v1581, -1e+30
        %v1590 = vsel %vm1529, %v1585, -1e+30
        %v1591 = vsel %vm887, %v1587, -inf
        %v1592 = vsel %vm887, %v1588, -inf
        %v1593 = vsel %vm887, %v1589, -inf
        %v1594 = vsel %vm887, %v1590, -inf
        %v1595 = vmax.f32 %v1591, %v1592
        %v1596 = vmax.f32 %v1593, %v1594
        %v1597 = vmax.f32 %v1595, %v1596
        %v1598 = vrot.slane %v1597, 4
        %v1599 = vmax.f32 %v1597, %v1598
        %v1600 = vrot.slane %v1599, 2
        %v1601 = vmax.f32 %v1599, %v1600
        %v1602 = vrot.slane %v1601, 1
        %v1603 = vmax.f32 %v1601, %v1602
        %v1604 = vld [vmem:[#allocation2 + $0x1] sm:$0x1]
        %v1605 = vmax.f32 %v1604, %v1603
        %1606 = vst.msk [vmem:[#allocation2 + $0x1] sm:$0x1] %vm1569, %v1605
        %1607 = vset.pattern.permute.xlu0 2
        %1608 = vperm.xlu0 %1607, %v1505
        %v1609 = vpop.permute.xlu0 %1608
        %1611 = vset.pattern.permute.xlu0 2
        %1612 = vperm.xlu0 %1611, %v1510
        %v1613 = vpop.permute.xlu0 %1612
        %1615 = vset.pattern.permute.xlu0 2
        %1616 = vperm.xlu0 %1615, %v1515
        %v1617 = vpop.permute.xlu0 %1616
        %1619 = vset.pattern.permute.xlu0 2
        %1620 = vperm.xlu0 %1619, %v1520
        %v1621 = vpop.permute.xlu0 %1620
        %v1623 = vsel %vm1526, %v1609, -1e+30
        %v1624 = vsel %vm1527, %v1613, -1e+30
        %v1625 = vsel %vm1528, %v1617, -1e+30
        %v1626 = vsel %vm1529, %v1621, -1e+30
        %v1627 = vsel %vm887, %v1623, -inf
        %v1628 = vsel %vm887, %v1624, -inf
        %v1629 = vsel %vm887, %v1625, -inf
        %v1630 = vsel %vm887, %v1626, -inf
        %v1631 = vmax.f32 %v1627, %v1628
        %v1632 = vmax.f32 %v1629, %v1630
        %v1633 = vmax.f32 %v1631, %v1632
        %v1634 = vrot.slane %v1633, 4
        %v1635 = vmax.f32 %v1633, %v1634
        %v1636 = vrot.slane %v1635, 2
        %v1637 = vmax.f32 %v1635, %v1636
        %v1638 = vrot.slane %v1637, 1
        %v1639 = vmax.f32 %v1637, %v1638
        %v1640 = vld [vmem:[#allocation2 + $0x2] sm:$0x1]
        %v1641 = vmax.f32 %v1640, %v1639
        %1642 = vst.msk [vmem:[#allocation2 + $0x2] sm:$0x1] %vm1569, %v1641
        %1643 = vset.pattern.permute.xlu0 3
        %1644 = vperm.xlu0 %1643, %v1505
        %v1645 = vpop.permute.xlu0 %1644
        %1647 = vset.pattern.permute.xlu0 3
        %1648 = vperm.xlu0 %1647, %v1510
        %v1649 = vpop.permute.xlu0 %1648
        %1651 = vset.pattern.permute.xlu0 3
        %1652 = vperm.xlu0 %1651, %v1515
        %v1653 = vpop.permute.xlu0 %1652
        %1655 = vset.pattern.permute.xlu0 3
        %1656 = vperm.xlu0 %1655, %v1520
        %v1657 = vpop.permute.xlu0 %1656
        %v1659 = vsel %vm1526, %v1645, -1e+30
        %v1660 = vsel %vm1527, %v1649, -1e+30
        %v1661 = vsel %vm1528, %v1653, -1e+30
        %v1662 = vsel %vm1529, %v1657, -1e+30
        %v1663 = vsel %vm887, %v1659, -inf
        %v1664 = vsel %vm887, %v1660, -inf
        %v1665 = vsel %vm887, %v1661, -inf
        %v1666 = vsel %vm887, %v1662, -inf
        %v1667 = vmax.f32 %v1663, %v1664
        %v1668 = vmax.f32 %v1665, %v1666
        %v1669 = vmax.f32 %v1667, %v1668
        %v1670 = vrot.slane %v1669, 4
        %v1671 = vmax.f32 %v1669, %v1670
        %v1672 = vrot.slane %v1671, 2
        %v1673 = vmax.f32 %v1671, %v1672
        %v1674 = vrot.slane %v1673, 1
        %v1675 = vmax.f32 %v1673, %v1674
        %v1676 = vld [vmem:[#allocation2 + $0x3] sm:$0x1]
        %v1677 = vmax.f32 %v1676, %v1675
        %1678 = vst.msk [vmem:[#allocation2 + $0x3] sm:$0x1] %vm1569, %v1677
      $region112: #{_lambda_.2} parent=103 // pred_fallthru
        _
      %p1679 = scmp.eq.s32.totalorder %s38, 1
      // Predicated region
      $region113: #{_lambda_.2} parent=103 // pred_check
        %p1680 = pneg %p1679
      $region114: #{_lambda_.2} parent=103 // pred_check_branch
        %1682 = sbr.rel (%p1680) target = $region116
      $region115: #{_lambda_.2} parent=103 // pred_region
        // Predicated region
        $region117: #{_lambda_.2} parent=115 // pred_check
          %p1683 = pneg %p757
        $region118: #{_lambda_.2} parent=115 // pred_check_branch
          %1685 = sbr.rel (%p1683) target = $region120
        $region119: #{_lambda_.2} parent=115 // pred_region
          %vm1686 = vcmask 31744
          %1687 = vst.msk [vmem:[#allocation3] sm:$0xff] %vm1686, 0.0
          %1688 = vst.msk [vmem:[#allocation3 + $0x8] sm:$0xff] %vm1686, 0.0
          %1689 = vst [vmem:[#allocation4] sm:$0xff] 0.0
          %1690 = vst [vmem:[#allocation4 + $0x8] sm:$0xff] 0.0
        $region120: #{_lambda_.2} parent=115 // pred_fallthru
          _
        %v1691 = vld [vmem:[#allocation2] sm:$0xf]
        %v1693 = vsel %vm887, %v881, 0
        %v1696 = vsel %vm887, %v882, 0
        %v1699 = vsel %vm887, %v883, 0
        %v1702 = vsel %vm887, %v884, 0
        %v1705 = vsel %vm887, %v1691, 0
        %1707 = vmatprep.subr.mxu0 0.0
        %1708 = vmatpush1.xpose.msra.mxu0 0.0
        %1709 = vmatprep.subr.mxu0 0.0
        %1710 = vmatpush1.xpose.msra.mxu0 0.0
        %1711 = vmatprep.subr.mxu0 0.0
        %1712 = vmatpush1.xpose.msra.mxu0 0.0
        %1713 = vmatprep.subr.mxu0 0.0
        %1714 = vmatpush1.xpose.msra.mxu0 0.0
        %1715 = vmatprep.subr.mxu0 0.0
        %1716 = vmatpush1.xpose.msra.mxu0 0.0
        %1717 = vmatprep.subr.mxu0 0.0
        %1718 = vmatpush1.xpose.msra.mxu0 0.0
        %1719 = vmatprep.subr.mxu0 0.0
        %1720 = vmatpush1.xpose.msra.mxu0 0.0
        %1721 = vmatprep.subr.mxu0 0.0
        %1722 = vmatpush1.xpose.msra.mxu0 0.0
        %1723 = vmatprep.subr.mxu0 0.0
        %1724 = vmatpush1.xpose.msra.mxu0 0.0
        %1725 = vmatprep.subr.mxu0 0.0
        %1726 = vmatpush1.xpose.msra.mxu0 0.0
        %1727 = vmatprep.subr.mxu0 0.0
        %1728 = vmatpush1.xpose.msra.mxu0 0.0
        %1729 = vmatprep.subr.mxu0 0.0
        %1730 = vmatpush1.xpose.msra.mxu0 0.0
        %1731 = vmatprep.subr.mxu0 0.0
        %1732 = vmatpush1.xpose.msra.mxu0 0.0
        %1733 = vmatprep.subr.mxu0 0.0
        %1734 = vmatpush1.xpose.msra.mxu0 0.0
        %1735 = vmatprep.subr.mxu0 0.0
        %1736 = vmatpush1.xpose.msra.mxu0 0.0
        %1737 = vmatprep.subr.mxu0 0.0
        %1738 = vmatpush1.xpose.msra.mxu0 %v1705
        %1739 = vmatprep.subr.mxu0 0.0
        %1740 = vmatpush2.xpose.msra.mxu0 0.0
        %1741 = vmatprep.subr.mxu0 0.0
        %1742 = vmatpush2.xpose.msra.mxu0 0.0
        %1743 = vmatprep.subr.mxu0 0.0
        %1744 = vmatpush2.xpose.msra.mxu0 0.0
        %1745 = vmatprep.subr.mxu0 0.0
        %1746 = vmatpush2.xpose.msra.mxu0 0.0
        %1747 = vmatprep.subr.mxu0 0.0
        %1748 = vmatpush2.xpose.msra.mxu0 0.0
        %1749 = vmatprep.subr.mxu0 0.0
        %1750 = vmatpush2.xpose.msra.mxu0 0.0
        %1751 = vmatprep.subr.mxu0 0.0
        %1752 = vmatpush2.xpose.msra.mxu0 0.0
        %1753 = vmatprep.subr.mxu0 0.0
        %1754 = vmatpush2.xpose.msra.mxu0 0.0
        %1755 = vmatprep.subr.mxu0 0.0
        %1756 = vmatpush2.xpose.msra.mxu0 0.0
        %1757 = vmatprep.subr.mxu0 0.0
        %1758 = vmatpush2.xpose.msra.mxu0 0.0
        %1759 = vmatprep.subr.mxu0 0.0
        %1760 = vmatpush2.xpose.msra.mxu0 0.0
        %1761 = vmatprep.subr.mxu0 0.0
        %1762 = vmatpush2.xpose.msra.mxu0 0.0
        %1763 = vmatprep.subr.mxu0 0.0
        %1764 = vmatpush2.xpose.msra.mxu0 0.0
        %1765 = vmatprep.subr.mxu0 0.0
        %1766 = vmatpush2.xpose.msra.mxu0 0.0
        %1767 = vmatprep.subr.mxu0 0.0
        %1768 = vmatpush2.xpose.msra.mxu0 0.0
        %1769 = vmatprep.subr.mxu0 0.0
        %1770 = vmatpush2.xpose.msra.mxu0 0.0
        %1771 = vmatprep.mubr.f32.mxu0 0.0
        %1772 = vmatmul.mubr.f32.gmra.mxu0 %v1693
        %v1773 = vpop.f32.mrf.mxu0
        %v1774 = vadd.f32 0.0, %v1773
        %v1775 = vpop.f32.mrf.mxu0
        %1776 = vmatprep.mubr.f32.mxu0 0.0
        %1777 = vmatmul.mubr.f32.gmra.mxu0 %v1696
        %v1778 = vpop.f32.mrf.mxu0
        %v1779 = vadd.f32 0.0, %v1778
        %v1780 = vpop.f32.mrf.mxu0
        %1781 = vmatprep.mubr.f32.mxu0 0.0
        %1782 = vmatmul.mubr.f32.gmra.mxu0 %v1699
        %v1783 = vpop.f32.mrf.mxu0
        %v1784 = vadd.f32 0.0, %v1783
        %v1785 = vpop.f32.mrf.mxu0
        %1786 = vmatprep.mubr.f32.mxu0 0.0
        %1787 = vmatmul.mubr.f32.gmra.mxu0 %v1702
        %v1788 = vpop.f32.mrf.mxu0
        %v1789 = vadd.f32 0.0, %v1788
        %v1790 = vpop.f32.mrf.mxu0
        %1791 = vdwg.mxu0
        %v1792 = vsub.f32 %v1505, %v1774
        %v1793 = vsub.f32 %v1510, %v1779
        %v1794 = vsub.f32 %v1515, %v1784
        %v1795 = vsub.f32 %v1520, %v1789
        %v1796 = vmin.f32 %v1792, 40.0
        %v1797 = vmin.f32 %v1793, 40.0
        %v1798 = vmin.f32 %v1794, 40.0
        %v1799 = vmin.f32 %v1795, 40.0
        %v1800 = vmul.f32 %v1796, 1.442695
        %v1801 = vpow.pop %v1800
        %v1802 = vmul.f32 %v1797, 1.442695
        %v1803 = vpow.pop %v1802
        %v1804 = vmul.f32 %v1798, 1.442695
        %v1805 = vpow.pop %v1804
        %v1806 = vmul.f32 %v1799, 1.442695
        %v1807 = vpow.pop %v1806
        %v1808 = vld [vmem:[%s11] sm:$0xf]
        %vm1809 = vcmask 31744
        %v1811 = vsel %vm1809, %v1801, 0
        %v1814 = vsel %vm1809, %v1803, 0
        %v1817 = vsel %vm1809, %v1805, 0
        %v1820 = vsel %vm1809, %v1807, 0
        %vm1822 = vcmask 1043456
        %v1824 = vsel %vm1822, %v1808, 0
        %1826 = vmatprep.subr.mxu0 0.0
        %1827 = vmatpush1.msra.mxu0 0.0
        %1828 = vmatprep.subr.mxu0 0.0
        %1829 = vmatpush1.msra.mxu0 0.0
        %1830 = vmatprep.subr.mxu0 0.0
        %1831 = vmatpush1.msra.mxu0 0.0
        %1832 = vmatprep.subr.mxu0 0.0
        %1833 = vmatpush1.msra.mxu0 0.0
        %1834 = vmatprep.subr.mxu0 0.0
        %1835 = vmatpush1.msra.mxu0 0.0
        %1836 = vmatprep.subr.mxu0 0.0
        %1837 = vmatpush1.msra.mxu0 0.0
        %1838 = vmatprep.subr.mxu0 0.0
        %1839 = vmatpush1.msra.mxu0 0.0
        %1840 = vmatprep.subr.mxu0 0.0
        %1841 = vmatpush1.msra.mxu0 0.0
        %1842 = vmatprep.subr.mxu0 0.0
        %1843 = vmatpush1.msra.mxu0 0.0
        %1844 = vmatprep.subr.mxu0 0.0
        %1845 = vmatpush1.msra.mxu0 0.0
        %1846 = vmatprep.subr.mxu0 0.0
        %1847 = vmatpush1.msra.mxu0 0.0
        %1848 = vmatprep.subr.mxu0 0.0
        %1849 = vmatpush1.msra.mxu0 0.0
        %1850 = vmatprep.subr.mxu0 0.0
        %1851 = vmatpush1.msra.mxu0 0.0
        %1852 = vmatprep.subr.mxu0 0.0
        %1853 = vmatpush1.msra.mxu0 0.0
        %1854 = vmatprep.subr.mxu0 0.0
        %1855 = vmatpush1.msra.mxu0 0.0
        %1856 = vmatprep.subr.mxu0 0.0
        %1857 = vmatpush1.msra.mxu0 %v1824
        %1858 = vmatprep.subr.mxu0 0.0
        %1859 = vmatpush2.msra.mxu0 0.0
        %1860 = vmatprep.subr.mxu0 0.0
        %1861 = vmatpush2.msra.mxu0 0.0
        %1862 = vmatprep.subr.mxu0 0.0
        %1863 = vmatpush2.msra.mxu0 0.0
        %1864 = vmatprep.subr.mxu0 0.0
        %1865 = vmatpush2.msra.mxu0 0.0
        %1866 = vmatprep.subr.mxu0 0.0
        %1867 = vmatpush2.msra.mxu0 0.0
        %1868 = vmatprep.subr.mxu0 0.0
        %1869 = vmatpush2.msra.mxu0 0.0
        %1870 = vmatprep.subr.mxu0 0.0
        %1871 = vmatpush2.msra.mxu0 0.0
        %1872 = vmatprep.subr.mxu0 0.0
        %1873 = vmatpush2.msra.mxu0 0.0
        %1874 = vmatprep.subr.mxu0 0.0
        %1875 = vmatpush2.msra.mxu0 0.0
        %1876 = vmatprep.subr.mxu0 0.0
        %1877 = vmatpush2.msra.mxu0 0.0
        %1878 = vmatprep.subr.mxu0 0.0
        %1879 = vmatpush2.msra.mxu0 0.0
        %1880 = vmatprep.subr.mxu0 0.0
        %1881 = vmatpush2.msra.mxu0 0.0
        %1882 = vmatprep.subr.mxu0 0.0
        %1883 = vmatpush2.msra.mxu0 0.0
        %1884 = vmatprep.subr.mxu0 0.0
        %1885 = vmatpush2.msra.mxu0 0.0
        %1886 = vmatprep.subr.mxu0 0.0
        %1887 = vmatpush2.msra.mxu0 0.0
        %1888 = vmatprep.subr.mxu0 0.0
        %1889 = vmatpush2.msra.mxu0 0.0
        %1890 = vmatprep.mubr.f32.mxu0 0.0
        %1891 = vmatmul.mubr.f32.gmra.mxu0 %v1811
        %v1892 = vpop.f32.mrf.mxu0
        %v1893 = vadd.f32 0.0, %v1892
        %v1894 = vpop.f32.mrf.mxu0
        %1895 = vmatprep.mubr.f32.mxu0 0.0
        %1896 = vmatmul.mubr.f32.gmra.mxu0 %v1814
        %v1897 = vpop.f32.mrf.mxu0
        %v1898 = vadd.f32 0.0, %v1897
        %v1899 = vpop.f32.mrf.mxu0
        %1900 = vmatprep.mubr.f32.mxu0 0.0
        %1901 = vmatmul.mubr.f32.gmra.mxu0 %v1817
        %v1902 = vpop.f32.mrf.mxu0
        %v1903 = vadd.f32 0.0, %v1902
        %v1904 = vpop.f32.mrf.mxu0
        %1905 = vmatprep.mubr.f32.mxu0 0.0
        %1906 = vmatmul.mubr.f32.gmra.mxu0 %v1820
        %v1907 = vpop.f32.mrf.mxu0
        %v1908 = vadd.f32 0.0, %v1907
        %v1909 = vpop.f32.mrf.mxu0
        %1910 = vdwg.mxu0
        %v1911 = vmul.f32 %v1893, %v1076
        %v1912 = vmul.f32 %v1898, %v1081
        %v1913 = vmul.f32 %v1903, %v1086
        %v1914 = vmul.f32 %v1908, %v1091
        %v1915 = vld [vmem:[#allocation3] sm:$0xff]
        %v1916 = vld [vmem:[#allocation3 + $0x8] sm:$0xff]
        %1917 = vxpose.xlu0.b32.start [1/16] %v881, 128
        %1918 = vxpose.xlu0.b32.cont [2/16] %v882, 128
        %1919 = vxpose.xlu0.b32.cont [3/16] %v883, 128
        %1920 = vxpose.xlu0.b32.cont [4/16] %v884, 128
        %1921 = vxpose.xlu0.b32.cont [5/16] 0.0, 128
        %1922 = vxpose.xlu0.b32.cont [6/16] 0.0, 128
        %1923 = vxpose.xlu0.b32.cont [7/16] 0.0, 128
        %1924 = vxpose.xlu0.b32.cont [8/16] 0.0, 128
        %1925 = vxpose.xlu0.b32.cont [9/16] 0.0, 128
        %1926 = vxpose.xlu0.b32.cont [10/16] 0.0, 128
        %1927 = vxpose.xlu0.b32.cont [11/16] 0.0, 128
        %1928 = vxpose.xlu0.b32.cont [12/16] 0.0, 128
        %1929 = vxpose.xlu0.b32.cont [13/16] 0.0, 128
        %1930 = vxpose.xlu0.b32.cont [14/16] 0.0, 128
        %1931 = vxpose.xlu0.b32.cont [15/16] 0.0, 128
        %1932 = vxpose.xlu0.b32.end [16/16] 0.0, 128
        %v1933 = vpop.trf.xlu0
        %v1934 = vpop.trf.xlu0
        %v1935 = vpop.trf.xlu0
        %v1936 = vpop.trf.xlu0
        %v1937 = vpop.trf.xlu0
        %v1938 = vpop.trf.xlu0
        %v1939 = vpop.trf.xlu0
        %v1940 = vpop.trf.xlu0
        %v1941 = vpop.trf.xlu0
        %v1942 = vpop.trf.xlu0
        %v1943 = vpop.trf.xlu0
        %v1944 = vpop.trf.xlu0
        %v1945 = vpop.trf.xlu0
        %v1946 = vpop.trf.xlu0
        %v1947 = vpop.trf.xlu0
        %v1948 = vpop.trf.xlu0
        %v1950 = vsel %vm996, %v1933, 0
        %v1953 = vsel %vm996, %v1934, 0
        %1955 = vmatprep.subr.mxu0 0.0
        %1956 = vmatpush1.msra.mxu0 0.0
        %1957 = vmatprep.subr.mxu0 0.0
        %1958 = vmatpush1.msra.mxu0 0.0
        %1959 = vmatprep.subr.mxu0 0.0
        %1960 = vmatpush1.msra.mxu0 0.0
        %1961 = vmatprep.subr.mxu0 0.0
        %1962 = vmatpush1.msra.mxu0 0.0
        %1963 = vmatprep.subr.mxu0 0.0
        %1964 = vmatpush1.msra.mxu0 0.0
        %1965 = vmatprep.subr.mxu0 0.0
        %1966 = vmatpush1.msra.mxu0 0.0
        %1967 = vmatprep.subr.mxu0 0.0
        %1968 = vmatpush1.msra.mxu0 0.0
        %1969 = vmatprep.subr.mxu0 0.0
        %1970 = vmatpush1.msra.mxu0 0.0
        %1971 = vmatprep.subr.mxu0 0.0
        %1972 = vmatpush1.msra.mxu0 0.0
        %1973 = vmatprep.subr.mxu0 0.0
        %1974 = vmatpush1.msra.mxu0 0.0
        %1975 = vmatprep.subr.mxu0 0.0
        %1976 = vmatpush1.msra.mxu0 0.0
        %1977 = vmatprep.subr.mxu0 0.0
        %1978 = vmatpush1.msra.mxu0 0.0
        %1979 = vmatprep.subr.mxu0 0.0
        %1980 = vmatpush1.msra.mxu0 %v1807
        %1981 = vmatprep.subr.mxu0 0.0
        %1982 = vmatpush1.msra.mxu0 %v1805
        %1983 = vmatprep.subr.mxu0 0.0
        %1984 = vmatpush1.msra.mxu0 %v1803
        %1985 = vmatprep.subr.mxu0 0.0
        %1986 = vmatpush1.msra.mxu0 %v1801
        %1987 = vmatprep.subr.mxu0 0.0
        %1988 = vmatpush2.msra.mxu0 0.0
        %1989 = vmatprep.subr.mxu0 0.0
        %1990 = vmatpush2.msra.mxu0 0.0
        %1991 = vmatprep.subr.mxu0 0.0
        %1992 = vmatpush2.msra.mxu0 0.0
        %1993 = vmatprep.subr.mxu0 0.0
        %1994 = vmatpush2.msra.mxu0 0.0
        %1995 = vmatprep.subr.mxu0 0.0
        %1996 = vmatpush2.msra.mxu0 0.0
        %1997 = vmatprep.subr.mxu0 0.0
        %1998 = vmatpush2.msra.mxu0 0.0
        %1999 = vmatprep.subr.mxu0 0.0
        %2000 = vmatpush2.msra.mxu0 0.0
        %2001 = vmatprep.subr.mxu0 0.0
        %2002 = vmatpush2.msra.mxu0 0.0
        %2003 = vmatprep.subr.mxu0 0.0
        %2004 = vmatpush2.msra.mxu0 0.0
        %2005 = vmatprep.subr.mxu0 0.0
        %2006 = vmatpush2.msra.mxu0 0.0
        %2007 = vmatprep.subr.mxu0 0.0
        %2008 = vmatpush2.msra.mxu0 0.0
        %2009 = vmatprep.subr.mxu0 0.0
        %2010 = vmatpush2.msra.mxu0 0.0
        %2011 = vmatprep.subr.mxu0 0.0
        %2012 = vmatpush2.msra.mxu0 0.0
        %2013 = vmatprep.subr.mxu0 0.0
        %2014 = vmatpush2.msra.mxu0 0.0
        %2015 = vmatprep.subr.mxu0 0.0
        %2016 = vmatpush2.msra.mxu0 0.0
        %2017 = vmatprep.subr.mxu0 0.0
        %2018 = vmatpush2.msra.mxu0 0.0
        %2019 = vmatprep.mubr.f32.mxu0 0.0
        %2020 = vmatmul.mubr.f32.gmra.mxu0 %v1950
        %v2021 = vpop.f32.mrf.mxu0
        %v2022 = vadd.f32 0.0, %v2021
        %v2023 = vpop.f32.mrf.mxu0
        %2024 = vmatprep.mubr.f32.mxu0 0.0
        %2025 = vmatmul.mubr.f32.gmra.mxu0 %v1953
        %v2026 = vpop.f32.mrf.mxu0
        %v2027 = vadd.f32 0.0, %v2026
        %v2028 = vpop.f32.mrf.mxu0
        %2029 = vdwg.mxu0
        %v2030 = vadd.f32 %v1915, %v2022
        %v2031 = vadd.f32 %v1916, %v2027
        %2032 = vst.msk [vmem:[#allocation3] sm:$0xff] %vm1809, %v2030
        %2033 = vst.msk [vmem:[#allocation3 + $0x8] sm:$0xff] %vm1809, %v2031
        %v2034 = vld [vmem:[#allocation4] sm:$0xff]
        %v2035 = vld [vmem:[#allocation4 + $0x8] sm:$0xff]
        %2036 = vmatprep.subr.mxu0 0.0
        %2037 = vmatpush1.msra.mxu0 0.0
        %2038 = vmatprep.subr.mxu0 0.0
        %2039 = vmatpush1.msra.mxu0 0.0
        %2040 = vmatprep.subr.mxu0 0.0
        %2041 = vmatpush1.msra.mxu0 0.0
        %2042 = vmatprep.subr.mxu0 0.0
        %2043 = vmatpush1.msra.mxu0 0.0
        %2044 = vmatprep.subr.mxu0 0.0
        %2045 = vmatpush1.msra.mxu0 0.0
        %2046 = vmatprep.subr.mxu0 0.0
        %2047 = vmatpush1.msra.mxu0 0.0
        %2048 = vmatprep.subr.mxu0 0.0
        %2049 = vmatpush1.msra.mxu0 0.0
        %2050 = vmatprep.subr.mxu0 0.0
        %2051 = vmatpush1.msra.mxu0 0.0
        %2052 = vmatprep.subr.mxu0 0.0
        %2053 = vmatpush1.msra.mxu0 0.0
        %2054 = vmatprep.subr.mxu0 0.0
        %2055 = vmatpush1.msra.mxu0 0.0
        %2056 = vmatprep.subr.mxu0 0.0
        %2057 = vmatpush1.msra.mxu0 0.0
        %2058 = vmatprep.subr.mxu0 0.0
        %2059 = vmatpush1.msra.mxu0 0.0
        %2060 = vmatprep.subr.mxu0 0.0
        %2061 = vmatpush1.msra.mxu0 %v1914
        %2062 = vmatprep.subr.mxu0 0.0
        %2063 = vmatpush1.msra.mxu0 %v1913
        %2064 = vmatprep.subr.mxu0 0.0
        %2065 = vmatpush1.msra.mxu0 %v1912
        %2066 = vmatprep.subr.mxu0 0.0
        %2067 = vmatpush1.msra.mxu0 %v1911
        %2068 = vmatprep.subr.mxu0 0.0
        %2069 = vmatpush2.msra.mxu0 0.0
        %2070 = vmatprep.subr.mxu0 0.0
        %2071 = vmatpush2.msra.mxu0 0.0
        %2072 = vmatprep.subr.mxu0 0.0
        %2073 = vmatpush2.msra.mxu0 0.0
        %2074 = vmatprep.subr.mxu0 0.0
        %2075 = vmatpush2.msra.mxu0 0.0
        %2076 = vmatprep.subr.mxu0 0.0
        %2077 = vmatpush2.msra.mxu0 0.0
        %2078 = vmatprep.subr.mxu0 0.0
        %2079 = vmatpush2.msra.mxu0 0.0
        %2080 = vmatprep.subr.mxu0 0.0
        %2081 = vmatpush2.msra.mxu0 0.0
        %2082 = vmatprep.subr.mxu0 0.0
        %2083 = vmatpush2.msra.mxu0 0.0
        %2084 = vmatprep.subr.mxu0 0.0
        %2085 = vmatpush2.msra.mxu0 0.0
        %2086 = vmatprep.subr.mxu0 0.0
        %2087 = vmatpush2.msra.mxu0 0.0
        %2088 = vmatprep.subr.mxu0 0.0
        %2089 = vmatpush2.msra.mxu0 0.0
        %2090 = vmatprep.subr.mxu0 0.0
        %2091 = vmatpush2.msra.mxu0 0.0
        %2092 = vmatprep.subr.mxu0 0.0
        %2093 = vmatpush2.msra.mxu0 0.0
        %2094 = vmatprep.subr.mxu0 0.0
        %2095 = vmatpush2.msra.mxu0 0.0
        %2096 = vmatprep.subr.mxu0 0.0
        %2097 = vmatpush2.msra.mxu0 0.0
        %2098 = vmatprep.subr.mxu0 0.0
        %2099 = vmatpush2.msra.mxu0 0.0
        %2100 = vmatprep.mubr.f32.mxu0 0.0
        %2101 = vmatmul.mubr.f32.gmra.mxu0 %v1950
        %v2102 = vpop.f32.mrf.mxu0
        %v2103 = vadd.f32 0.0, %v2102
        %v2104 = vpop.f32.mrf.mxu0
        %2105 = vmatprep.mubr.f32.mxu0 0.0
        %2106 = vmatmul.mubr.f32.gmra.mxu0 %v1953
        %v2107 = vpop.f32.mrf.mxu0
        %v2108 = vadd.f32 0.0, %v2107
        %v2109 = vpop.f32.mrf.mxu0
        %2110 = vdwg.mxu0
        %v2111 = vadd.f32 %v2034, %v2103
        %v2112 = vadd.f32 %v2035, %v2108
        %2113 = vst [vmem:[#allocation4] sm:$0xff] %v2111
        %2114 = vst [vmem:[#allocation4 + $0x8] sm:$0xff] %v2112
        %p2115 = scmp.eq.s32.totalorder %s39, 1
        // Predicated region
        $region121: #{_lambda_.2} parent=115 // pred_check
          %p2116 = pneg %p2115
        $region122: #{_lambda_.2} parent=115 // pred_check_branch
          %2118 = sbr.rel (%p2116) target = $region124
        $region123: #{_lambda_.2} parent=115 // pred_region
          %v2119 = vld [vmem:[#allocation3] sm:$0xff]
          %v2120 = vld [vmem:[#allocation3 + $0x8] sm:$0xff]
          %v2121 = vmax.f32 %v2119, 1e-20
          %v2122 = vmax.f32 %v2120, 1e-20
          %v2123 = vrcp.pop %v2121
          %v2124 = vrcp.pop %v2122
          %v2125 = vld [vmem:[%s11] sm:$0xf]
          %v2127 = vsel %vm1809, %v2123, 0
          %v2130 = vsel %vm1809, %v2124, 0
          %v2133 = vsel %vm1822, %v2125, 0
          %2135 = vmatprep.subr.mxu0 0.0
          %2136 = vmatpush1.msra.mxu0 0.0
          %2137 = vmatprep.subr.mxu0 0.0
          %2138 = vmatpush1.msra.mxu0 0.0
          %2139 = vmatprep.subr.mxu0 0.0
          %2140 = vmatpush1.msra.mxu0 0.0
          %2141 = vmatprep.subr.mxu0 0.0
          %2142 = vmatpush1.msra.mxu0 0.0
          %2143 = vmatprep.subr.mxu0 0.0
          %2144 = vmatpush1.msra.mxu0 0.0
          %2145 = vmatprep.subr.mxu0 0.0
          %2146 = vmatpush1.msra.mxu0 0.0
          %2147 = vmatprep.subr.mxu0 0.0
          %2148 = vmatpush1.msra.mxu0 0.0
          %2149 = vmatprep.subr.mxu0 0.0
          %2150 = vmatpush1.msra.mxu0 0.0
          %2151 = vmatprep.subr.mxu0 0.0
          %2152 = vmatpush1.msra.mxu0 0.0
          %2153 = vmatprep.subr.mxu0 0.0
          %2154 = vmatpush1.msra.mxu0 0.0
          %2155 = vmatprep.subr.mxu0 0.0
          %2156 = vmatpush1.msra.mxu0 0.0
          %2157 = vmatprep.subr.mxu0 0.0
          %2158 = vmatpush1.msra.mxu0 0.0
          %2159 = vmatprep.subr.mxu0 0.0
          %2160 = vmatpush1.msra.mxu0 0.0
          %2161 = vmatprep.subr.mxu0 0.0
          %2162 = vmatpush1.msra.mxu0 0.0
          %2163 = vmatprep.subr.mxu0 0.0
          %2164 = vmatpush1.msra.mxu0 0.0
          %2165 = vmatprep.subr.mxu0 0.0
          %2166 = vmatpush1.msra.mxu0 %v2133
          %2167 = vmatprep.subr.mxu0 0.0
          %2168 = vmatpush2.msra.mxu0 0.0
          %2169 = vmatprep.subr.mxu0 0.0
          %2170 = vmatpush2.msra.mxu0 0.0
          %2171 = vmatprep.subr.mxu0 0.0
          %2172 = vmatpush2.msra.mxu0 0.0
          %2173 = vmatprep.subr.mxu0 0.0
          %2174 = vmatpush2.msra.mxu0 0.0
          %2175 = vmatprep.subr.mxu0 0.0
          %2176 = vmatpush2.msra.mxu0 0.0
          %2177 = vmatprep.subr.mxu0 0.0
          %2178 = vmatpush2.msra.mxu0 0.0
          %2179 = vmatprep.subr.mxu0 0.0
          %2180 = vmatpush2.msra.mxu0 0.0
          %2181 = vmatprep.subr.mxu0 0.0
          %2182 = vmatpush2.msra.mxu0 0.0
          %2183 = vmatprep.subr.mxu0 0.0
          %2184 = vmatpush2.msra.mxu0 0.0
          %2185 = vmatprep.subr.mxu0 0.0
          %2186 = vmatpush2.msra.mxu0 0.0
          %2187 = vmatprep.subr.mxu0 0.0
          %2188 = vmatpush2.msra.mxu0 0.0
          %2189 = vmatprep.subr.mxu0 0.0
          %2190 = vmatpush2.msra.mxu0 0.0
          %2191 = vmatprep.subr.mxu0 0.0
          %2192 = vmatpush2.msra.mxu0 0.0
          %2193 = vmatprep.subr.mxu0 0.0
          %2194 = vmatpush2.msra.mxu0 0.0
          %2195 = vmatprep.subr.mxu0 0.0
          %2196 = vmatpush2.msra.mxu0 0.0
          %2197 = vmatprep.subr.mxu0 0.0
          %2198 = vmatpush2.msra.mxu0 0.0
          %2199 = vmatprep.mubr.f32.mxu0 0.0
          %2200 = vmatmul.mubr.f32.gmra.mxu0 %v2127
          %v2201 = vpop.f32.mrf.mxu0
          %v2202 = vadd.f32 0.0, %v2201
          %v2203 = vpop.f32.mrf.mxu0
          %2204 = vmatprep.mubr.f32.mxu0 0.0
          %2205 = vmatmul.mubr.f32.gmra.mxu0 %v2130
          %v2206 = vpop.f32.mrf.mxu0
          %v2207 = vadd.f32 0.0, %v2206
          %v2208 = vpop.f32.mrf.mxu0
          %2209 = vdwg.mxu0
          %v2210 = vld [vmem:[#allocation4] sm:$0xff]
          %v2211 = vld [vmem:[#allocation4 + $0x8] sm:$0xff]
          %v2212 = vmul.f32 %v2210, %v2202
          %v2213 = vmul.f32 %v2211, %v2207
          %v2214 = vld [vmem:[%s12] sm:$0x1]
          %v2216 = vlaneseq
          %v2217 = vshrl.u32 %v2216, 7
          %v2218 = vsub.s32 0, %v2217
          %v2219 = vrot.slane %v2214, %v2218
          %v2221 = vadd.f32 %v2212, %v2219
          %v2222 = vadd.f32 %v2213, %v2219
          %s2223 = smul.u32 %s37, 16
          %s2224 = scalar_lea.vmem [#allocation5], %s2223
          %v2225 = vld [vmem:[%s2224] sm:$0xff]
          %v2226 = vld [vmem:[%s2224 + $0x8] sm:$0xff]
          %v2227 = vld [vmem:[%s13] sm:$0xff]
          %v2228 = vld [vmem:[%s13 + $0x8] sm:$0xff]
          %v2229 = vld [vmem:[%s13 + $0x10] sm:$0xff]
          %v2230 = vld [vmem:[%s13 + $0x18] sm:$0xff]
          %v2231 = vld [vmem:[%s14] sm:$0x1]
          %v2233 = vlaneseq
          %v2234 = vshrl.u32 %v2233, 7
          %v2235 = vsub.s32 0, %v2234
          %v2236 = vrot.slane %v2231, %v2235
          %v2239 = vsel %vm996, %v2225, 0
          %v2242 = vsel %vm996, %v2226, 0
          %2244 = vmatprep.subr.mxu0 0.0
          %2245 = vmatpush1.msra.mxu0 0.0
          %2246 = vmatprep.subr.mxu0 0.0
          %2247 = vmatpush1.msra.mxu0 0.0
          %2248 = vmatprep.subr.mxu0 0.0
          %2249 = vmatpush1.msra.mxu0 0.0
          %2250 = vmatprep.subr.mxu0 0.0
          %2251 = vmatpush1.msra.mxu0 0.0
          %2252 = vmatprep.subr.mxu0 0.0
          %2253 = vmatpush1.msra.mxu0 0.0
          %2254 = vmatprep.subr.mxu0 0.0
          %2255 = vmatpush1.msra.mxu0 0.0
          %2256 = vmatprep.subr.mxu0 0.0
          %2257 = vmatpush1.msra.mxu0 0.0
          %2258 = vmatprep.subr.mxu0 0.0
          %2259 = vmatpush1.msra.mxu0 0.0
          %2260 = vmatprep.subr.mxu0 0.0
          %2261 = vmatpush1.msra.mxu0 0.0
          %2262 = vmatprep.subr.mxu0 0.0
          %2263 = vmatpush1.msra.mxu0 0.0
          %2264 = vmatprep.subr.mxu0 0.0
          %2265 = vmatpush1.msra.mxu0 0.0
          %2266 = vmatprep.subr.mxu0 0.0
          %2267 = vmatpush1.msra.mxu0 0.0
          %2268 = vmatprep.subr.mxu0 0.0
          %2269 = vmatpush1.msra.mxu0 %v2230
          %2270 = vmatprep.subr.mxu0 0.0
          %2271 = vmatpush1.msra.mxu0 %v2229
          %2272 = vmatprep.subr.mxu0 0.0
          %2273 = vmatpush1.msra.mxu0 %v2228
          %2274 = vmatprep.subr.mxu0 0.0
          %2275 = vmatpush1.msra.mxu0 %v2227
          %2276 = vmatprep.subr.mxu0 0.0
          %2277 = vmatpush2.msra.mxu0 0.0
          %2278 = vmatprep.subr.mxu0 0.0
          %2279 = vmatpush2.msra.mxu0 0.0
          %2280 = vmatprep.subr.mxu0 0.0
          %2281 = vmatpush2.msra.mxu0 0.0
          %2282 = vmatprep.subr.mxu0 0.0
          %2283 = vmatpush2.msra.mxu0 0.0
          %2284 = vmatprep.subr.mxu0 0.0
          %2285 = vmatpush2.msra.mxu0 0.0
          %2286 = vmatprep.subr.mxu0 0.0
          %2287 = vmatpush2.msra.mxu0 0.0
          %2288 = vmatprep.subr.mxu0 0.0
          %2289 = vmatpush2.msra.mxu0 0.0
          %2290 = vmatprep.subr.mxu0 0.0
          %2291 = vmatpush2.msra.mxu0 0.0
          %2292 = vmatprep.subr.mxu0 0.0
          %2293 = vmatpush2.msra.mxu0 0.0
          %2294 = vmatprep.subr.mxu0 0.0
          %2295 = vmatpush2.msra.mxu0 0.0
          %2296 = vmatprep.subr.mxu0 0.0
          %2297 = vmatpush2.msra.mxu0 0.0
          %2298 = vmatprep.subr.mxu0 0.0
          %2299 = vmatpush2.msra.mxu0 0.0
          %2300 = vmatprep.subr.mxu0 0.0
          %2301 = vmatpush2.msra.mxu0 0.0
          %2302 = vmatprep.subr.mxu0 0.0
          %2303 = vmatpush2.msra.mxu0 0.0
          %2304 = vmatprep.subr.mxu0 0.0
          %2305 = vmatpush2.msra.mxu0 0.0
          %2306 = vmatprep.subr.mxu0 0.0
          %2307 = vmatpush2.msra.mxu0 0.0
          %2308 = vmatprep.mubr.f32.mxu0 0.0
          %2309 = vmatmul.mubr.f32.gmra.mxu0 %v2239
          %v2310 = vpop.f32.mrf.mxu0
          %v2311 = vadd.f32 %v2236, %v2310
          %v2312 = vpop.f32.mrf.mxu0
          %2313 = vmatprep.mubr.f32.mxu0 0.0
          %2314 = vmatmul.mubr.f32.gmra.mxu0 %v2242
          %v2315 = vpop.f32.mrf.mxu0
          %v2316 = vadd.f32 %v2236, %v2315
          %v2317 = vpop.f32.mrf.mxu0
          %2318 = vdwg.mxu0
          %v2319 = vadd.f32 %v2221, %v2311
          %v2320 = vadd.f32 %v2222, %v2316
          %v2321 = vld [vmem:[%s17] sm:$0x1]
          %v2323 = vlaneseq
          %v2324 = vshrl.u32 %v2323, 7
          %v2325 = vsub.s32 0, %v2324
          %v2326 = vrot.slane %v2321, %v2325
          %v2328 = vsub.f32 %v2319, %v2326
          %v2329 = vsub.f32 %v2320, %v2326
          %v2330 = vld [vmem:[%s18] sm:$0x1]
          %v2331 = vadd.f32 %v2330, 1e-05
          %v2332 = vrsqrt.pop %v2331
          %v2334 = vlaneseq
          %v2335 = vshrl.u32 %v2334, 7
          %v2336 = vsub.s32 0, %v2335
          %v2337 = vrot.slane %v2332, %v2336
          %v2339 = vmul.f32 %v2328, %v2337
          %v2340 = vmul.f32 %v2329, %v2337
          %v2341 = vld [vmem:[%s15] sm:$0x1]
          %v2343 = vlaneseq
          %v2344 = vshrl.u32 %v2343, 7
          %v2345 = vsub.s32 0, %v2344
          %v2346 = vrot.slane %v2341, %v2345
          %v2348 = vmul.f32 %v2339, %v2346
          %v2349 = vmul.f32 %v2340, %v2346
          %v2350 = vld [vmem:[%s16] sm:$0x1]
          %v2352 = vlaneseq
          %v2353 = vshrl.u32 %v2352, 7
          %v2354 = vsub.s32 0, %v2353
          %v2355 = vrot.slane %v2350, %v2354
          %v2357 = vadd.f32 %v2348, %v2355
          %v2358 = vadd.f32 %v2349, %v2355
          %v2359 = vmax.f32 %v2357, 0.0
          %v2360 = vmax.f32 %v2358, 0.0
          %2361 = vst [vmem:[%s754] sm:$0xff] %v2359
          %2362 = vst [vmem:[%s754 + $0x8] sm:$0xff] %v2360
        $region124: #{_lambda_.2} parent=115 // pred_fallthru
          _
      $region116: #{_lambda_.2} parent=103 // pred_fallthru
        _
      %s2363 = smul.u32 2, %s37
      %p2364 = scmp.lt.s32.totalorder %s2363, 1
      %s2365 = scalar_select %p2364, %s2363, 1
      %s2366 = smul.addr %s2365, 8
      %s2367 = scalar_lea.vmem %s21, %s2366
      // Predicated region
      $region125: #{_lambda_.2} parent=103 // pred_check
        %p2368 = pneg %p532
      $region126: #{_lambda_.2} parent=103 // pred_check_branch
        %2370 = sbr.rel (%p2368) target = $region128
      $region127: #{_lambda_.2} parent=103 // pred_region
        %s2371 = smul.u32 2, %s37
      $region128: #{_lambda_.2} parent=103 // pred_fallthru
        _
      // Predicated region
      $region129: #{_lambda_.2} parent=103 // pred_check
        %p2372 = pneg %p532
      $region130: #{_lambda_.2} parent=103 // pred_check_branch
        %2374 = sbr.rel (%p2372) target = $region132
      $region131: #{_lambda_.2} parent=103 // pred_region
        %s2375 = smul.u32 2, %s37
        %p2376 = scmp.lt.s32.totalorder %s2375, 1
        %s2377 = scalar_select %p2376, %s2375, 1
        %s2378 = smul.addr %s2377, 8
        %s2379 = scalar_lea.vmem %s21, %s2378
      $region132: #{_lambda_.2} parent=103 // pred_fallthru
        _
    $region104: #{_lambda_.2} parent=5 // pred_fallthru
      _
    %p2380 = scmp.le.s32.totalorder 2, %s27
    // Predicated region
    $region133: #{_lambda_.2} parent=5 // pred_check
      %p2381 = pneg %p2380
    $region134: #{_lambda_.2} parent=5 // pred_check_branch
      %2383 = sbr.rel (%p2381) target = $region136
    $region135: #{_lambda_.2} parent=5 // pred_region
      %s2384 = ssub.s32 %s27, 2
    $region136: #{_lambda_.2} parent=5 // pred_fallthru
      _
  $region6: #{_lambda_.2} parent=0 // loop_footer
    %s31 = sadd.s32 1, %s27
  $region7: #{_lambda_.2} parent=0 // loop_footer_branch
    %26 = sbr.rel target = $region3
  $region8: #{_lambda_.2} parent=0 // loop_exit
    _

// kernel: _lambda_.3
$region0: #{_lambda_.3}
  #allocation0 [shape = 'u32[]', space=smem, size = 0x4, offset = 0x4, fixed_abs, tag = 'smem constant byte address 0x4 - core index']
  #allocation1 [shape = 'u32[144,128]{1,0:T(1,128)}', space=vmem, size = 0x12000, scoped, tag = 'internal scratch']
  #allocation2 [shape = 'f32[1,16]{1,0:T(1,128)}', space=vmem, size = 0x200, scoped, tag = 'scratch operand']
  #allocation3 [shape = 'f32[16,1]{1,0:T(8,128)}', space=vmem, size = 0x2000, scoped, tag = 'scratch operand']
  #allocation4 [shape = 'f32[16,32]{1,0:T(8,128)}', space=vmem, size = 0x2000, scoped, tag = 'scratch operand']
  #allocation5 [shape = 'f32[16,32]{1,0:T(8,128)}', space=vmem, size = 0x2000, scoped, tag = 'scratch operand']
  #allocation6 [shape = 'f32[16,32]{1,0:T(8,128)}', space=vmem, size = 0x2000, scoped, tag = 'scratch operand']
  #allocation7 [shape = 'f32[1,1]{1,0:T(1,128)S(1)}', space=vmem, size = 0x200, scoped, tag = 'scoped memory for _lambda_.3']
  %s0 = inlined_call_operand.vmem [shape: f32[16,128], index: 0, kind: input, shape index: {}]
  %s1 = inlined_call_operand.vmem [shape: f32[64,8], index: 1, kind: input, shape index: {}]
  %s2 = inlined_call_operand.vmem [shape: bf16[64,16], index: 2, kind: input, shape index: {}]
  %s3 = inlined_call_operand.vmem [shape: bf16[64,16], index: 3, kind: input, shape index: {}, may-alias: {3,4}]
  %s4 = inlined_call_operand.vmem [shape: bf16[64,16], index: 4, kind: input, shape index: {}, may-alias: {3,4}]
  %s5 = inlined_call_operand.vmem [shape: f32[128,32], index: 5, kind: input, shape index: {}]
  %s6 = inlined_call_operand.vmem [shape: f32[1,32], index: 6, kind: input, shape index: {}]
  %s7 = inlined_call_operand.vmem [shape: f32[128,32], index: 7, kind: input, shape index: {}]
  %s8 = inlined_call_operand.vmem [shape: f32[1,32], index: 8, kind: input, shape index: {}]
  %s9 = inlined_call_operand.vmem [shape: f32[8,32], index: 9, kind: input, shape index: {}]
  %s10 = inlined_call_operand.vmem [shape: f32[32,1], index: 10, kind: input, shape index: {}]
  %s11 = inlined_call_operand.vmem [shape: f32[1,32], index: 11, kind: input, shape index: {}]
  %s12 = inlined_call_operand.vmem [shape: f32[1,32], index: 12, kind: input, shape index: {}]
  %s13 = inlined_call_operand.vmem [shape: f32[128,32], index: 13, kind: input, shape index: {}]
  %s14 = inlined_call_operand.vmem [shape: f32[1,32], index: 14, kind: input, shape index: {}]
  %s15 = inlined_call_operand.vmem [shape: f32[1,32], index: 15, kind: input, shape index: {}]
  %s16 = inlined_call_operand.vmem [shape: f32[1,32], index: 16, kind: input, shape index: {}]
  %s17 = inlined_call_operand.vmem [shape: f32[1,32], index: 17, kind: input, shape index: {}]
  %s18 = inlined_call_operand.vmem [shape: f32[1,32], index: 18, kind: input, shape index: {}]
  %s19 = inlined_call_operand.vmem [shape: f32[32,32], index: 19, kind: input, shape index: {}]
  %s20 = inlined_call_operand.vmem [shape: f32[32,1], index: 20, kind: input, shape index: {}]
  %s21 = inlined_call_operand.<no memory space> [shape: f32[1,1], index: 21, kind: input, shape index: {}]
  %s22 = inlined_call_operand.vmem [shape: f32[16,1], index: 22, kind: output, shape index: {}]
  %s23 = sld [smem:[#allocation0]]
  $region141: #{_lambda_.3} parent=0
    _
  %s25 = ssub.s32 1, %s23
  %s26 = scalar_select 0, %s25, %s23
  %v27 = vstv %s21
  %28 = vst [vmem:[#allocation7] sm:$0x1] %v27
  loop: start=0, step=1, limit=6
  $region2: #{_lambda_.3} parent=0 // loop_pre_header
    _
  $region3: #{_lambda_.3} parent=0 // loop_header
    %s30 = sphi 0, %s34
    %p31 = scmp.ge.s32.totalorder %s30, 6
    %s37 = sphi 0, %s56
    %s38 = sphi 0, %s52
    %s39 = sphi 0, %s48
    %s40 = sphi 0, %s37
    %s41 = sphi 0, %s38
    %s42 = sphi 0, %s39
    %s43 = sphi 0, %s40
    %s44 = sphi 0, %s41
    %s45 = sphi 0, %s42
    %s57 = sphi 0, %s57
    %s59 = sphi 0, %s57
    %s60 = sphi 0, %s59
    %s74 = sphi 0, %s60
    %s80 = sphi 0, %s82
    %s83 = sphi 0, %s80
    %s84 = sphi 0, %s83
    %s100 = sphi 0, %s84
    %s106 = sphi 0, %s108
    %s109 = sphi 0, %s106
    %s110 = sphi 0, %s109
    %s126 = sphi 0, %s110
    %s132 = sphi 0, %s134
    %s135 = sphi 0, %s132
    %s136 = sphi 0, %s135
    %s152 = sphi 0, %s136
    %s160 = sphi 0, %s162
    %s163 = sphi 0, %s160
    %s164 = sphi 0, %s163
    %s180 = sphi 0, %s164
    %s184 = sphi 0, %s184
    %s186 = sphi 0, %s184
    %s187 = sphi 0, %s186
    %s201 = sphi 0, %s187
    %s205 = sphi 0, %s205
    %s207 = sphi 0, %s205
    %s208 = sphi 0, %s207
    %s222 = sphi 0, %s208
    %s226 = sphi 0, %s226
    %s228 = sphi 0, %s226
    %s229 = sphi 0, %s228
    %s243 = sphi 0, %s229
    %s247 = sphi 0, %s247
    %s249 = sphi 0, %s247
    %s250 = sphi 0, %s249
    %s264 = sphi 0, %s250
    %s268 = sphi 0, %s268
    %s270 = sphi 0, %s268
    %s271 = sphi 0, %s270
    %s285 = sphi 0, %s271
    %s289 = sphi 0, %s289
    %s291 = sphi 0, %s289
    %s292 = sphi 0, %s291
    %s306 = sphi 0, %s292
    %s310 = sphi 0, %s310
    %s312 = sphi 0, %s310
    %s313 = sphi 0, %s312
    %s327 = sphi 0, %s313
    %s331 = sphi 0, %s331
    %s333 = sphi 0, %s331
    %s334 = sphi 0, %s333
    %s348 = sphi 0, %s334
    %s352 = sphi 0, %s352
    %s354 = sphi 0, %s352
    %s355 = sphi 0, %s354
    %s369 = sphi 0, %s355
    %s373 = sphi 0, %s373
    %s375 = sphi 0, %s373
    %s376 = sphi 0, %s375
    %s390 = sphi 0, %s376
    %s394 = sphi 0, %s394
    %s396 = sphi 0, %s394
    %s397 = sphi 0, %s396
    %s411 = sphi 0, %s397
    %s415 = sphi 0, %s415
    %s417 = sphi 0, %s415
    %s418 = sphi 0, %s417
    %s432 = sphi 0, %s418
    %s436 = sphi 0, %s436
    %s438 = sphi 0, %s436
    %s439 = sphi 0, %s438
    %s453 = sphi 0, %s439
    %s457 = sphi 0, %s457
    %s459 = sphi 0, %s457
    %s460 = sphi 0, %s459
    %s474 = sphi 0, %s460
    %s478 = sphi 0, %s478
    %s480 = sphi 0, %s478
    %s481 = sphi 0, %s480
    %s495 = sphi 0, %s481
    %s499 = sphi 0, %s499
    %s501 = sphi 0, %s499
    %s502 = sphi 0, %s501
    %s516 = sphi 0, %s502
    %s520 = sphi 0, %s520
    %s522 = sphi 0, %s520
    %s523 = sphi 0, %s522
    %s537 = sphi 0, %s523
    %s543 = sphi 0, %s545
    %s546 = sphi 0, %s543
    %s547 = sphi 0, %s546
    %s563 = sphi 0, %s547
  $region4: #{_lambda_.3} parent=0 // loop_header_branch
    %33 = sbr.rel (%p31) target = $region8
  $region5: #{_lambda_.3} parent=0 // loop_body
    %s35 = ssub.s32 %s30, 1
    %s36 = ssub.s32 %s30, 2
    %s46 = sadd.s32 1, %s39
    %p47 = scmp.ge.s32.totalorder %s46, 2
    %s48 = scalar_select %p47, 0, %s46
    %s49 = sadd.s32 1, %s38
    %s50 = scalar_select %p47, %s49, %s38
    %p51 = scmp.ge.s32.totalorder %s50, 2
    %s52 = scalar_select %p51, 0, %s50
    %s53 = sadd.s32 1, %s37
    %s54 = scalar_select %p51, %s53, %s37
    %p55 = scmp.ge.s32.totalorder %s54, 1
    %s56 = scalar_select %p55, 0, %s54
    %s58 = sadd.s32 %s57, 1
    %p61 = scmp.eq.s32.totalorder %s30, 3
    %p62 = scmp.ne.s32.totalorder %s57, %s59
    %p63 = scmp.eq.s32.totalorder %s30, 0
    %p64 = por %p62, %p63
    %p65 = scmp.ne.s32.totalorder %s57, %s59
    %p66 = scmp.eq.s32.totalorder %s35, 3
    %p67 = por %p65, %p66
    %p68 = scmp.ne.s32.totalorder %s59, %s60
    %p69 = scmp.eq.s32.totalorder %s35, 0
    %p70 = por %p68, %p69
    %p71 = scmp.ne.s32.totalorder %s59, %s60
    %p72 = scmp.eq.s32.totalorder %s36, 3
    %p73 = por %p71, %p72
    %p75 = scmp.ne.s32.totalorder %s60, %s74
    %p76 = scmp.eq.s32.totalorder %s36, 0
    %p77 = por %p75, %p76
    %s78 = ssub.s32 %s39, %s48
    %p79 = scmp.eq.s32.totalorder %s78, 0
    %s81 = sadd.s32 %s80, 1
    %s82 = scalar_select %p79, %s80, %s81
    %p85 = pneg %p79
    %p86 = scmp.eq.s32.totalorder %s30, 3
    %p87 = por %p85, %p86
    %p88 = scmp.ne.s32.totalorder %s80, %s83
    %p89 = scmp.eq.s32.totalorder %s30, 0
    %p90 = por %p88, %p89
    %p91 = scmp.ne.s32.totalorder %s80, %s83
    %p92 = scmp.eq.s32.totalorder %s35, 3
    %p93 = por %p91, %p92
    %p94 = scmp.ne.s32.totalorder %s83, %s84
    %p95 = scmp.eq.s32.totalorder %s35, 0
    %p96 = por %p94, %p95
    %p97 = scmp.ne.s32.totalorder %s83, %s84
    %p98 = scmp.eq.s32.totalorder %s36, 3
    %p99 = por %p97, %p98
    %p101 = scmp.ne.s32.totalorder %s84, %s100
    %p102 = scmp.eq.s32.totalorder %s36, 0
    %p103 = por %p101, %p102
    %s104 = ssub.s32 %s39, %s48
    %p105 = scmp.eq.s32.totalorder %s104, 0
    %s107 = sadd.s32 %s106, 1
    %s108 = scalar_select %p105, %s106, %s107
    %p111 = pneg %p105
    %p112 = scmp.eq.s32.totalorder %s30, 3
    %p113 = por %p111, %p112
    %p114 = scmp.ne.s32.totalorder %s106, %s109
    %p115 = scmp.eq.s32.totalorder %s30, 0
    %p116 = por %p114, %p115
    %p117 = scmp.ne.s32.totalorder %s106, %s109
    %p118 = scmp.eq.s32.totalorder %s35, 3
    %p119 = por %p117, %p118
    %p120 = scmp.ne.s32.totalorder %s109, %s110
    %p121 = scmp.eq.s32.totalorder %s35, 0
    %p122 = por %p120, %p121
    %p123 = scmp.ne.s32.totalorder %s109, %s110
    %p124 = scmp.eq.s32.totalorder %s36, 3
    %p125 = por %p123, %p124
    %p127 = scmp.ne.s32.totalorder %s110, %s126
    %p128 = scmp.eq.s32.totalorder %s36, 0
    %p129 = por %p127, %p128
    %s130 = ssub.s32 %s39, %s48
    %p131 = scmp.eq.s32.totalorder %s130, 0
    %s133 = sadd.s32 %s132, 1
    %s134 = scalar_select %p131, %s132, %s133
    %p137 = pneg %p131
    %p138 = scmp.eq.s32.totalorder %s30, 3
    %p139 = por %p137, %p138
    %p140 = scmp.ne.s32.totalorder %s132, %s135
    %p141 = scmp.eq.s32.totalorder %s30, 0
    %p142 = por %p140, %p141
    %p143 = scmp.ne.s32.totalorder %s132, %s135
    %p144 = scmp.eq.s32.totalorder %s35, 3
    %p145 = por %p143, %p144
    %p146 = scmp.ne.s32.totalorder %s135, %s136
    %p147 = scmp.eq.s32.totalorder %s35, 0
    %p148 = por %p146, %p147
    %p149 = scmp.ne.s32.totalorder %s135, %s136
    %p150 = scmp.eq.s32.totalorder %s36, 3
    %p151 = por %p149, %p150
    %p153 = scmp.ne.s32.totalorder %s136, %s152
    %p154 = scmp.eq.s32.totalorder %s36, 0
    %p155 = por %p153, %p154
    %s156 = ssub.s32 %s39, %s48
    %s157 = ssub.s32 %s37, %s56
    %s158 = sor.u32 %s156, %s157
    %p159 = scmp.eq.s32.totalorder %s158, 0
    %s161 = sadd.s32 %s160, 1
    %s162 = scalar_select %p159, %s160, %s161
    %p165 = pneg %p159
    %p166 = scmp.eq.s32.totalorder %s30, 3
    %p167 = por %p165, %p166
    %p168 = scmp.ne.s32.totalorder %s160, %s163
    %p169 = scmp.eq.s32.totalorder %s30, 0
    %p170 = por %p168, %p169
    %p171 = scmp.ne.s32.totalorder %s160, %s163
    %p172 = scmp.eq.s32.totalorder %s35, 3
    %p173 = por %p171, %p172
    %p174 = scmp.ne.s32.totalorder %s163, %s164
    %p175 = scmp.eq.s32.totalorder %s35, 0
    %p176 = por %p174, %p175
    %p177 = scmp.ne.s32.totalorder %s163, %s164
    %p178 = scmp.eq.s32.totalorder %s36, 3
    %p179 = por %p177, %p178
    %p181 = scmp.ne.s32.totalorder %s164, %s180
    %p182 = scmp.eq.s32.totalorder %s36, 0
    %p183 = por %p181, %p182
    %s185 = sadd.s32 %s184, 1
    %p188 = scmp.eq.s32.totalorder %s30, 3
    %p189 = scmp.ne.s32.totalorder %s184, %s186
    %p190 = scmp.eq.s32.totalorder %s30, 0
    %p191 = por %p189, %p190
    %p192 = scmp.ne.s32.totalorder %s184, %s186
    %p193 = scmp.eq.s32.totalorder %s35, 3
    %p194 = por %p192, %p193
    %p195 = scmp.ne.s32.totalorder %s186, %s187
    %p196 = scmp.eq.s32.totalorder %s35, 0
    %p197 = por %p195, %p196
    %p198 = scmp.ne.s32.totalorder %s186, %s187
    %p199 = scmp.eq.s32.totalorder %s36, 3
    %p200 = por %p198, %p199
    %p202 = scmp.ne.s32.totalorder %s187, %s201
    %p203 = scmp.eq.s32.totalorder %s36, 0
    %p204 = por %p202, %p203
    %s206 = sadd.s32 %s205, 1
    %p209 = scmp.eq.s32.totalorder %s30, 3
    %p210 = scmp.ne.s32.totalorder %s205, %s207
    %p211 = scmp.eq.s32.totalorder %s30, 0
    %p212 = por %p210, %p211
    %p213 = scmp.ne.s32.totalorder %s205, %s207
    %p214 = scmp.eq.s32.totalorder %s35, 3
    %p215 = por %p213, %p214
    %p216 = scmp.ne.s32.totalorder %s207, %s208
    %p217 = scmp.eq.s32.totalorder %s35, 0
    %p218 = por %p216, %p217
    %p219 = scmp.ne.s32.totalorder %s207, %s208
    %p220 = scmp.eq.s32.totalorder %s36, 3
    %p221 = por %p219, %p220
    %p223 = scmp.ne.s32.totalorder %s208, %s222
    %p224 = scmp.eq.s32.totalorder %s36, 0
    %p225 = por %p223, %p224
    %s227 = sadd.s32 %s226, 1
    %p230 = scmp.eq.s32.totalorder %s30, 3
    %p231 = scmp.ne.s32.totalorder %s226, %s228
    %p232 = scmp.eq.s32.totalorder %s30, 0
    %p233 = por %p231, %p232
    %p234 = scmp.ne.s32.totalorder %s226, %s228
    %p235 = scmp.eq.s32.totalorder %s35, 3
    %p236 = por %p234, %p235
    %p237 = scmp.ne.s32.totalorder %s228, %s229
    %p238 = scmp.eq.s32.totalorder %s35, 0
    %p239 = por %p237, %p238
    %p240 = scmp.ne.s32.totalorder %s228, %s229
    %p241 = scmp.eq.s32.totalorder %s36, 3
    %p242 = por %p240, %p241
    %p244 = scmp.ne.s32.totalorder %s229, %s243
    %p245 = scmp.eq.s32.totalorder %s36, 0
    %p246 = por %p244, %p245
    %s248 = sadd.s32 %s247, 1
    %p251 = scmp.eq.s32.totalorder %s30, 3
    %p252 = scmp.ne.s32.totalorder %s247, %s249
    %p253 = scmp.eq.s32.totalorder %s30, 0
    %p254 = por %p252, %p253
    %p255 = scmp.ne.s32.totalorder %s247, %s249
    %p256 = scmp.eq.s32.totalorder %s35, 3
    %p257 = por %p255, %p256
    %p258 = scmp.ne.s32.totalorder %s249, %s250
    %p259 = scmp.eq.s32.totalorder %s35, 0
    %p260 = por %p258, %p259
    %p261 = scmp.ne.s32.totalorder %s249, %s250
    %p262 = scmp.eq.s32.totalorder %s36, 3
    %p263 = por %p261, %p262
    %p265 = scmp.ne.s32.totalorder %s250, %s264
    %p266 = scmp.eq.s32.totalorder %s36, 0
    %p267 = por %p265, %p266
    %s269 = sadd.s32 %s268, 1
    %p272 = scmp.eq.s32.totalorder %s30, 3
    %p273 = scmp.ne.s32.totalorder %s268, %s270
    %p274 = scmp.eq.s32.totalorder %s30, 0
    %p275 = por %p273, %p274
    %p276 = scmp.ne.s32.totalorder %s268, %s270
    %p277 = scmp.eq.s32.totalorder %s35, 3
    %p278 = por %p276, %p277
    %p279 = scmp.ne.s32.totalorder %s270, %s271
    %p280 = scmp.eq.s32.totalorder %s35, 0
    %p281 = por %p279, %p280
    %p282 = scmp.ne.s32.totalorder %s270, %s271
    %p283 = scmp.eq.s32.totalorder %s36, 3
    %p284 = por %p282, %p283
    %p286 = scmp.ne.s32.totalorder %s271, %s285
    %p287 = scmp.eq.s32.totalorder %s36, 0
    %p288 = por %p286, %p287
    %s290 = sadd.s32 %s289, 1
    %p293 = scmp.eq.s32.totalorder %s30, 3
    %p294 = scmp.ne.s32.totalorder %s289, %s291
    %p295 = scmp.eq.s32.totalorder %s30, 0
    %p296 = por %p294, %p295
    %p297 = scmp.ne.s32.totalorder %s289, %s291
    %p298 = scmp.eq.s32.totalorder %s35, 3
    %p299 = por %p297, %p298
    %p300 = scmp.ne.s32.totalorder %s291, %s292
    %p301 = scmp.eq.s32.totalorder %s35, 0
    %p302 = por %p300, %p301
    %p303 = scmp.ne.s32.totalorder %s291, %s292
    %p304 = scmp.eq.s32.totalorder %s36, 3
    %p305 = por %p303, %p304
    %p307 = scmp.ne.s32.totalorder %s292, %s306
    %p308 = scmp.eq.s32.totalorder %s36, 0
    %p309 = por %p307, %p308
    %s311 = sadd.s32 %s310, 1
    %p314 = scmp.eq.s32.totalorder %s30, 3
    %p315 = scmp.ne.s32.totalorder %s310, %s312
    %p316 = scmp.eq.s32.totalorder %s30, 0
    %p317 = por %p315, %p316
    %p318 = scmp.ne.s32.totalorder %s310, %s312
    %p319 = scmp.eq.s32.totalorder %s35, 3
    %p320 = por %p318, %p319
    %p321 = scmp.ne.s32.totalorder %s312, %s313
    %p322 = scmp.eq.s32.totalorder %s35, 0
    %p323 = por %p321, %p322
    %p324 = scmp.ne.s32.totalorder %s312, %s313
    %p325 = scmp.eq.s32.totalorder %s36, 3
    %p326 = por %p324, %p325
    %p328 = scmp.ne.s32.totalorder %s313, %s327
    %p329 = scmp.eq.s32.totalorder %s36, 0
    %p330 = por %p328, %p329
    %s332 = sadd.s32 %s331, 1
    %p335 = scmp.eq.s32.totalorder %s30, 3
    %p336 = scmp.ne.s32.totalorder %s331, %s333
    %p337 = scmp.eq.s32.totalorder %s30, 0
    %p338 = por %p336, %p337
    %p339 = scmp.ne.s32.totalorder %s331, %s333
    %p340 = scmp.eq.s32.totalorder %s35, 3
    %p341 = por %p339, %p340
    %p342 = scmp.ne.s32.totalorder %s333, %s334
    %p343 = scmp.eq.s32.totalorder %s35, 0
    %p344 = por %p342, %p343
    %p345 = scmp.ne.s32.totalorder %s333, %s334
    %p346 = scmp.eq.s32.totalorder %s36, 3
    %p347 = por %p345, %p346
    %p349 = scmp.ne.s32.totalorder %s334, %s348
    %p350 = scmp.eq.s32.totalorder %s36, 0
    %p351 = por %p349, %p350
    %s353 = sadd.s32 %s352, 1
    %p356 = scmp.eq.s32.totalorder %s30, 3
    %p357 = scmp.ne.s32.totalorder %s352, %s354
    %p358 = scmp.eq.s32.totalorder %s30, 0
    %p359 = por %p357, %p358
    %p360 = scmp.ne.s32.totalorder %s352, %s354
    %p361 = scmp.eq.s32.totalorder %s35, 3
    %p362 = por %p360, %p361
    %p363 = scmp.ne.s32.totalorder %s354, %s355
    %p364 = scmp.eq.s32.totalorder %s35, 0
    %p365 = por %p363, %p364
    %p366 = scmp.ne.s32.totalorder %s354, %s355
    %p367 = scmp.eq.s32.totalorder %s36, 3
    %p368 = por %p366, %p367
    %p370 = scmp.ne.s32.totalorder %s355, %s369
    %p371 = scmp.eq.s32.totalorder %s36, 0
    %p372 = por %p370, %p371
    %s374 = sadd.s32 %s373, 1
    %p377 = scmp.eq.s32.totalorder %s30, 3
    %p378 = scmp.ne.s32.totalorder %s373, %s375
    %p379 = scmp.eq.s32.totalorder %s30, 0
    %p380 = por %p378, %p379
    %p381 = scmp.ne.s32.totalorder %s373, %s375
    %p382 = scmp.eq.s32.totalorder %s35, 3
    %p383 = por %p381, %p382
    %p384 = scmp.ne.s32.totalorder %s375, %s376
    %p385 = scmp.eq.s32.totalorder %s35, 0
    %p386 = por %p384, %p385
    %p387 = scmp.ne.s32.totalorder %s375, %s376
    %p388 = scmp.eq.s32.totalorder %s36, 3
    %p389 = por %p387, %p388
    %p391 = scmp.ne.s32.totalorder %s376, %s390
    %p392 = scmp.eq.s32.totalorder %s36, 0
    %p393 = por %p391, %p392
    %s395 = sadd.s32 %s394, 1
    %p398 = scmp.eq.s32.totalorder %s30, 3
    %p399 = scmp.ne.s32.totalorder %s394, %s396
    %p400 = scmp.eq.s32.totalorder %s30, 0
    %p401 = por %p399, %p400
    %p402 = scmp.ne.s32.totalorder %s394, %s396
    %p403 = scmp.eq.s32.totalorder %s35, 3
    %p404 = por %p402, %p403
    %p405 = scmp.ne.s32.totalorder %s396, %s397
    %p406 = scmp.eq.s32.totalorder %s35, 0
    %p407 = por %p405, %p406
    %p408 = scmp.ne.s32.totalorder %s396, %s397
    %p409 = scmp.eq.s32.totalorder %s36, 3
    %p410 = por %p408, %p409
    %p412 = scmp.ne.s32.totalorder %s397, %s411
    %p413 = scmp.eq.s32.totalorder %s36, 0
    %p414 = por %p412, %p413
    %s416 = sadd.s32 %s415, 1
    %p419 = scmp.eq.s32.totalorder %s30, 3
    %p420 = scmp.ne.s32.totalorder %s415, %s417
    %p421 = scmp.eq.s32.totalorder %s30, 0
    %p422 = por %p420, %p421
    %p423 = scmp.ne.s32.totalorder %s415, %s417
    %p424 = scmp.eq.s32.totalorder %s35, 3
    %p425 = por %p423, %p424
    %p426 = scmp.ne.s32.totalorder %s417, %s418
    %p427 = scmp.eq.s32.totalorder %s35, 0
    %p428 = por %p426, %p427
    %p429 = scmp.ne.s32.totalorder %s417, %s418
    %p430 = scmp.eq.s32.totalorder %s36, 3
    %p431 = por %p429, %p430
    %p433 = scmp.ne.s32.totalorder %s418, %s432
    %p434 = scmp.eq.s32.totalorder %s36, 0
    %p435 = por %p433, %p434
    %s437 = sadd.s32 %s436, 1
    %p440 = scmp.eq.s32.totalorder %s30, 3
    %p441 = scmp.ne.s32.totalorder %s436, %s438
    %p442 = scmp.eq.s32.totalorder %s30, 0
    %p443 = por %p441, %p442
    %p444 = scmp.ne.s32.totalorder %s436, %s438
    %p445 = scmp.eq.s32.totalorder %s35, 3
    %p446 = por %p444, %p445
    %p447 = scmp.ne.s32.totalorder %s438, %s439
    %p448 = scmp.eq.s32.totalorder %s35, 0
    %p449 = por %p447, %p448
    %p450 = scmp.ne.s32.totalorder %s438, %s439
    %p451 = scmp.eq.s32.totalorder %s36, 3
    %p452 = por %p450, %p451
    %p454 = scmp.ne.s32.totalorder %s439, %s453
    %p455 = scmp.eq.s32.totalorder %s36, 0
    %p456 = por %p454, %p455
    %s458 = sadd.s32 %s457, 1
    %p461 = scmp.eq.s32.totalorder %s30, 3
    %p462 = scmp.ne.s32.totalorder %s457, %s459
    %p463 = scmp.eq.s32.totalorder %s30, 0
    %p464 = por %p462, %p463
    %p465 = scmp.ne.s32.totalorder %s457, %s459
    %p466 = scmp.eq.s32.totalorder %s35, 3
    %p467 = por %p465, %p466
    %p468 = scmp.ne.s32.totalorder %s459, %s460
    %p469 = scmp.eq.s32.totalorder %s35, 0
    %p470 = por %p468, %p469
    %p471 = scmp.ne.s32.totalorder %s459, %s460
    %p472 = scmp.eq.s32.totalorder %s36, 3
    %p473 = por %p471, %p472
    %p475 = scmp.ne.s32.totalorder %s460, %s474
    %p476 = scmp.eq.s32.totalorder %s36, 0
    %p477 = por %p475, %p476
    %s479 = sadd.s32 %s478, 1
    %p482 = scmp.eq.s32.totalorder %s30, 3
    %p483 = scmp.ne.s32.totalorder %s478, %s480
    %p484 = scmp.eq.s32.totalorder %s30, 0
    %p485 = por %p483, %p484
    %p486 = scmp.ne.s32.totalorder %s478, %s480
    %p487 = scmp.eq.s32.totalorder %s35, 3
    %p488 = por %p486, %p487
    %p489 = scmp.ne.s32.totalorder %s480, %s481
    %p490 = scmp.eq.s32.totalorder %s35, 0
    %p491 = por %p489, %p490
    %p492 = scmp.ne.s32.totalorder %s480, %s481
    %p493 = scmp.eq.s32.totalorder %s36, 3
    %p494 = por %p492, %p493
    %p496 = scmp.ne.s32.totalorder %s481, %s495
    %p497 = scmp.eq.s32.totalorder %s36, 0
    %p498 = por %p496, %p497
    %s500 = sadd.s32 %s499, 1
    %p503 = scmp.eq.s32.totalorder %s30, 3
    %p504 = scmp.ne.s32.totalorder %s499, %s501
    %p505 = scmp.eq.s32.totalorder %s30, 0
    %p506 = por %p504, %p505
    %p507 = scmp.ne.s32.totalorder %s499, %s501
    %p508 = scmp.eq.s32.totalorder %s35, 3
    %p509 = por %p507, %p508
    %p510 = scmp.ne.s32.totalorder %s501, %s502
    %p511 = scmp.eq.s32.totalorder %s35, 0
    %p512 = por %p510, %p511
    %p513 = scmp.ne.s32.totalorder %s501, %s502
    %p514 = scmp.eq.s32.totalorder %s36, 3
    %p515 = por %p513, %p514
    %p517 = scmp.ne.s32.totalorder %s502, %s516
    %p518 = scmp.eq.s32.totalorder %s36, 0
    %p519 = por %p517, %p518
    %s521 = sadd.s32 %s520, 1
    %p524 = scmp.eq.s32.totalorder %s30, 3
    %p525 = scmp.ne.s32.totalorder %s520, %s522
    %p526 = scmp.eq.s32.totalorder %s30, 0
    %p527 = por %p525, %p526
    %p528 = scmp.ne.s32.totalorder %s520, %s522
    %p529 = scmp.eq.s32.totalorder %s35, 3
    %p530 = por %p528, %p529
    %p531 = scmp.ne.s32.totalorder %s522, %s523
    %p532 = scmp.eq.s32.totalorder %s35, 0
    %p533 = por %p531, %p532
    %p534 = scmp.ne.s32.totalorder %s522, %s523
    %p535 = scmp.eq.s32.totalorder %s36, 3
    %p536 = por %p534, %p535
    %p538 = scmp.ne.s32.totalorder %s523, %s537
    %p539 = scmp.eq.s32.totalorder %s36, 0
    %p540 = por %p538, %p539
    %s541 = ssub.s32 %s37, %s56
    %p542 = scmp.eq.s32.totalorder %s541, 0
    %s544 = sadd.s32 %s543, 1
    %s545 = scalar_select %p542, %s543, %s544
    %p548 = pneg %p542
    %p549 = scmp.eq.s32.totalorder %s30, 3
    %p550 = por %p548, %p549
    %p551 = scmp.ne.s32.totalorder %s543, %s546
    %p552 = scmp.eq.s32.totalorder %s30, 0
    %p553 = por %p551, %p552
    %p554 = scmp.ne.s32.totalorder %s543, %s546
    %p555 = scmp.eq.s32.totalorder %s35, 3
    %p556 = por %p554, %p555
    %p557 = scmp.ne.s32.totalorder %s546, %s547
    %p558 = scmp.eq.s32.totalorder %s35, 0
    %p559 = por %p557, %p558
    %p560 = scmp.ne.s32.totalorder %s546, %s547
    %p561 = scmp.eq.s32.totalorder %s36, 3
    %p562 = por %p560, %p561
    %p564 = scmp.ne.s32.totalorder %s547, %s563
    %p565 = scmp.eq.s32.totalorder %s36, 0
    %p566 = por %p564, %p565
    %p567 = scmp.le.s32.totalorder 1, %s30
    %p568 = scmp.lt.s32.totalorder %s30, 5
    %p569 = pnand %p567, %p568
    %p570 = pneg %p569
    // Predicated region
    $region9: #{_lambda_.3} parent=5 // pred_check
      _
    $region10: #{_lambda_.3} parent=5 // pred_check_branch
      %572 = sbr.rel (%p569) target = $region12
    $region11: #{_lambda_.3} parent=5 // pred_region
      %s573 = ssub.s32 %s30, 1
      // Predicated region
      $region13: #{_lambda_.3} parent=11 // pred_check
        %p574 = pneg %p70
      $region14: #{_lambda_.3} parent=11 // pred_check_branch
        %576 = sbr.rel (%p574) target = $region16
      $region15: #{_lambda_.3} parent=11 // pred_region
        _
      $region16: #{_lambda_.3} parent=11 // pred_fallthru
        _
      // Predicated region
      $region17: #{_lambda_.3} parent=11 // pred_check
        %p577 = pneg %p197
      $region18: #{_lambda_.3} parent=11 // pred_check_branch
        %579 = sbr.rel (%p577) target = $region20
      $region19: #{_lambda_.3} parent=11 // pred_region
        _
      $region20: #{_lambda_.3} parent=11 // pred_fallthru
        _
      // Predicated region
      $region21: #{_lambda_.3} parent=11 // pred_check
        %p580 = pneg %p218
      $region22: #{_lambda_.3} parent=11 // pred_check_branch
        %582 = sbr.rel (%p580) target = $region24
      $region23: #{_lambda_.3} parent=11 // pred_region
        _
      $region24: #{_lambda_.3} parent=11 // pred_fallthru
        _
      // Predicated region
      $region25: #{_lambda_.3} parent=11 // pred_check
        %p583 = pneg %p239
      $region26: #{_lambda_.3} parent=11 // pred_check_branch
        %585 = sbr.rel (%p583) target = $region28
      $region27: #{_lambda_.3} parent=11 // pred_region
        _
      $region28: #{_lambda_.3} parent=11 // pred_fallthru
        _
      // Predicated region
      $region29: #{_lambda_.3} parent=11 // pred_check
        %p586 = pneg %p260
      $region30: #{_lambda_.3} parent=11 // pred_check_branch
        %588 = sbr.rel (%p586) target = $region32
      $region31: #{_lambda_.3} parent=11 // pred_region
        _
      $region32: #{_lambda_.3} parent=11 // pred_fallthru
        _
      // Predicated region
      $region33: #{_lambda_.3} parent=11 // pred_check
        %p589 = pneg %p281
      $region34: #{_lambda_.3} parent=11 // pred_check_branch
        %591 = sbr.rel (%p589) target = $region36
      $region35: #{_lambda_.3} parent=11 // pred_region
        _
      $region36: #{_lambda_.3} parent=11 // pred_fallthru
        _
      // Predicated region
      $region37: #{_lambda_.3} parent=11 // pred_check
        %p592 = pneg %p302
      $region38: #{_lambda_.3} parent=11 // pred_check_branch
        %594 = sbr.rel (%p592) target = $region40
      $region39: #{_lambda_.3} parent=11 // pred_region
        _
      $region40: #{_lambda_.3} parent=11 // pred_fallthru
        _
      // Predicated region
      $region41: #{_lambda_.3} parent=11 // pred_check
        %p595 = pneg %p323
      $region42: #{_lambda_.3} parent=11 // pred_check_branch
        %597 = sbr.rel (%p595) target = $region44
      $region43: #{_lambda_.3} parent=11 // pred_region
        _
      $region44: #{_lambda_.3} parent=11 // pred_fallthru
        _
      // Predicated region
      $region45: #{_lambda_.3} parent=11 // pred_check
        %p598 = pneg %p344
      $region46: #{_lambda_.3} parent=11 // pred_check_branch
        %600 = sbr.rel (%p598) target = $region48
      $region47: #{_lambda_.3} parent=11 // pred_region
        _
      $region48: #{_lambda_.3} parent=11 // pred_fallthru
        _
      // Predicated region
      $region49: #{_lambda_.3} parent=11 // pred_check
        %p601 = pneg %p365
      $region50: #{_lambda_.3} parent=11 // pred_check_branch
        %603 = sbr.rel (%p601) target = $region52
      $region51: #{_lambda_.3} parent=11 // pred_region
        _
      $region52: #{_lambda_.3} parent=11 // pred_fallthru
        _
      // Predicated region
      $region53: #{_lambda_.3} parent=11 // pred_check
        %p604 = pneg %p386
      $region54: #{_lambda_.3} parent=11 // pred_check_branch
        %606 = sbr.rel (%p604) target = $region56
      $region55: #{_lambda_.3} parent=11 // pred_region
        _
      $region56: #{_lambda_.3} parent=11 // pred_fallthru
        _
      // Predicated region
      $region57: #{_lambda_.3} parent=11 // pred_check
        %p607 = pneg %p407
      $region58: #{_lambda_.3} parent=11 // pred_check_branch
        %609 = sbr.rel (%p607) target = $region60
      $region59: #{_lambda_.3} parent=11 // pred_region
        _
      $region60: #{_lambda_.3} parent=11 // pred_fallthru
        _
      // Predicated region
      $region61: #{_lambda_.3} parent=11 // pred_check
        %p610 = pneg %p428
      $region62: #{_lambda_.3} parent=11 // pred_check_branch
        %612 = sbr.rel (%p610) target = $region64
      $region63: #{_lambda_.3} parent=11 // pred_region
        _
      $region64: #{_lambda_.3} parent=11 // pred_fallthru
        _
      // Predicated region
      $region65: #{_lambda_.3} parent=11 // pred_check
        %p613 = pneg %p449
      $region66: #{_lambda_.3} parent=11 // pred_check_branch
        %615 = sbr.rel (%p613) target = $region68
      $region67: #{_lambda_.3} parent=11 // pred_region
        _
      $region68: #{_lambda_.3} parent=11 // pred_fallthru
        _
      // Predicated region
      $region69: #{_lambda_.3} parent=11 // pred_check
        %p616 = pneg %p470
      $region70: #{_lambda_.3} parent=11 // pred_check_branch
        %618 = sbr.rel (%p616) target = $region72
      $region71: #{_lambda_.3} parent=11 // pred_region
        _
      $region72: #{_lambda_.3} parent=11 // pred_fallthru
        _
      // Predicated region
      $region73: #{_lambda_.3} parent=11 // pred_check
        %p619 = pneg %p491
      $region74: #{_lambda_.3} parent=11 // pred_check_branch
        %621 = sbr.rel (%p619) target = $region76
      $region75: #{_lambda_.3} parent=11 // pred_region
        _
      $region76: #{_lambda_.3} parent=11 // pred_fallthru
        _
      // Predicated region
      $region77: #{_lambda_.3} parent=11 // pred_check
        %p622 = pneg %p512
      $region78: #{_lambda_.3} parent=11 // pred_check_branch
        %624 = sbr.rel (%p622) target = $region80
      $region79: #{_lambda_.3} parent=11 // pred_region
        _
      $region80: #{_lambda_.3} parent=11 // pred_fallthru
        _
      // Predicated region
      $region81: #{_lambda_.3} parent=11 // pred_check
        %p625 = pneg %p533
      $region82: #{_lambda_.3} parent=11 // pred_check_branch
        %627 = sbr.rel (%p625) target = $region84
      $region83: #{_lambda_.3} parent=11 // pred_region
        _
      $region84: #{_lambda_.3} parent=11 // pred_fallthru
        _
    $region12: #{_lambda_.3} parent=5 // pred_fallthru
      _
    %p628 = scmp.lt.s32.totalorder %s30, 4
    // Predicated region
    $region85: #{_lambda_.3} parent=5 // pred_check
      %p629 = pneg %p628
    $region86: #{_lambda_.3} parent=5 // pred_check_branch
      %631 = sbr.rel (%p629) target = $region88
    $region87: #{_lambda_.3} parent=5 // pred_region
      // Predicated region
      $region89: #{_lambda_.3} parent=87 // pred_check
        %p632 = pneg %p90
      $region90: #{_lambda_.3} parent=87 // pred_check_branch
        %634 = sbr.rel (%p632) target = $region92
      $region91: #{_lambda_.3} parent=87 // pred_region
        %s635 = smul.u32 4, %s39
        %p636 = scmp.lt.s32.totalorder %s635, 7
        %s637 = scalar_select %p636, %s635, 7
        %s638 = smul.addr %s637, 8
        %s639 = scalar_lea.vmem %s1, %s638
        %s640 = smul.u32 4, %s39
      $region92: #{_lambda_.3} parent=87 // pred_fallthru
        _
      // Predicated region
      $region93: #{_lambda_.3} parent=87 // pred_check
        %p641 = pneg %p116
      $region94: #{_lambda_.3} parent=87 // pred_check_branch
        %643 = sbr.rel (%p641) target = $region96
      $region95: #{_lambda_.3} parent=87 // pred_region
        %s644 = smul.u32 4, %s39
        %p645 = scmp.lt.s32.totalorder %s644, 7
        %s646 = scalar_select %p645, %s644, 7
        %s647 = smul.addr %s646, 4
        %s648 = scalar_lea.vmem %s2, %s647
        %s649 = smul.u32 4, %s39
      $region96: #{_lambda_.3} parent=87 // pred_fallthru
        _
      // Predicated region
      $region97: #{_lambda_.3} parent=87 // pred_check
        %p650 = pneg %p142
      $region98: #{_lambda_.3} parent=87 // pred_check_branch
        %652 = sbr.rel (%p650) target = $region100
      $region99: #{_lambda_.3} parent=87 // pred_region
        %s653 = smul.u32 4, %s39
        %p654 = scmp.lt.s32.totalorder %s653, 7
        %s655 = scalar_select %p654, %s653, 7
        %s656 = smul.addr %s655, 4
        %s657 = scalar_lea.vmem %s3, %s656
        %s658 = smul.u32 4, %s39
      $region100: #{_lambda_.3} parent=87 // pred_fallthru
        _
      // Predicated region
      $region101: #{_lambda_.3} parent=87 // pred_check
        %p659 = pneg %p170
      $region102: #{_lambda_.3} parent=87 // pred_check_branch
        %661 = sbr.rel (%p659) target = $region104
      $region103: #{_lambda_.3} parent=87 // pred_region
        %s662 = smul.u32 4, %s39
        %p663 = scmp.lt.s32.totalorder %s662, 7
        %s664 = scalar_select %p663, %s662, 7
        %p665 = scmp.lt.s32.totalorder %s37, 0
        %s666 = scalar_select %p665, %s37, 0
        %s667 = sadd.s32 %s666, %s664
        %s668 = smul.addr %s667, 4
        %s669 = scalar_lea.vmem %s4, %s668
        %s670 = smul.u32 4, %s39
      $region104: #{_lambda_.3} parent=87 // pred_fallthru
        _
    $region88: #{_lambda_.3} parent=5 // pred_fallthru
      _
    %p671 = scmp.le.s32.totalorder 1, %s30
    %p672 = scmp.lt.s32.totalorder %s30, 5
    %p673 = pnand %p671, %p672
    %p674 = pneg %p673
    // Predicated region
    $region105: #{_lambda_.3} parent=5 // pred_check
      _
    $region106: #{_lambda_.3} parent=5 // pred_check_branch
      %676 = sbr.rel (%p673) target = $region108
    $region107: #{_lambda_.3} parent=5 // pred_region
      %s677 = ssub.s32 %s30, 1
      %p678 = pneg %p70
      %p679 = pneg %p67
      %s680 = smul.u32 4, %s42
      %p681 = scmp.lt.s32.totalorder %s680, 7
      %s682 = scalar_select %p681, %s680, 7
      %s683 = smul.addr %s682, 8
      %s684 = scalar_lea.vmem %s1, %s683
      %p685 = pneg %p96
      %p686 = pneg %p93
      %s687 = smul.u32 4, %s42
      %p688 = scmp.lt.s32.totalorder %s687, 7
      %s689 = scalar_select %p688, %s687, 7
      %s690 = smul.addr %s689, 4
      %s691 = scalar_lea.vmem %s2, %s690
      %p692 = pneg %p122
      %p693 = pneg %p119
      %s694 = smul.u32 4, %s42
      %p695 = scmp.lt.s32.totalorder %s694, 7
      %s696 = scalar_select %p695, %s694, 7
      %s697 = smul.addr %s696, 4
      %s698 = scalar_lea.vmem %s3, %s697
      %p699 = pneg %p148
      %p700 = pneg %p145
      %s701 = smul.u32 4, %s42
      %p702 = scmp.lt.s32.totalorder %s701, 7
      %s703 = scalar_select %p702, %s701, 7
      %p704 = scmp.lt.s32.totalorder %s40, 0
      %s705 = scalar_select %p704, %s40, 0
      %s706 = sadd.s32 %s705, %s703
      %s707 = smul.addr %s706, 4
      %s708 = scalar_lea.vmem %s4, %s707
      %p709 = pneg %p176
      %p710 = pneg %p173
      %p711 = pneg %p197
      %p712 = pneg %p194
      %p713 = pneg %p218
      %p714 = pneg %p215
      %p715 = pneg %p239
      %p716 = pneg %p236
      %p717 = pneg %p260
      %p718 = pneg %p257
      %p719 = pneg %p281
      %p720 = pneg %p278
      %p721 = pneg %p302
      %p722 = pneg %p299
      %p723 = pneg %p323
      %p724 = pneg %p320
      %p725 = pneg %p344
      %p726 = pneg %p341
      %p727 = pneg %p365
      %p728 = pneg %p362
      %p729 = pneg %p386
      %p730 = pneg %p383
      %p731 = pneg %p407
      %p732 = pneg %p404
      %p733 = pneg %p428
      %p734 = pneg %p425
      %p735 = pneg %p449
      %p736 = pneg %p446
      %p737 = pneg %p470
      %p738 = pneg %p467
      %p739 = pneg %p491
      %p740 = pneg %p488
      %p741 = pneg %p512
      %p742 = pneg %p509
      %p743 = pneg %p533
      %p744 = pneg %p530
      %p745 = pneg %p559
      %p746 = pneg %p556
      %s747 = smul.u32 2, %s40
      %p748 = scmp.lt.s32.totalorder %s747, 1
      %s749 = scalar_select %p748, %s747, 1
      %s750 = smul.addr %s749, 8
      %s751 = scalar_lea.vmem %s22, %s750
      %s752 = smul.u32 4, %s42
      %p753 = scmp.lt.s32.totalorder %s752, 7
      %s754 = scalar_select %p753, %s752, 7
      %s755 = smul.addr %s754, 8
      %s756 = scalar_lea.vmem %s1, %s755
      %s757 = smul.u32 4, %s42
      %s758 = smul.u32 4, %s42
      %p759 = scmp.lt.s32.totalorder %s758, 7
      %s760 = scalar_select %p759, %s758, 7
      %s761 = smul.addr %s760, 4
      %s762 = scalar_lea.vmem %s2, %s761
      %s763 = smul.u32 4, %s42
      %s764 = smul.u32 4, %s42
      %p765 = scmp.lt.s32.totalorder %s764, 7
      %s766 = scalar_select %p765, %s764, 7
      %s767 = smul.addr %s766, 4
      %s768 = scalar_lea.vmem %s3, %s767
      %s769 = smul.u32 4, %s42
      %s770 = smul.u32 4, %s42
      %p771 = scmp.lt.s32.totalorder %s770, 7
      %s772 = scalar_select %p771, %s770, 7
      %p773 = scmp.lt.s32.totalorder %s40, 0
      %s774 = scalar_select %p773, %s40, 0
      %s775 = sadd.s32 %s774, %s772
      %s776 = smul.addr %s775, 4
      %s777 = scalar_lea.vmem %s4, %s776
      %s778 = smul.u32 4, %s42
      %s779 = smul.u32 2, %s40
      %p780 = scmp.lt.s32.totalorder %s779, 1
      %s781 = scalar_select %p780, %s779, 1
      %s782 = smul.addr %s781, 8
      %s783 = scalar_lea.vmem %s22, %s782
      %s784 = smul.u32 2, %s40
      %p785 = scmp.eq.s32.totalorder %s41, 0
      %p786 = scmp.eq.s32.totalorder %s42, 0
      %p787 = pnand %p785, %p786
      %p788 = pneg %p787
      // Predicated region
      $region109: #{_lambda_.3} parent=107 // pred_check
        _
      $region110: #{_lambda_.3} parent=107 // pred_check_branch
        %790 = sbr.rel (%p787) target = $region112
      $region111: #{_lambda_.3} parent=107 // pred_region
        %v791 = vld [vmem:[%s0] sm:$0xff]
        %v792 = vld [vmem:[%s0 + $0x8] sm:$0xff]
        %v793 = vld [vmem:[%s5] sm:$0xff]
        %v794 = vld [vmem:[%s5 + $0x8] sm:$0xff]
        %v795 = vld [vmem:[%s5 + $0x10] sm:$0xff]
        %v796 = vld [vmem:[%s5 + $0x18] sm:$0xff]
        %v797 = vld [vmem:[%s5 + $0x20] sm:$0xff]
        %v798 = vld [vmem:[%s5 + $0x28] sm:$0xff]
        %v799 = vld [vmem:[%s5 + $0x30] sm:$0xff]
        %v800 = vld [vmem:[%s5 + $0x38] sm:$0xff]
        %v801 = vld [vmem:[%s5 + $0x40] sm:$0xff]
        %v802 = vld [vmem:[%s5 + $0x48] sm:$0xff]
        %v803 = vld [vmem:[%s5 + $0x50] sm:$0xff]
        %v804 = vld [vmem:[%s5 + $0x58] sm:$0xff]
        %v805 = vld [vmem:[%s5 + $0x60] sm:$0xff]
        %v806 = vld [vmem:[%s5 + $0x68] sm:$0xff]
        %v807 = vld [vmem:[%s5 + $0x70] sm:$0xff]
        %v808 = vld [vmem:[%s5 + $0x78] sm:$0xff]
        %v809 = vld [vmem:[%s6] sm:$0x1]
        %v811 = vlaneseq
        %v812 = vshrl.u32 %v811, 7
        %v813 = vsub.s32 0, %v812
        %v814 = vrot.slane %v809, %v813
        %816 = vmatprep.subr.mxu0 0.0
        %817 = vmatpush1.msra.mxu0 %v808
        %818 = vmatprep.subr.mxu0 0.0
        %819 = vmatpush1.msra.mxu0 %v807
        %820 = vmatprep.subr.mxu0 0.0
        %821 = vmatpush1.msra.mxu0 %v806
        %822 = vmatprep.subr.mxu0 0.0
        %823 = vmatpush1.msra.mxu0 %v805
        %824 = vmatprep.subr.mxu0 0.0
        %825 = vmatpush1.msra.mxu0 %v804
        %826 = vmatprep.subr.mxu0 0.0
        %827 = vmatpush1.msra.mxu0 %v803
        %828 = vmatprep.subr.mxu0 0.0
        %829 = vmatpush1.msra.mxu0 %v802
        %830 = vmatprep.subr.mxu0 0.0
        %831 = vmatpush1.msra.mxu0 %v801
        %832 = vmatprep.subr.mxu0 0.0
        %833 = vmatpush1.msra.mxu0 %v800
        %834 = vmatprep.subr.mxu0 0.0
        %835 = vmatpush1.msra.mxu0 %v799
        %836 = vmatprep.subr.mxu0 0.0
        %837 = vmatpush1.msra.mxu0 %v798
        %838 = vmatprep.subr.mxu0 0.0
        %839 = vmatpush1.msra.mxu0 %v797
        %840 = vmatprep.subr.mxu0 0.0
        %841 = vmatpush1.msra.mxu0 %v796
        %842 = vmatprep.subr.mxu0 0.0
        %843 = vmatpush1.msra.mxu0 %v795
        %844 = vmatprep.subr.mxu0 0.0
        %845 = vmatpush1.msra.mxu0 %v794
        %846 = vmatprep.subr.mxu0 0.0
        %847 = vmatpush1.msra.mxu0 %v793
        %848 = vmatprep.subr.mxu0 0.0
        %849 = vmatpush2.msra.mxu0 0.0
        %850 = vmatprep.subr.mxu0 0.0
        %851 = vmatpush2.msra.mxu0 0.0
        %852 = vmatprep.subr.mxu0 0.0
        %853 = vmatpush2.msra.mxu0 0.0
        %854 = vmatprep.subr.mxu0 0.0
        %855 = vmatpush2.msra.mxu0 0.0
        %856 = vmatprep.subr.mxu0 0.0
        %857 = vmatpush2.msra.mxu0 0.0
        %858 = vmatprep.subr.mxu0 0.0
        %859 = vmatpush2.msra.mxu0 0.0
        %860 = vmatprep.subr.mxu0 0.0
        %861 = vmatpush2.msra.mxu0 0.0
        %862 = vmatprep.subr.mxu0 0.0
        %863 = vmatpush2.msra.mxu0 0.0
        %864 = vmatprep.subr.mxu0 0.0
        %865 = vmatpush2.msra.mxu0 0.0
        %866 = vmatprep.subr.mxu0 0.0
        %867 = vmatpush2.msra.mxu0 0.0
        %868 = vmatprep.subr.mxu0 0.0
        %869 = vmatpush2.msra.mxu0 0.0
        %870 = vmatprep.subr.mxu0 0.0
        %871 = vmatpush2.msra.mxu0 0.0
        %872 = vmatprep.subr.mxu0 0.0
        %873 = vmatpush2.msra.mxu0 0.0
        %874 = vmatprep.subr.mxu0 0.0
        %875 = vmatpush2.msra.mxu0 0.0
        %876 = vmatprep.subr.mxu0 0.0
        %877 = vmatpush2.msra.mxu0 0.0
        %878 = vmatprep.subr.mxu0 0.0
        %879 = vmatpush2.msra.mxu0 0.0
        %880 = vmatprep.mubr.f32.mxu0 0.0
        %881 = vmatmul.mubr.f32.gmra.mxu0 %v791
        %v882 = vpop.f32.mrf.mxu0
        %v883 = vadd.f32 %v814, %v882
        %v884 = vpop.f32.mrf.mxu0
        %885 = vmatprep.mubr.f32.mxu0 0.0
        %886 = vmatmul.mubr.f32.gmra.mxu0 %v792
        %v887 = vpop.f32.mrf.mxu0
        %v888 = vadd.f32 %v814, %v887
        %v889 = vpop.f32.mrf.mxu0
        %890 = vdwg.mxu0
        %vm891 = vcmask 261120
        %892 = vst.msk [vmem:[#allocation5] sm:$0xff] %vm891, %v883
        %893 = vst.msk [vmem:[#allocation5 + $0x8] sm:$0xff] %vm891, %v888
        %v894 = vld [vmem:[%s7] sm:$0xff]
        %v895 = vld [vmem:[%s7 + $0x8] sm:$0xff]
        %v896 = vld [vmem:[%s7 + $0x10] sm:$0xff]
        %v897 = vld [vmem:[%s7 + $0x18] sm:$0xff]
        %v898 = vld [vmem:[%s7 + $0x20] sm:$0xff]
        %v899 = vld [vmem:[%s7 + $0x28] sm:$0xff]
        %v900 = vld [vmem:[%s7 + $0x30] sm:$0xff]
        %v901 = vld [vmem:[%s7 + $0x38] sm:$0xff]
        %v902 = vld [vmem:[%s7 + $0x40] sm:$0xff]
        %v903 = vld [vmem:[%s7 + $0x48] sm:$0xff]
        %v904 = vld [vmem:[%s7 + $0x50] sm:$0xff]
        %v905 = vld [vmem:[%s7 + $0x58] sm:$0xff]
        %v906 = vld [vmem:[%s7 + $0x60] sm:$0xff]
        %v907 = vld [vmem:[%s7 + $0x68] sm:$0xff]
        %v908 = vld [vmem:[%s7 + $0x70] sm:$0xff]
        %v909 = vld [vmem:[%s7 + $0x78] sm:$0xff]
        %v910 = vld [vmem:[%s8] sm:$0x1]
        %v912 = vlaneseq
        %v913 = vshrl.u32 %v912, 7
        %v914 = vsub.s32 0, %v913
        %v915 = vrot.slane %v910, %v914
        %917 = vmatprep.subr.mxu0 0.0
        %918 = vmatpush1.msra.mxu0 %v909
        %919 = vmatprep.subr.mxu0 0.0
        %920 = vmatpush1.msra.mxu0 %v908
        %921 = vmatprep.subr.mxu0 0.0
        %922 = vmatpush1.msra.mxu0 %v907
        %923 = vmatprep.subr.mxu0 0.0
        %924 = vmatpush1.msra.mxu0 %v906
        %925 = vmatprep.subr.mxu0 0.0
        %926 = vmatpush1.msra.mxu0 %v905
        %927 = vmatprep.subr.mxu0 0.0
        %928 = vmatpush1.msra.mxu0 %v904
        %929 = vmatprep.subr.mxu0 0.0
        %930 = vmatpush1.msra.mxu0 %v903
        %931 = vmatprep.subr.mxu0 0.0
        %932 = vmatpush1.msra.mxu0 %v902
        %933 = vmatprep.subr.mxu0 0.0
        %934 = vmatpush1.msra.mxu0 %v901
        %935 = vmatprep.subr.mxu0 0.0
        %936 = vmatpush1.msra.mxu0 %v900
        %937 = vmatprep.subr.mxu0 0.0
        %938 = vmatpush1.msra.mxu0 %v899
        %939 = vmatprep.subr.mxu0 0.0
        %940 = vmatpush1.msra.mxu0 %v898
        %941 = vmatprep.subr.mxu0 0.0
        %942 = vmatpush1.msra.mxu0 %v897
        %943 = vmatprep.subr.mxu0 0.0
        %944 = vmatpush1.msra.mxu0 %v896
        %945 = vmatprep.subr.mxu0 0.0
        %946 = vmatpush1.msra.mxu0 %v895
        %947 = vmatprep.subr.mxu0 0.0
        %948 = vmatpush1.msra.mxu0 %v894
        %949 = vmatprep.subr.mxu0 0.0
        %950 = vmatpush2.msra.mxu0 0.0
        %951 = vmatprep.subr.mxu0 0.0
        %952 = vmatpush2.msra.mxu0 0.0
        %953 = vmatprep.subr.mxu0 0.0
        %954 = vmatpush2.msra.mxu0 0.0
        %955 = vmatprep.subr.mxu0 0.0
        %956 = vmatpush2.msra.mxu0 0.0
        %957 = vmatprep.subr.mxu0 0.0
        %958 = vmatpush2.msra.mxu0 0.0
        %959 = vmatprep.subr.mxu0 0.0
        %960 = vmatpush2.msra.mxu0 0.0
        %961 = vmatprep.subr.mxu0 0.0
        %962 = vmatpush2.msra.mxu0 0.0
        %963 = vmatprep.subr.mxu0 0.0
        %964 = vmatpush2.msra.mxu0 0.0
        %965 = vmatprep.subr.mxu0 0.0
        %966 = vmatpush2.msra.mxu0 0.0
        %967 = vmatprep.subr.mxu0 0.0
        %968 = vmatpush2.msra.mxu0 0.0
        %969 = vmatprep.subr.mxu0 0.0
        %970 = vmatpush2.msra.mxu0 0.0
        %971 = vmatprep.subr.mxu0 0.0
        %972 = vmatpush2.msra.mxu0 0.0
        %973 = vmatprep.subr.mxu0 0.0
        %974 = vmatpush2.msra.mxu0 0.0
        %975 = vmatprep.subr.mxu0 0.0
        %976 = vmatpush2.msra.mxu0 0.0
        %977 = vmatprep.subr.mxu0 0.0
        %978 = vmatpush2.msra.mxu0 0.0
        %979 = vmatprep.subr.mxu0 0.0
        %980 = vmatpush2.msra.mxu0 0.0
        %981 = vmatprep.mubr.f32.mxu0 0.0
        %982 = vmatmul.mubr.f32.gmra.mxu0 %v791
        %v983 = vpop.f32.mrf.mxu0
        %v984 = vadd.f32 %v915, %v983
        %v985 = vpop.f32.mrf.mxu0
        %986 = vmatprep.mubr.f32.mxu0 0.0
        %987 = vmatmul.mubr.f32.gmra.mxu0 %v792
        %v988 = vpop.f32.mrf.mxu0
        %v989 = vadd.f32 %v915, %v988
        %v990 = vpop.f32.mrf.mxu0
        %991 = vdwg.mxu0
        %992 = vst.msk [vmem:[#allocation6] sm:$0xff] %vm891, %v984
        %993 = vst.msk [vmem:[#allocation6 + $0x8] sm:$0xff] %vm891, %v989
        %vm994 = vcmask 122880
        %995 = vst.msk [vmem:[#allocation2] sm:$0x1] %vm994, -1e+30
      $region112: #{_lambda_.3} parent=107 // pred_fallthru
        _
      %v996 = vld [vmem:[%s762] sm:$0xf]
      %v997 = vld [vmem:[%s762 + $0x4] sm:$0xf]
      %v998 = vld [vmem:[%s762 + $0x8] sm:$0xf]
      %v999 = vld [vmem:[%s762 + $0xc] sm:$0xf]
      %v1000 = vunpack.c.l.bf16 %v996
      %v1001 = vunpack.c.l.bf16 %v997
      %v1002 = vunpack.c.l.bf16 %v998
      %v1003 = vunpack.c.l.bf16 %v999
      %v1004 = vld [vmem:[%s768] sm:$0xf]
      %v1005 = vld [vmem:[%s768 + $0x4] sm:$0xf]
      %v1006 = vld [vmem:[%s768 + $0x8] sm:$0xf]
      %v1007 = vld [vmem:[%s768 + $0xc] sm:$0xf]
      %v1008 = vunpack.c.l.bf16 %v1004
      %v1009 = vunpack.c.l.bf16 %v1005
      %v1010 = vunpack.c.l.bf16 %v1006
      %v1011 = vunpack.c.l.bf16 %v1007
      %v1012 = vld [vmem:[%s777] sm:$0xf]
      %v1013 = vld [vmem:[%s777 + $0x4] sm:$0xf]
      %v1014 = vld [vmem:[%s777 + $0x8] sm:$0xf]
      %v1015 = vld [vmem:[%s777 + $0xc] sm:$0xf]
      %v1016 = vunpack.c.l.bf16 %v1012
      %v1017 = vunpack.c.l.bf16 %v1013
      %v1018 = vunpack.c.l.bf16 %v1014
      %v1019 = vunpack.c.l.bf16 %v1015
      %v1020 = vld [vmem:[#allocation5] sm:$0xff]
      %v1021 = vld [vmem:[#allocation5 + $0x8] sm:$0xff]
      %vm1022 = vcmask 130048
      %v1024 = vsel %vm1022, %v1000, 0
      %v1027 = vsel %vm1022, %v1001, 0
      %v1030 = vsel %vm1022, %v1002, 0
      %v1033 = vsel %vm1022, %v1003, 0
      %1035 = vmatprep.subr.mxu0 0.0
      %1036 = vmatpush1.msra.mxu0 0.0
      %1037 = vmatprep.subr.mxu0 0.0
      %1038 = vmatpush1.msra.mxu0 0.0
      %1039 = vmatprep.subr.mxu0 0.0
      %1040 = vmatpush1.msra.mxu0 0.0
      %1041 = vmatprep.subr.mxu0 0.0
      %1042 = vmatpush1.msra.mxu0 0.0
      %1043 = vmatprep.subr.mxu0 0.0
      %1044 = vmatpush1.msra.mxu0 0.0
      %1045 = vmatprep.subr.mxu0 0.0
      %1046 = vmatpush1.msra.mxu0 0.0
      %1047 = vmatprep.subr.mxu0 0.0
      %1048 = vmatpush1.msra.mxu0 0.0
      %1049 = vmatprep.subr.mxu0 0.0
      %1050 = vmatpush1.msra.mxu0 0.0
      %1051 = vmatprep.subr.mxu0 0.0
      %1052 = vmatpush1.msra.mxu0 0.0
      %1053 = vmatprep.subr.mxu0 0.0
      %1054 = vmatpush1.msra.mxu0 0.0
      %1055 = vmatprep.subr.mxu0 0.0
      %1056 = vmatpush1.msra.mxu0 0.0
      %1057 = vmatprep.subr.mxu0 0.0
      %1058 = vmatpush1.msra.mxu0 0.0
      %1059 = vmatprep.subr.mxu0 0.0
      %1060 = vmatpush1.msra.mxu0 0.0
      %1061 = vmatprep.subr.mxu0 0.0
      %1062 = vmatpush1.msra.mxu0 0.0
      %1063 = vmatprep.subr.mxu0 0.0
      %1064 = vmatpush1.msra.mxu0 %v1021
      %1065 = vmatprep.subr.mxu0 0.0
      %1066 = vmatpush1.msra.mxu0 %v1020
      %1067 = vmatprep.subr.mxu0 0.0
      %1068 = vmatpush2.msra.mxu0 0.0
      %1069 = vmatprep.subr.mxu0 0.0
      %1070 = vmatpush2.msra.mxu0 0.0
      %1071 = vmatprep.subr.mxu0 0.0
      %1072 = vmatpush2.msra.mxu0 0.0
      %1073 = vmatprep.subr.mxu0 0.0
      %1074 = vmatpush2.msra.mxu0 0.0
      %1075 = vmatprep.subr.mxu0 0.0
      %1076 = vmatpush2.msra.mxu0 0.0
      %1077 = vmatprep.subr.mxu0 0.0
      %1078 = vmatpush2.msra.mxu0 0.0
      %1079 = vmatprep.subr.mxu0 0.0
      %1080 = vmatpush2.msra.mxu0 0.0
      %1081 = vmatprep.subr.mxu0 0.0
      %1082 = vmatpush2.msra.mxu0 0.0
      %1083 = vmatprep.subr.mxu0 0.0
      %1084 = vmatpush2.msra.mxu0 0.0
      %1085 = vmatprep.subr.mxu0 0.0
      %1086 = vmatpush2.msra.mxu0 0.0
      %1087 = vmatprep.subr.mxu0 0.0
      %1088 = vmatpush2.msra.mxu0 0.0
      %1089 = vmatprep.subr.mxu0 0.0
      %1090 = vmatpush2.msra.mxu0 0.0
      %1091 = vmatprep.subr.mxu0 0.0
      %1092 = vmatpush2.msra.mxu0 0.0
      %1093 = vmatprep.subr.mxu0 0.0
      %1094 = vmatpush2.msra.mxu0 0.0
      %1095 = vmatprep.subr.mxu0 0.0
      %1096 = vmatpush2.msra.mxu0 0.0
      %1097 = vmatprep.subr.mxu0 0.0
      %1098 = vmatpush2.msra.mxu0 0.0
      %1099 = vmatprep.mubr.f32.mxu0 0.0
      %1100 = vmatmul.mubr.f32.gmra.mxu0 %v1024
      %v1101 = vpop.f32.mrf.mxu0
      %v1102 = vadd.f32 0.0, %v1101
      %v1103 = vpop.f32.mrf.mxu0
      %1104 = vmatprep.mubr.f32.mxu0 0.0
      %1105 = vmatmul.mubr.f32.gmra.mxu0 %v1027
      %v1106 = vpop.f32.mrf.mxu0
      %v1107 = vadd.f32 0.0, %v1106
      %v1108 = vpop.f32.mrf.mxu0
      %1109 = vmatprep.mubr.f32.mxu0 0.0
      %1110 = vmatmul.mubr.f32.gmra.mxu0 %v1030
      %v1111 = vpop.f32.mrf.mxu0
      %v1112 = vadd.f32 0.0, %v1111
      %v1113 = vpop.f32.mrf.mxu0
      %1114 = vmatprep.mubr.f32.mxu0 0.0
      %1115 = vmatmul.mubr.f32.gmra.mxu0 %v1033
      %v1116 = vpop.f32.mrf.mxu0
      %v1117 = vadd.f32 0.0, %v1116
      %v1118 = vpop.f32.mrf.mxu0
      %1119 = vdwg.mxu0
      %v1120 = vld [vmem:[#allocation6] sm:$0xff]
      %v1121 = vld [vmem:[#allocation6 + $0x8] sm:$0xff]
      %v1123 = vsel %vm1022, %v1008, 0
      %v1126 = vsel %vm1022, %v1009, 0
      %v1129 = vsel %vm1022, %v1010, 0
      %v1132 = vsel %vm1022, %v1011, 0
      %1134 = vmatprep.subr.mxu0 0.0
      %1135 = vmatpush1.msra.mxu0 0.0
      %1136 = vmatprep.subr.mxu0 0.0
      %1137 = vmatpush1.msra.mxu0 0.0
      %1138 = vmatprep.subr.mxu0 0.0
      %1139 = vmatpush1.msra.mxu0 0.0
      %1140 = vmatprep.subr.mxu0 0.0
      %1141 = vmatpush1.msra.mxu0 0.0
      %1142 = vmatprep.subr.mxu0 0.0
      %1143 = vmatpush1.msra.mxu0 0.0
      %1144 = vmatprep.subr.mxu0 0.0
      %1145 = vmatpush1.msra.mxu0 0.0
      %1146 = vmatprep.subr.mxu0 0.0
      %1147 = vmatpush1.msra.mxu0 0.0
      %1148 = vmatprep.subr.mxu0 0.0
      %1149 = vmatpush1.msra.mxu0 0.0
      %1150 = vmatprep.subr.mxu0 0.0
      %1151 = vmatpush1.msra.mxu0 0.0
      %1152 = vmatprep.subr.mxu0 0.0
      %1153 = vmatpush1.msra.mxu0 0.0
      %1154 = vmatprep.subr.mxu0 0.0
      %1155 = vmatpush1.msra.mxu0 0.0
      %1156 = vmatprep.subr.mxu0 0.0
      %1157 = vmatpush1.msra.mxu0 0.0
      %1158 = vmatprep.subr.mxu0 0.0
      %1159 = vmatpush1.msra.mxu0 0.0
      %1160 = vmatprep.subr.mxu0 0.0
      %1161 = vmatpush1.msra.mxu0 0.0
      %1162 = vmatprep.subr.mxu0 0.0
      %1163 = vmatpush1.msra.mxu0 %v1121
      %1164 = vmatprep.subr.mxu0 0.0
      %1165 = vmatpush1.msra.mxu0 %v1120
      %1166 = vmatprep.subr.mxu0 0.0
      %1167 = vmatpush2.msra.mxu0 0.0
      %1168 = vmatprep.subr.mxu0 0.0
      %1169 = vmatpush2.msra.mxu0 0.0
      %1170 = vmatprep.subr.mxu0 0.0
      %1171 = vmatpush2.msra.mxu0 0.0
      %1172 = vmatprep.subr.mxu0 0.0
      %1173 = vmatpush2.msra.mxu0 0.0
      %1174 = vmatprep.subr.mxu0 0.0
      %1175 = vmatpush2.msra.mxu0 0.0
      %1176 = vmatprep.subr.mxu0 0.0
      %1177 = vmatpush2.msra.mxu0 0.0
      %1178 = vmatprep.subr.mxu0 0.0
      %1179 = vmatpush2.msra.mxu0 0.0
      %1180 = vmatprep.subr.mxu0 0.0
      %1181 = vmatpush2.msra.mxu0 0.0
      %1182 = vmatprep.subr.mxu0 0.0
      %1183 = vmatpush2.msra.mxu0 0.0
      %1184 = vmatprep.subr.mxu0 0.0
      %1185 = vmatpush2.msra.mxu0 0.0
      %1186 = vmatprep.subr.mxu0 0.0
      %1187 = vmatpush2.msra.mxu0 0.0
      %1188 = vmatprep.subr.mxu0 0.0
      %1189 = vmatpush2.msra.mxu0 0.0
      %1190 = vmatprep.subr.mxu0 0.0
      %1191 = vmatpush2.msra.mxu0 0.0
      %1192 = vmatprep.subr.mxu0 0.0
      %1193 = vmatpush2.msra.mxu0 0.0
      %1194 = vmatprep.subr.mxu0 0.0
      %1195 = vmatpush2.msra.mxu0 0.0
      %1196 = vmatprep.subr.mxu0 0.0
      %1197 = vmatpush2.msra.mxu0 0.0
      %1198 = vmatprep.mubr.f32.mxu0 0.0
      %1199 = vmatmul.mubr.f32.gmra.mxu0 %v1123
      %v1200 = vpop.f32.mrf.mxu0
      %v1201 = vadd.f32 0.0, %v1200
      %v1202 = vpop.f32.mrf.mxu0
      %1203 = vmatprep.mubr.f32.mxu0 0.0
      %1204 = vmatmul.mubr.f32.gmra.mxu0 %v1126
      %v1205 = vpop.f32.mrf.mxu0
      %v1206 = vadd.f32 0.0, %v1205
      %v1207 = vpop.f32.mrf.mxu0
      %1208 = vmatprep.mubr.f32.mxu0 0.0
      %1209 = vmatmul.mubr.f32.gmra.mxu0 %v1129
      %v1210 = vpop.f32.mrf.mxu0
      %v1211 = vadd.f32 0.0, %v1210
      %v1212 = vpop.f32.mrf.mxu0
      %1213 = vmatprep.mubr.f32.mxu0 0.0
      %1214 = vmatmul.mubr.f32.gmra.mxu0 %v1132
      %v1215 = vpop.f32.mrf.mxu0
      %v1216 = vadd.f32 0.0, %v1215
      %v1217 = vpop.f32.mrf.mxu0
      %1218 = vdwg.mxu0
      %v1219 = vadd.f32 %v1102, %v1201
      %v1220 = vadd.f32 %v1107, %v1206
      %v1221 = vadd.f32 %v1112, %v1211
      %v1222 = vadd.f32 %v1117, %v1216
      %v1223 = vld [vmem:[%s756] sm:$0xff]
      %v1224 = vld [vmem:[%s756 + $0x8] sm:$0xff]
      %v1225 = vld [vmem:[%s756 + $0x10] sm:$0xff]
      %v1226 = vld [vmem:[%s756 + $0x18] sm:$0xff]
      %v1227 = vld [vmem:[%s9] sm:$0xff]
      %vm1228 = vcmask 64512
      %v1230 = vsel %vm1228, %v1223, 0
      %v1233 = vsel %vm1228, %v1224, 0
      %v1236 = vsel %vm1228, %v1225, 0
      %v1239 = vsel %vm1228, %v1226, 0
      %1241 = vmatprep.subr.mxu0 0.0
      %1242 = vmatpush1.msra.mxu0 0.0
      %1243 = vmatprep.subr.mxu0 0.0
      %1244 = vmatpush1.msra.mxu0 0.0
      %1245 = vmatprep.subr.mxu0 0.0
      %1246 = vmatpush1.msra.mxu0 0.0
      %1247 = vmatprep.subr.mxu0 0.0
      %1248 = vmatpush1.msra.mxu0 0.0
      %1249 = vmatprep.subr.mxu0 0.0
      %1250 = vmatpush1.msra.mxu0 0.0
      %1251 = vmatprep.subr.mxu0 0.0
      %1252 = vmatpush1.msra.mxu0 0.0
      %1253 = vmatprep.subr.mxu0 0.0
      %1254 = vmatpush1.msra.mxu0 0.0
      %1255 = vmatprep.subr.mxu0 0.0
      %1256 = vmatpush1.msra.mxu0 0.0
      %1257 = vmatprep.subr.mxu0 0.0
      %1258 = vmatpush1.msra.mxu0 0.0
      %1259 = vmatprep.subr.mxu0 0.0
      %1260 = vmatpush1.msra.mxu0 0.0
      %1261 = vmatprep.subr.mxu0 0.0
      %1262 = vmatpush1.msra.mxu0 0.0
      %1263 = vmatprep.subr.mxu0 0.0
      %1264 = vmatpush1.msra.mxu0 0.0
      %1265 = vmatprep.subr.mxu0 0.0
      %1266 = vmatpush1.msra.mxu0 0.0
      %1267 = vmatprep.subr.mxu0 0.0
      %1268 = vmatpush1.msra.mxu0 0.0
      %1269 = vmatprep.subr.mxu0 0.0
      %1270 = vmatpush1.msra.mxu0 0.0
      %1271 = vmatprep.subr.mxu0 0.0
      %1272 = vmatpush1.msra.mxu0 %v1227
      %1273 = vmatprep.subr.mxu0 0.0
      %1274 = vmatpush2.msra.mxu0 0.0
      %1275 = vmatprep.subr.mxu0 0.0
      %1276 = vmatpush2.msra.mxu0 0.0
      %1277 = vmatprep.subr.mxu0 0.0
      %1278 = vmatpush2.msra.mxu0 0.0
      %1279 = vmatprep.subr.mxu0 0.0
      %1280 = vmatpush2.msra.mxu0 0.0
      %1281 = vmatprep.subr.mxu0 0.0
      %1282 = vmatpush2.msra.mxu0 0.0
      %1283 = vmatprep.subr.mxu0 0.0
      %1284 = vmatpush2.msra.mxu0 0.0
      %1285 = vmatprep.subr.mxu0 0.0
      %1286 = vmatpush2.msra.mxu0 0.0
      %1287 = vmatprep.subr.mxu0 0.0
      %1288 = vmatpush2.msra.mxu0 0.0
      %1289 = vmatprep.subr.mxu0 0.0
      %1290 = vmatpush2.msra.mxu0 0.0
      %1291 = vmatprep.subr.mxu0 0.0
      %1292 = vmatpush2.msra.mxu0 0.0
      %1293 = vmatprep.subr.mxu0 0.0
      %1294 = vmatpush2.msra.mxu0 0.0
      %1295 = vmatprep.subr.mxu0 0.0
      %1296 = vmatpush2.msra.mxu0 0.0
      %1297 = vmatprep.subr.mxu0 0.0
      %1298 = vmatpush2.msra.mxu0 0.0
      %1299 = vmatprep.subr.mxu0 0.0
      %1300 = vmatpush2.msra.mxu0 0.0
      %1301 = vmatprep.subr.mxu0 0.0
      %1302 = vmatpush2.msra.mxu0 0.0
      %1303 = vmatprep.subr.mxu0 0.0
      %1304 = vmatpush2.msra.mxu0 0.0
      %1305 = vmatprep.mubr.f32.mxu0 0.0
      %1306 = vmatmul.mubr.f32.gmra.mxu0 %v1230
      %v1307 = vpop.f32.mrf.mxu0
      %v1308 = vadd.f32 0.0, %v1307
      %v1309 = vpop.f32.mrf.mxu0
      %1310 = vmatprep.mubr.f32.mxu0 0.0
      %1311 = vmatmul.mubr.f32.gmra.mxu0 %v1233
      %v1312 = vpop.f32.mrf.mxu0
      %v1313 = vadd.f32 0.0, %v1312
      %v1314 = vpop.f32.mrf.mxu0
      %1315 = vmatprep.mubr.f32.mxu0 0.0
      %1316 = vmatmul.mubr.f32.gmra.mxu0 %v1236
      %v1317 = vpop.f32.mrf.mxu0
      %v1318 = vadd.f32 0.0, %v1317
      %v1319 = vpop.f32.mrf.mxu0
      %1320 = vmatprep.mubr.f32.mxu0 0.0
      %1321 = vmatmul.mubr.f32.gmra.mxu0 %v1239
      %v1322 = vpop.f32.mrf.mxu0
      %v1323 = vadd.f32 0.0, %v1322
      %v1324 = vpop.f32.mrf.mxu0
      %1325 = vdwg.mxu0
      %v1326 = vadd.f32 %v1219, %v1308
      %v1327 = vadd.f32 %v1220, %v1313
      %v1328 = vadd.f32 %v1221, %v1318
      %v1329 = vadd.f32 %v1222, %v1323
      %vm1330 = vcmp.ge.f32.partialorder %v1326, 0.0
      %vm1331 = vcmp.ge.f32.partialorder %v1327, 0.0
      %vm1332 = vcmp.ge.f32.partialorder %v1328, 0.0
      %vm1333 = vcmp.ge.f32.partialorder %v1329, 0.0
      %v1334 = vmul.f32 %v1326, 0.2
      %v1335 = vmul.f32 %v1327, 0.2
      %v1336 = vmul.f32 %v1328, 0.2
      %v1337 = vmul.f32 %v1329, 0.2
      %v1338 = vsel %vm1330, %v1326, %v1334
      %v1339 = vsel %vm1331, %v1327, %v1335
      %v1340 = vsel %vm1332, %v1328, %v1336
      %v1341 = vsel %vm1333, %v1329, %v1337
      %v1342 = vld [vmem:[%s10] sm:$0xff]
      %v1343 = vld [vmem:[%s10 + $0x8] sm:$0xff]
      %v1344 = vld [vmem:[%s10 + $0x10] sm:$0xff]
      %v1345 = vld [vmem:[%s10 + $0x18] sm:$0xff]
      %vm1346 = vcmask 261120
      %v1348 = vsel %vm1346, %v1338, 0
      %v1351 = vsel %vm1346, %v1339, 0
      %v1354 = vsel %vm1346, %v1340, 0
      %v1357 = vsel %vm1346, %v1341, 0
      %1359 = vmatprep.subr.mxu0 0.0
      %1360 = vmatpush1.msra.mxu0 0.0
      %1361 = vmatprep.subr.mxu0 0.0
      %1362 = vmatpush1.msra.mxu0 0.0
      %1363 = vmatprep.subr.mxu0 0.0
      %1364 = vmatpush1.msra.mxu0 0.0
      %1365 = vmatprep.subr.mxu0 0.0
      %1366 = vmatpush1.msra.mxu0 0.0
      %1367 = vmatprep.subr.mxu0 0.0
      %1368 = vmatpush1.msra.mxu0 0.0
      %1369 = vmatprep.subr.mxu0 0.0
      %1370 = vmatpush1.msra.mxu0 0.0
      %1371 = vmatprep.subr.mxu0 0.0
      %1372 = vmatpush1.msra.mxu0 0.0
      %1373 = vmatprep.subr.mxu0 0.0
      %1374 = vmatpush1.msra.mxu0 0.0
      %1375 = vmatprep.subr.mxu0 0.0
      %1376 = vmatpush1.msra.mxu0 0.0
      %1377 = vmatprep.subr.mxu0 0.0
      %1378 = vmatpush1.msra.mxu0 0.0
      %1379 = vmatprep.subr.mxu0 0.0
      %1380 = vmatpush1.msra.mxu0 0.0
      %1381 = vmatprep.subr.mxu0 0.0
      %1382 = vmatpush1.msra.mxu0 0.0
      %1383 = vmatprep.subr.mxu0 0.0
      %1384 = vmatpush1.msra.mxu0 %v1345
      %1385 = vmatprep.subr.mxu0 0.0
      %1386 = vmatpush1.msra.mxu0 %v1344
      %1387 = vmatprep.subr.mxu0 0.0
      %1388 = vmatpush1.msra.mxu0 %v1343
      %1389 = vmatprep.subr.mxu0 0.0
      %1390 = vmatpush1.msra.mxu0 %v1342
      %1391 = vmatprep.subr.mxu0 0.0
      %1392 = vmatpush2.msra.mxu0 0.0
      %1393 = vmatprep.subr.mxu0 0.0
      %1394 = vmatpush2.msra.mxu0 0.0
      %1395 = vmatprep.subr.mxu0 0.0
      %1396 = vmatpush2.msra.mxu0 0.0
      %1397 = vmatprep.subr.mxu0 0.0
      %1398 = vmatpush2.msra.mxu0 0.0
      %1399 = vmatprep.subr.mxu0 0.0
      %1400 = vmatpush2.msra.mxu0 0.0
      %1401 = vmatprep.subr.mxu0 0.0
      %1402 = vmatpush2.msra.mxu0 0.0
      %1403 = vmatprep.subr.mxu0 0.0
      %1404 = vmatpush2.msra.mxu0 0.0
      %1405 = vmatprep.subr.mxu0 0.0
      %1406 = vmatpush2.msra.mxu0 0.0
      %1407 = vmatprep.subr.mxu0 0.0
      %1408 = vmatpush2.msra.mxu0 0.0
      %1409 = vmatprep.subr.mxu0 0.0
      %1410 = vmatpush2.msra.mxu0 0.0
      %1411 = vmatprep.subr.mxu0 0.0
      %1412 = vmatpush2.msra.mxu0 0.0
      %1413 = vmatprep.subr.mxu0 0.0
      %1414 = vmatpush2.msra.mxu0 0.0
      %1415 = vmatprep.subr.mxu0 0.0
      %1416 = vmatpush2.msra.mxu0 0.0
      %1417 = vmatprep.subr.mxu0 0.0
      %1418 = vmatpush2.msra.mxu0 0.0
      %1419 = vmatprep.subr.mxu0 0.0
      %1420 = vmatpush2.msra.mxu0 0.0
      %1421 = vmatprep.subr.mxu0 0.0
      %1422 = vmatpush2.msra.mxu0 0.0
      %1423 = vmatprep.mubr.f32.mxu0 0.0
      %1424 = vmatmul.mubr.f32.gmra.mxu0 %v1348
      %v1425 = vpop.f32.mrf.mxu0
      %v1426 = vadd.f32 0.0, %v1425
      %v1427 = vpop.f32.mrf.mxu0
      %1428 = vmatprep.mubr.f32.mxu0 0.0
      %1429 = vmatmul.mubr.f32.gmra.mxu0 %v1351
      %v1430 = vpop.f32.mrf.mxu0
      %v1431 = vadd.f32 0.0, %v1430
      %v1432 = vpop.f32.mrf.mxu0
      %1433 = vmatprep.mubr.f32.mxu0 0.0
      %1434 = vmatmul.mubr.f32.gmra.mxu0 %v1354
      %v1435 = vpop.f32.mrf.mxu0
      %v1436 = vadd.f32 0.0, %v1435
      %v1437 = vpop.f32.mrf.mxu0
      %1438 = vmatprep.mubr.f32.mxu0 0.0
      %1439 = vmatmul.mubr.f32.gmra.mxu0 %v1357
      %v1440 = vpop.f32.mrf.mxu0
      %v1441 = vadd.f32 0.0, %v1440
      %v1442 = vpop.f32.mrf.mxu0
      %1443 = vdwg.mxu0
      // Predicated region
      $region113: #{_lambda_.3} parent=107 // pred_check
        %p1444 = pneg %p785
      $region114: #{_lambda_.3} parent=107 // pred_check_branch
        %1446 = sbr.rel (%p1444) target = $region116
      $region115: #{_lambda_.3} parent=107 // pred_region
        %vm1447 = vcmp.gt.f32.partialorder %v1016, 0.0
        %vm1448 = vcmp.gt.f32.partialorder %v1017, 0.0
        %vm1449 = vcmp.gt.f32.partialorder %v1018, 0.0
        %vm1450 = vcmp.gt.f32.partialorder %v1019, 0.0
        %1452 = vset.pattern.permute.xlu0 0
        %1453 = vperm.xlu0 %1452, %v1426
        %v1454 = vpop.permute.xlu0 %1453
        %1457 = vset.pattern.permute.xlu0 0
        %1458 = vperm.xlu0 %1457, %v1431
        %v1459 = vpop.permute.xlu0 %1458
        %1462 = vset.pattern.permute.xlu0 0
        %1463 = vperm.xlu0 %1462, %v1436
        %v1464 = vpop.permute.xlu0 %1463
        %1467 = vset.pattern.permute.xlu0 0
        %1468 = vperm.xlu0 %1467, %v1441
        %v1469 = vpop.permute.xlu0 %1468
        %v1471 = vsel %vm1447, %v1454, -1e+30
        %v1472 = vsel %vm1448, %v1459, -1e+30
        %v1473 = vsel %vm1449, %v1464, -1e+30
        %v1474 = vsel %vm1450, %v1469, -1e+30
        %v1475 = vsel %vm1022, %v1471, -inf
        %v1476 = vsel %vm1022, %v1472, -inf
        %v1477 = vsel %vm1022, %v1473, -inf
        %v1478 = vsel %vm1022, %v1474, -inf
        %v1479 = vmax.f32 %v1475, %v1476
        %v1480 = vmax.f32 %v1477, %v1478
        %v1481 = vmax.f32 %v1479, %v1480
        %v1482 = vrot.slane %v1481, 4
        %v1483 = vmax.f32 %v1481, %v1482
        %v1484 = vrot.slane %v1483, 2
        %v1485 = vmax.f32 %v1483, %v1484
        %v1486 = vrot.slane %v1485, 1
        %v1487 = vmax.f32 %v1485, %v1486
        %v1488 = vld [vmem:[#allocation2] sm:$0x1]
        %v1489 = vmax.f32 %v1488, %v1487
        %vm1490 = vcmask 122880
        %1491 = vst.msk [vmem:[#allocation2] sm:$0x1] %vm1490, %v1489
      $region116: #{_lambda_.3} parent=107 // pred_fallthru
        _
      %p1492 = scmp.eq.s32.totalorder %s41, 1
      // Predicated region
      $region117: #{_lambda_.3} parent=107 // pred_check
        %p1493 = pneg %p1492
      $region118: #{_lambda_.3} parent=107 // pred_check_branch
        %1495 = sbr.rel (%p1493) target = $region120
      $region119: #{_lambda_.3} parent=107 // pred_region
        // Predicated region
        $region121: #{_lambda_.3} parent=119 // pred_check
          %p1496 = pneg %p786
        $region122: #{_lambda_.3} parent=119 // pred_check_branch
          %1498 = sbr.rel (%p1496) target = $region124
        $region123: #{_lambda_.3} parent=119 // pred_region
          %vm1499 = vcmask 7168
          %1500 = vst.msk [vmem:[#allocation3] sm:$0xff] %vm1499, 0.0
          %1501 = vst.msk [vmem:[#allocation3 + $0x8] sm:$0xff] %vm1499, 0.0
          %1502 = vst.msk [vmem:[#allocation4] sm:$0xff] %vm1346, 0.0
          %1503 = vst.msk [vmem:[#allocation4 + $0x8] sm:$0xff] %vm1346, 0.0
        $region124: #{_lambda_.3} parent=119 // pred_fallthru
          _
        %v1504 = vld [vmem:[#allocation2] sm:$0x1]
        %v1506 = vlaneseq
        %v1507 = vshrl.u32 %v1506, 7
        %v1508 = vsub.s32 0, %v1507
        %v1509 = vrot.slane %v1504, %v1508
        %v1511 = vmul.f32 %v1016, %v1509
        %v1512 = vmul.f32 %v1017, %v1509
        %v1513 = vmul.f32 %v1018, %v1509
        %v1514 = vmul.f32 %v1019, %v1509
        %v1515 = vsel %vm1022, %v1511, 0.0
        %1516 = vadd.xlane.f32.xlu0 %v1515
        %v1517 = vpop.xlane.xlu0 %1516
        %v1518 = vsel %vm1022, %v1512, 0.0
        %1519 = vadd.xlane.f32.xlu0 %v1518
        %v1520 = vpop.xlane.xlu0 %1519
        %v1521 = vsel %vm1022, %v1513, 0.0
        %1522 = vadd.xlane.f32.xlu0 %v1521
        %v1523 = vpop.xlane.xlu0 %1522
        %v1524 = vsel %vm1022, %v1514, 0.0
        %1525 = vadd.xlane.f32.xlu0 %v1524
        %v1526 = vpop.xlane.xlu0 %1525
        %v1527 = vsub.f32 %v1426, %v1517
        %v1528 = vsub.f32 %v1431, %v1520
        %v1529 = vsub.f32 %v1436, %v1523
        %v1530 = vsub.f32 %v1441, %v1526
        %v1531 = vmin.f32 %v1527, 40.0
        %v1532 = vmin.f32 %v1528, 40.0
        %v1533 = vmin.f32 %v1529, 40.0
        %v1534 = vmin.f32 %v1530, 40.0
        %v1535 = vmul.f32 %v1531, 1.442695
        %v1536 = vpow.pop %v1535
        %v1537 = vmul.f32 %v1532, 1.442695
        %v1538 = vpow.pop %v1537
        %v1539 = vmul.f32 %v1533, 1.442695
        %v1540 = vpow.pop %v1539
        %v1541 = vmul.f32 %v1534, 1.442695
        %v1542 = vpow.pop %v1541
        %v1543 = vld [vmem:[%s11] sm:$0x1]
        %vm1544 = vcmask 7168
        %v1546 = vsel %vm1544, %v1536, 0
        %v1549 = vsel %vm1544, %v1538, 0
        %v1552 = vsel %vm1544, %v1540, 0
        %v1555 = vsel %vm1544, %v1542, 0
        %vm1557 = vcmask 1040384
        %v1559 = vsel %vm1557, %v1543, 0
        %1561 = vmatprep.subr.mxu0 0.0
        %1562 = vmatpush1.msra.mxu0 0.0
        %1563 = vmatprep.subr.mxu0 0.0
        %1564 = vmatpush1.msra.mxu0 0.0
        %1565 = vmatprep.subr.mxu0 0.0
        %1566 = vmatpush1.msra.mxu0 0.0
        %1567 = vmatprep.subr.mxu0 0.0
        %1568 = vmatpush1.msra.mxu0 0.0
        %1569 = vmatprep.subr.mxu0 0.0
        %1570 = vmatpush1.msra.mxu0 0.0
        %1571 = vmatprep.subr.mxu0 0.0
        %1572 = vmatpush1.msra.mxu0 0.0
        %1573 = vmatprep.subr.mxu0 0.0
        %1574 = vmatpush1.msra.mxu0 0.0
        %1575 = vmatprep.subr.mxu0 0.0
        %1576 = vmatpush1.msra.mxu0 0.0
        %1577 = vmatprep.subr.mxu0 0.0
        %1578 = vmatpush1.msra.mxu0 0.0
        %1579 = vmatprep.subr.mxu0 0.0
        %1580 = vmatpush1.msra.mxu0 0.0
        %1581 = vmatprep.subr.mxu0 0.0
        %1582 = vmatpush1.msra.mxu0 0.0
        %1583 = vmatprep.subr.mxu0 0.0
        %1584 = vmatpush1.msra.mxu0 0.0
        %1585 = vmatprep.subr.mxu0 0.0
        %1586 = vmatpush1.msra.mxu0 0.0
        %1587 = vmatprep.subr.mxu0 0.0
        %1588 = vmatpush1.msra.mxu0 0.0
        %1589 = vmatprep.subr.mxu0 0.0
        %1590 = vmatpush1.msra.mxu0 0.0
        %1591 = vmatprep.subr.mxu0 0.0
        %1592 = vmatpush1.msra.mxu0 %v1559
        %1593 = vmatprep.subr.mxu0 0.0
        %1594 = vmatpush2.msra.mxu0 0.0
        %1595 = vmatprep.subr.mxu0 0.0
        %1596 = vmatpush2.msra.mxu0 0.0
        %1597 = vmatprep.subr.mxu0 0.0
        %1598 = vmatpush2.msra.mxu0 0.0
        %1599 = vmatprep.subr.mxu0 0.0
        %1600 = vmatpush2.msra.mxu0 0.0
        %1601 = vmatprep.subr.mxu0 0.0
        %1602 = vmatpush2.msra.mxu0 0.0
        %1603 = vmatprep.subr.mxu0 0.0
        %1604 = vmatpush2.msra.mxu0 0.0
        %1605 = vmatprep.subr.mxu0 0.0
        %1606 = vmatpush2.msra.mxu0 0.0
        %1607 = vmatprep.subr.mxu0 0.0
        %1608 = vmatpush2.msra.mxu0 0.0
        %1609 = vmatprep.subr.mxu0 0.0
        %1610 = vmatpush2.msra.mxu0 0.0
        %1611 = vmatprep.subr.mxu0 0.0
        %1612 = vmatpush2.msra.mxu0 0.0
        %1613 = vmatprep.subr.mxu0 0.0
        %1614 = vmatpush2.msra.mxu0 0.0
        %1615 = vmatprep.subr.mxu0 0.0
        %1616 = vmatpush2.msra.mxu0 0.0
        %1617 = vmatprep.subr.mxu0 0.0
        %1618 = vmatpush2.msra.mxu0 0.0
        %1619 = vmatprep.subr.mxu0 0.0
        %1620 = vmatpush2.msra.mxu0 0.0
        %1621 = vmatprep.subr.mxu0 0.0
        %1622 = vmatpush2.msra.mxu0 0.0
        %1623 = vmatprep.subr.mxu0 0.0
        %1624 = vmatpush2.msra.mxu0 0.0
        %1625 = vmatprep.mubr.f32.mxu0 0.0
        %1626 = vmatmul.mubr.f32.gmra.mxu0 %v1546
        %v1627 = vpop.f32.mrf.mxu0
        %v1628 = vadd.f32 0.0, %v1627
        %v1629 = vpop.f32.mrf.mxu0
        %1630 = vmatprep.mubr.f32.mxu0 0.0
        %1631 = vmatmul.mubr.f32.gmra.mxu0 %v1549
        %v1632 = vpop.f32.mrf.mxu0
        %v1633 = vadd.f32 0.0, %v1632
        %v1634 = vpop.f32.mrf.mxu0
        %1635 = vmatprep.mubr.f32.mxu0 0.0
        %1636 = vmatmul.mubr.f32.gmra.mxu0 %v1552
        %v1637 = vpop.f32.mrf.mxu0
        %v1638 = vadd.f32 0.0, %v1637
        %v1639 = vpop.f32.mrf.mxu0
        %1640 = vmatprep.mubr.f32.mxu0 0.0
        %1641 = vmatmul.mubr.f32.gmra.mxu0 %v1555
        %v1642 = vpop.f32.mrf.mxu0
        %v1643 = vadd.f32 0.0, %v1642
        %v1644 = vpop.f32.mrf.mxu0
        %1645 = vdwg.mxu0
        %v1646 = vmul.f32 %v1628, %v1102
        %v1647 = vmul.f32 %v1633, %v1107
        %v1648 = vmul.f32 %v1638, %v1112
        %v1649 = vmul.f32 %v1643, %v1117
        %v1650 = vld [vmem:[#allocation3] sm:$0xff]
        %v1651 = vld [vmem:[#allocation3 + $0x8] sm:$0xff]
        %1652 = vxpose.xlu0.b32.start [1/16] %v1016, 128
        %1653 = vxpose.xlu0.b32.cont [2/16] %v1017, 128
        %1654 = vxpose.xlu0.b32.cont [3/16] %v1018, 128
        %1655 = vxpose.xlu0.b32.cont [4/16] %v1019, 128
        %1656 = vxpose.xlu0.b32.cont [5/16] 0.0, 128
        %1657 = vxpose.xlu0.b32.cont [6/16] 0.0, 128
        %1658 = vxpose.xlu0.b32.cont [7/16] 0.0, 128
        %1659 = vxpose.xlu0.b32.cont [8/16] 0.0, 128
        %1660 = vxpose.xlu0.b32.cont [9/16] 0.0, 128
        %1661 = vxpose.xlu0.b32.cont [10/16] 0.0, 128
        %1662 = vxpose.xlu0.b32.cont [11/16] 0.0, 128
        %1663 = vxpose.xlu0.b32.cont [12/16] 0.0, 128
        %1664 = vxpose.xlu0.b32.cont [13/16] 0.0, 128
        %1665 = vxpose.xlu0.b32.cont [14/16] 0.0, 128
        %1666 = vxpose.xlu0.b32.cont [15/16] 0.0, 128
        %1667 = vxpose.xlu0.b32.end [16/16] 0.0, 128
        %v1668 = vpop.trf.xlu0
        %v1669 = vpop.trf.xlu0
        %v1670 = vpop.trf.xlu0
        %v1671 = vpop.trf.xlu0
        %v1672 = vpop.trf.xlu0
        %v1673 = vpop.trf.xlu0
        %v1674 = vpop.trf.xlu0
        %v1675 = vpop.trf.xlu0
        %v1676 = vpop.trf.xlu0
        %v1677 = vpop.trf.xlu0
        %v1678 = vpop.trf.xlu0
        %v1679 = vpop.trf.xlu0
        %v1680 = vpop.trf.xlu0
        %v1681 = vpop.trf.xlu0
        %v1682 = vpop.trf.xlu0
        %v1683 = vpop.trf.xlu0
        %v1685 = vsel %vm1346, %v1668, 0
        %v1688 = vsel %vm1346, %v1669, 0
        %1690 = vmatprep.subr.mxu0 0.0
        %1691 = vmatpush1.msra.mxu0 0.0
        %1692 = vmatprep.subr.mxu0 0.0
        %1693 = vmatpush1.msra.mxu0 0.0
        %1694 = vmatprep.subr.mxu0 0.0
        %1695 = vmatpush1.msra.mxu0 0.0
        %1696 = vmatprep.subr.mxu0 0.0
        %1697 = vmatpush1.msra.mxu0 0.0
        %1698 = vmatprep.subr.mxu0 0.0
        %1699 = vmatpush1.msra.mxu0 0.0
        %1700 = vmatprep.subr.mxu0 0.0
        %1701 = vmatpush1.msra.mxu0 0.0
        %1702 = vmatprep.subr.mxu0 0.0
        %1703 = vmatpush1.msra.mxu0 0.0
        %1704 = vmatprep.subr.mxu0 0.0
        %1705 = vmatpush1.msra.mxu0 0.0
        %1706 = vmatprep.subr.mxu0 0.0
        %1707 = vmatpush1.msra.mxu0 0.0
        %1708 = vmatprep.subr.mxu0 0.0
        %1709 = vmatpush1.msra.mxu0 0.0
        %1710 = vmatprep.subr.mxu0 0.0
        %1711 = vmatpush1.msra.mxu0 0.0
        %1712 = vmatprep.subr.mxu0 0.0
        %1713 = vmatpush1.msra.mxu0 0.0
        %1714 = vmatprep.subr.mxu0 0.0
        %1715 = vmatpush1.msra.mxu0 %v1542
        %1716 = vmatprep.subr.mxu0 0.0
        %1717 = vmatpush1.msra.mxu0 %v1540
        %1718 = vmatprep.subr.mxu0 0.0
        %1719 = vmatpush1.msra.mxu0 %v1538
        %1720 = vmatprep.subr.mxu0 0.0
        %1721 = vmatpush1.msra.mxu0 %v1536
        %1722 = vmatprep.subr.mxu0 0.0
        %1723 = vmatpush2.msra.mxu0 0.0
        %1724 = vmatprep.subr.mxu0 0.0
        %1725 = vmatpush2.msra.mxu0 0.0
        %1726 = vmatprep.subr.mxu0 0.0
        %1727 = vmatpush2.msra.mxu0 0.0
        %1728 = vmatprep.subr.mxu0 0.0
        %1729 = vmatpush2.msra.mxu0 0.0
        %1730 = vmatprep.subr.mxu0 0.0
        %1731 = vmatpush2.msra.mxu0 0.0
        %1732 = vmatprep.subr.mxu0 0.0
        %1733 = vmatpush2.msra.mxu0 0.0
        %1734 = vmatprep.subr.mxu0 0.0
        %1735 = vmatpush2.msra.mxu0 0.0
        %1736 = vmatprep.subr.mxu0 0.0
        %1737 = vmatpush2.msra.mxu0 0.0
        %1738 = vmatprep.subr.mxu0 0.0
        %1739 = vmatpush2.msra.mxu0 0.0
        %1740 = vmatprep.subr.mxu0 0.0
        %1741 = vmatpush2.msra.mxu0 0.0
        %1742 = vmatprep.subr.mxu0 0.0
        %1743 = vmatpush2.msra.mxu0 0.0
        %1744 = vmatprep.subr.mxu0 0.0
        %1745 = vmatpush2.msra.mxu0 0.0
        %1746 = vmatprep.subr.mxu0 0.0
        %1747 = vmatpush2.msra.mxu0 0.0
        %1748 = vmatprep.subr.mxu0 0.0
        %1749 = vmatpush2.msra.mxu0 0.0
        %1750 = vmatprep.subr.mxu0 0.0
        %1751 = vmatpush2.msra.mxu0 0.0
        %1752 = vmatprep.subr.mxu0 0.0
        %1753 = vmatpush2.msra.mxu0 0.0
        %1754 = vmatprep.mubr.f32.mxu0 0.0
        %1755 = vmatmul.mubr.f32.gmra.mxu0 %v1685
        %v1756 = vpop.f32.mrf.mxu0
        %v1757 = vadd.f32 0.0, %v1756
        %v1758 = vpop.f32.mrf.mxu0
        %1759 = vmatprep.mubr.f32.mxu0 0.0
        %1760 = vmatmul.mubr.f32.gmra.mxu0 %v1688
        %v1761 = vpop.f32.mrf.mxu0
        %v1762 = vadd.f32 0.0, %v1761
        %v1763 = vpop.f32.mrf.mxu0
        %1764 = vdwg.mxu0
        %v1765 = vadd.f32 %v1650, %v1757
        %v1766 = vadd.f32 %v1651, %v1762
        %1767 = vst.msk [vmem:[#allocation3] sm:$0xff] %vm1544, %v1765
        %1768 = vst.msk [vmem:[#allocation3 + $0x8] sm:$0xff] %vm1544, %v1766
        %v1769 = vld [vmem:[#allocation4] sm:$0xff]
        %v1770 = vld [vmem:[#allocation4 + $0x8] sm:$0xff]
        %1771 = vmatprep.subr.mxu0 0.0
        %1772 = vmatpush1.msra.mxu0 0.0
        %1773 = vmatprep.subr.mxu0 0.0
        %1774 = vmatpush1.msra.mxu0 0.0
        %1775 = vmatprep.subr.mxu0 0.0
        %1776 = vmatpush1.msra.mxu0 0.0
        %1777 = vmatprep.subr.mxu0 0.0
        %1778 = vmatpush1.msra.mxu0 0.0
        %1779 = vmatprep.subr.mxu0 0.0
        %1780 = vmatpush1.msra.mxu0 0.0
        %1781 = vmatprep.subr.mxu0 0.0
        %1782 = vmatpush1.msra.mxu0 0.0
        %1783 = vmatprep.subr.mxu0 0.0
        %1784 = vmatpush1.msra.mxu0 0.0
        %1785 = vmatprep.subr.mxu0 0.0
        %1786 = vmatpush1.msra.mxu0 0.0
        %1787 = vmatprep.subr.mxu0 0.0
        %1788 = vmatpush1.msra.mxu0 0.0
        %1789 = vmatprep.subr.mxu0 0.0
        %1790 = vmatpush1.msra.mxu0 0.0
        %1791 = vmatprep.subr.mxu0 0.0
        %1792 = vmatpush1.msra.mxu0 0.0
        %1793 = vmatprep.subr.mxu0 0.0
        %1794 = vmatpush1.msra.mxu0 0.0
        %1795 = vmatprep.subr.mxu0 0.0
        %1796 = vmatpush1.msra.mxu0 %v1649
        %1797 = vmatprep.subr.mxu0 0.0
        %1798 = vmatpush1.msra.mxu0 %v1648
        %1799 = vmatprep.subr.mxu0 0.0
        %1800 = vmatpush1.msra.mxu0 %v1647
        %1801 = vmatprep.subr.mxu0 0.0
        %1802 = vmatpush1.msra.mxu0 %v1646
        %1803 = vmatprep.subr.mxu0 0.0
        %1804 = vmatpush2.msra.mxu0 0.0
        %1805 = vmatprep.subr.mxu0 0.0
        %1806 = vmatpush2.msra.mxu0 0.0
        %1807 = vmatprep.subr.mxu0 0.0
        %1808 = vmatpush2.msra.mxu0 0.0
        %1809 = vmatprep.subr.mxu0 0.0
        %1810 = vmatpush2.msra.mxu0 0.0
        %1811 = vmatprep.subr.mxu0 0.0
        %1812 = vmatpush2.msra.mxu0 0.0
        %1813 = vmatprep.subr.mxu0 0.0
        %1814 = vmatpush2.msra.mxu0 0.0
        %1815 = vmatprep.subr.mxu0 0.0
        %1816 = vmatpush2.msra.mxu0 0.0
        %1817 = vmatprep.subr.mxu0 0.0
        %1818 = vmatpush2.msra.mxu0 0.0
        %1819 = vmatprep.subr.mxu0 0.0
        %1820 = vmatpush2.msra.mxu0 0.0
        %1821 = vmatprep.subr.mxu0 0.0
        %1822 = vmatpush2.msra.mxu0 0.0
        %1823 = vmatprep.subr.mxu0 0.0
        %1824 = vmatpush2.msra.mxu0 0.0
        %1825 = vmatprep.subr.mxu0 0.0
        %1826 = vmatpush2.msra.mxu0 0.0
        %1827 = vmatprep.subr.mxu0 0.0
        %1828 = vmatpush2.msra.mxu0 0.0
        %1829 = vmatprep.subr.mxu0 0.0
        %1830 = vmatpush2.msra.mxu0 0.0
        %1831 = vmatprep.subr.mxu0 0.0
        %1832 = vmatpush2.msra.mxu0 0.0
        %1833 = vmatprep.subr.mxu0 0.0
        %1834 = vmatpush2.msra.mxu0 0.0
        %1835 = vmatprep.mubr.f32.mxu0 0.0
        %1836 = vmatmul.mubr.f32.gmra.mxu0 %v1685
        %v1837 = vpop.f32.mrf.mxu0
        %v1838 = vadd.f32 0.0, %v1837
        %v1839 = vpop.f32.mrf.mxu0
        %1840 = vmatprep.mubr.f32.mxu0 0.0
        %1841 = vmatmul.mubr.f32.gmra.mxu0 %v1688
        %v1842 = vpop.f32.mrf.mxu0
        %v1843 = vadd.f32 0.0, %v1842
        %v1844 = vpop.f32.mrf.mxu0
        %1845 = vdwg.mxu0
        %v1846 = vadd.f32 %v1769, %v1838
        %v1847 = vadd.f32 %v1770, %v1843
        %1848 = vst.msk [vmem:[#allocation4] sm:$0xff] %vm1346, %v1846
        %1849 = vst.msk [vmem:[#allocation4 + $0x8] sm:$0xff] %vm1346, %v1847
        %p1850 = scmp.eq.s32.totalorder %s42, 1
        // Predicated region
        $region125: #{_lambda_.3} parent=119 // pred_check
          %p1851 = pneg %p1850
        $region126: #{_lambda_.3} parent=119 // pred_check_branch
          %1853 = sbr.rel (%p1851) target = $region128
        $region127: #{_lambda_.3} parent=119 // pred_region
          %v1854 = vld [vmem:[#allocation3] sm:$0xff]
          %v1855 = vld [vmem:[#allocation3 + $0x8] sm:$0xff]
          %v1856 = vmax.f32 %v1854, 1e-20
          %v1857 = vmax.f32 %v1855, 1e-20
          %v1858 = vrcp.pop %v1856
          %v1859 = vrcp.pop %v1857
          %v1860 = vld [vmem:[%s11] sm:$0x1]
          %v1862 = vsel %vm1544, %v1858, 0
          %v1865 = vsel %vm1544, %v1859, 0
          %v1868 = vsel %vm1557, %v1860, 0
          %1870 = vmatprep.subr.mxu0 0.0
          %1871 = vmatpush1.msra.mxu0 0.0
          %1872 = vmatprep.subr.mxu0 0.0
          %1873 = vmatpush1.msra.mxu0 0.0
          %1874 = vmatprep.subr.mxu0 0.0
          %1875 = vmatpush1.msra.mxu0 0.0
          %1876 = vmatprep.subr.mxu0 0.0
          %1877 = vmatpush1.msra.mxu0 0.0
          %1878 = vmatprep.subr.mxu0 0.0
          %1879 = vmatpush1.msra.mxu0 0.0
          %1880 = vmatprep.subr.mxu0 0.0
          %1881 = vmatpush1.msra.mxu0 0.0
          %1882 = vmatprep.subr.mxu0 0.0
          %1883 = vmatpush1.msra.mxu0 0.0
          %1884 = vmatprep.subr.mxu0 0.0
          %1885 = vmatpush1.msra.mxu0 0.0
          %1886 = vmatprep.subr.mxu0 0.0
          %1887 = vmatpush1.msra.mxu0 0.0
          %1888 = vmatprep.subr.mxu0 0.0
          %1889 = vmatpush1.msra.mxu0 0.0
          %1890 = vmatprep.subr.mxu0 0.0
          %1891 = vmatpush1.msra.mxu0 0.0
          %1892 = vmatprep.subr.mxu0 0.0
          %1893 = vmatpush1.msra.mxu0 0.0
          %1894 = vmatprep.subr.mxu0 0.0
          %1895 = vmatpush1.msra.mxu0 0.0
          %1896 = vmatprep.subr.mxu0 0.0
          %1897 = vmatpush1.msra.mxu0 0.0
          %1898 = vmatprep.subr.mxu0 0.0
          %1899 = vmatpush1.msra.mxu0 0.0
          %1900 = vmatprep.subr.mxu0 0.0
          %1901 = vmatpush1.msra.mxu0 %v1868
          %1902 = vmatprep.subr.mxu0 0.0
          %1903 = vmatpush2.msra.mxu0 0.0
          %1904 = vmatprep.subr.mxu0 0.0
          %1905 = vmatpush2.msra.mxu0 0.0
          %1906 = vmatprep.subr.mxu0 0.0
          %1907 = vmatpush2.msra.mxu0 0.0
          %1908 = vmatprep.subr.mxu0 0.0
          %1909 = vmatpush2.msra.mxu0 0.0
          %1910 = vmatprep.subr.mxu0 0.0
          %1911 = vmatpush2.msra.mxu0 0.0
          %1912 = vmatprep.subr.mxu0 0.0
          %1913 = vmatpush2.msra.mxu0 0.0
          %1914 = vmatprep.subr.mxu0 0.0
          %1915 = vmatpush2.msra.mxu0 0.0
          %1916 = vmatprep.subr.mxu0 0.0
          %1917 = vmatpush2.msra.mxu0 0.0
          %1918 = vmatprep.subr.mxu0 0.0
          %1919 = vmatpush2.msra.mxu0 0.0
          %1920 = vmatprep.subr.mxu0 0.0
          %1921 = vmatpush2.msra.mxu0 0.0
          %1922 = vmatprep.subr.mxu0 0.0
          %1923 = vmatpush2.msra.mxu0 0.0
          %1924 = vmatprep.subr.mxu0 0.0
          %1925 = vmatpush2.msra.mxu0 0.0
          %1926 = vmatprep.subr.mxu0 0.0
          %1927 = vmatpush2.msra.mxu0 0.0
          %1928 = vmatprep.subr.mxu0 0.0
          %1929 = vmatpush2.msra.mxu0 0.0
          %1930 = vmatprep.subr.mxu0 0.0
          %1931 = vmatpush2.msra.mxu0 0.0
          %1932 = vmatprep.subr.mxu0 0.0
          %1933 = vmatpush2.msra.mxu0 0.0
          %1934 = vmatprep.mubr.f32.mxu0 0.0
          %1935 = vmatmul.mubr.f32.gmra.mxu0 %v1862
          %v1936 = vpop.f32.mrf.mxu0
          %v1937 = vadd.f32 0.0, %v1936
          %v1938 = vpop.f32.mrf.mxu0
          %1939 = vmatprep.mubr.f32.mxu0 0.0
          %1940 = vmatmul.mubr.f32.gmra.mxu0 %v1865
          %v1941 = vpop.f32.mrf.mxu0
          %v1942 = vadd.f32 0.0, %v1941
          %v1943 = vpop.f32.mrf.mxu0
          %1944 = vdwg.mxu0
          %v1945 = vld [vmem:[#allocation4] sm:$0xff]
          %v1946 = vld [vmem:[#allocation4 + $0x8] sm:$0xff]
          %v1947 = vmul.f32 %v1945, %v1937
          %v1948 = vmul.f32 %v1946, %v1942
          %v1949 = vld [vmem:[%s19] sm:$0xff]
          %v1950 = vld [vmem:[%s19 + $0x8] sm:$0xff]
          %v1951 = vld [vmem:[%s19 + $0x10] sm:$0xff]
          %v1952 = vld [vmem:[%s19 + $0x18] sm:$0xff]
          %v1953 = vld [vmem:[%s12] sm:$0x1]
          %v1955 = vlaneseq
          %v1956 = vshrl.u32 %v1955, 7
          %v1957 = vsub.s32 0, %v1956
          %v1958 = vrot.slane %v1953, %v1957
          %v1961 = vsel %vm1346, %v1947, 0
          %v1964 = vsel %vm1346, %v1948, 0
          %1966 = vmatprep.subr.mxu0 0.0
          %1967 = vmatpush1.msra.mxu0 0.0
          %1968 = vmatprep.subr.mxu0 0.0
          %1969 = vmatpush1.msra.mxu0 0.0
          %1970 = vmatprep.subr.mxu0 0.0
          %1971 = vmatpush1.msra.mxu0 0.0
          %1972 = vmatprep.subr.mxu0 0.0
          %1973 = vmatpush1.msra.mxu0 0.0
          %1974 = vmatprep.subr.mxu0 0.0
          %1975 = vmatpush1.msra.mxu0 0.0
          %1976 = vmatprep.subr.mxu0 0.0
          %1977 = vmatpush1.msra.mxu0 0.0
          %1978 = vmatprep.subr.mxu0 0.0
          %1979 = vmatpush1.msra.mxu0 0.0
          %1980 = vmatprep.subr.mxu0 0.0
          %1981 = vmatpush1.msra.mxu0 0.0
          %1982 = vmatprep.subr.mxu0 0.0
          %1983 = vmatpush1.msra.mxu0 0.0
          %1984 = vmatprep.subr.mxu0 0.0
          %1985 = vmatpush1.msra.mxu0 0.0
          %1986 = vmatprep.subr.mxu0 0.0
          %1987 = vmatpush1.msra.mxu0 0.0
          %1988 = vmatprep.subr.mxu0 0.0
          %1989 = vmatpush1.msra.mxu0 0.0
          %1990 = vmatprep.subr.mxu0 0.0
          %1991 = vmatpush1.msra.mxu0 %v1952
          %1992 = vmatprep.subr.mxu0 0.0
          %1993 = vmatpush1.msra.mxu0 %v1951
          %1994 = vmatprep.subr.mxu0 0.0
          %1995 = vmatpush1.msra.mxu0 %v1950
          %1996 = vmatprep.subr.mxu0 0.0
          %1997 = vmatpush1.msra.mxu0 %v1949
          %1998 = vmatprep.subr.mxu0 0.0
          %1999 = vmatpush2.msra.mxu0 0.0
          %2000 = vmatprep.subr.mxu0 0.0
          %2001 = vmatpush2.msra.mxu0 0.0
          %2002 = vmatprep.subr.mxu0 0.0
          %2003 = vmatpush2.msra.mxu0 0.0
          %2004 = vmatprep.subr.mxu0 0.0
          %2005 = vmatpush2.msra.mxu0 0.0
          %2006 = vmatprep.subr.mxu0 0.0
          %2007 = vmatpush2.msra.mxu0 0.0
          %2008 = vmatprep.subr.mxu0 0.0
          %2009 = vmatpush2.msra.mxu0 0.0
          %2010 = vmatprep.subr.mxu0 0.0
          %2011 = vmatpush2.msra.mxu0 0.0
          %2012 = vmatprep.subr.mxu0 0.0
          %2013 = vmatpush2.msra.mxu0 0.0
          %2014 = vmatprep.subr.mxu0 0.0
          %2015 = vmatpush2.msra.mxu0 0.0
          %2016 = vmatprep.subr.mxu0 0.0
          %2017 = vmatpush2.msra.mxu0 0.0
          %2018 = vmatprep.subr.mxu0 0.0
          %2019 = vmatpush2.msra.mxu0 0.0
          %2020 = vmatprep.subr.mxu0 0.0
          %2021 = vmatpush2.msra.mxu0 0.0
          %2022 = vmatprep.subr.mxu0 0.0
          %2023 = vmatpush2.msra.mxu0 0.0
          %2024 = vmatprep.subr.mxu0 0.0
          %2025 = vmatpush2.msra.mxu0 0.0
          %2026 = vmatprep.subr.mxu0 0.0
          %2027 = vmatpush2.msra.mxu0 0.0
          %2028 = vmatprep.subr.mxu0 0.0
          %2029 = vmatpush2.msra.mxu0 0.0
          %2030 = vmatprep.mubr.f32.mxu0 0.0
          %2031 = vmatmul.mubr.f32.gmra.mxu0 %v1961
          %v2032 = vpop.f32.mrf.mxu0
          %v2033 = vadd.f32 %v1958, %v2032
          %v2034 = vpop.f32.mrf.mxu0
          %2035 = vmatprep.mubr.f32.mxu0 0.0
          %2036 = vmatmul.mubr.f32.gmra.mxu0 %v1964
          %v2037 = vpop.f32.mrf.mxu0
          %v2038 = vadd.f32 %v1958, %v2037
          %v2039 = vpop.f32.mrf.mxu0
          %2040 = vdwg.mxu0
          %s2041 = smul.u32 %s40, 16
          %s2042 = scalar_lea.vmem %s0, %s2041
          %v2043 = vld [vmem:[%s2042] sm:$0xff]
          %v2044 = vld [vmem:[%s2042 + $0x8] sm:$0xff]
          %v2045 = vld [vmem:[%s13] sm:$0xff]
          %v2046 = vld [vmem:[%s13 + $0x8] sm:$0xff]
          %v2047 = vld [vmem:[%s13 + $0x10] sm:$0xff]
          %v2048 = vld [vmem:[%s13 + $0x18] sm:$0xff]
          %v2049 = vld [vmem:[%s13 + $0x20] sm:$0xff]
          %v2050 = vld [vmem:[%s13 + $0x28] sm:$0xff]
          %v2051 = vld [vmem:[%s13 + $0x30] sm:$0xff]
          %v2052 = vld [vmem:[%s13 + $0x38] sm:$0xff]
          %v2053 = vld [vmem:[%s13 + $0x40] sm:$0xff]
          %v2054 = vld [vmem:[%s13 + $0x48] sm:$0xff]
          %v2055 = vld [vmem:[%s13 + $0x50] sm:$0xff]
          %v2056 = vld [vmem:[%s13 + $0x58] sm:$0xff]
          %v2057 = vld [vmem:[%s13 + $0x60] sm:$0xff]
          %v2058 = vld [vmem:[%s13 + $0x68] sm:$0xff]
          %v2059 = vld [vmem:[%s13 + $0x70] sm:$0xff]
          %v2060 = vld [vmem:[%s13 + $0x78] sm:$0xff]
          %v2061 = vld [vmem:[%s14] sm:$0x1]
          %v2063 = vlaneseq
          %v2064 = vshrl.u32 %v2063, 7
          %v2065 = vsub.s32 0, %v2064
          %v2066 = vrot.slane %v2061, %v2065
          %2068 = vmatprep.subr.mxu0 0.0
          %2069 = vmatpush1.msra.mxu0 %v2060
          %2070 = vmatprep.subr.mxu0 0.0
          %2071 = vmatpush1.msra.mxu0 %v2059
          %2072 = vmatprep.subr.mxu0 0.0
          %2073 = vmatpush1.msra.mxu0 %v2058
          %2074 = vmatprep.subr.mxu0 0.0
          %2075 = vmatpush1.msra.mxu0 %v2057
          %2076 = vmatprep.subr.mxu0 0.0
          %2077 = vmatpush1.msra.mxu0 %v2056
          %2078 = vmatprep.subr.mxu0 0.0
          %2079 = vmatpush1.msra.mxu0 %v2055
          %2080 = vmatprep.subr.mxu0 0.0
          %2081 = vmatpush1.msra.mxu0 %v2054
          %2082 = vmatprep.subr.mxu0 0.0
          %2083 = vmatpush1.msra.mxu0 %v2053
          %2084 = vmatprep.subr.mxu0 0.0
          %2085 = vmatpush1.msra.mxu0 %v2052
          %2086 = vmatprep.subr.mxu0 0.0
          %2087 = vmatpush1.msra.mxu0 %v2051
          %2088 = vmatprep.subr.mxu0 0.0
          %2089 = vmatpush1.msra.mxu0 %v2050
          %2090 = vmatprep.subr.mxu0 0.0
          %2091 = vmatpush1.msra.mxu0 %v2049
          %2092 = vmatprep.subr.mxu0 0.0
          %2093 = vmatpush1.msra.mxu0 %v2048
          %2094 = vmatprep.subr.mxu0 0.0
          %2095 = vmatpush1.msra.mxu0 %v2047
          %2096 = vmatprep.subr.mxu0 0.0
          %2097 = vmatpush1.msra.mxu0 %v2046
          %2098 = vmatprep.subr.mxu0 0.0
          %2099 = vmatpush1.msra.mxu0 %v2045
          %2100 = vmatprep.subr.mxu0 0.0
          %2101 = vmatpush2.msra.mxu0 0.0
          %2102 = vmatprep.subr.mxu0 0.0
          %2103 = vmatpush2.msra.mxu0 0.0
          %2104 = vmatprep.subr.mxu0 0.0
          %2105 = vmatpush2.msra.mxu0 0.0
          %2106 = vmatprep.subr.mxu0 0.0
          %2107 = vmatpush2.msra.mxu0 0.0
          %2108 = vmatprep.subr.mxu0 0.0
          %2109 = vmatpush2.msra.mxu0 0.0
          %2110 = vmatprep.subr.mxu0 0.0
          %2111 = vmatpush2.msra.mxu0 0.0
          %2112 = vmatprep.subr.mxu0 0.0
          %2113 = vmatpush2.msra.mxu0 0.0
          %2114 = vmatprep.subr.mxu0 0.0
          %2115 = vmatpush2.msra.mxu0 0.0
          %2116 = vmatprep.subr.mxu0 0.0
          %2117 = vmatpush2.msra.mxu0 0.0
          %2118 = vmatprep.subr.mxu0 0.0
          %2119 = vmatpush2.msra.mxu0 0.0
          %2120 = vmatprep.subr.mxu0 0.0
          %2121 = vmatpush2.msra.mxu0 0.0
          %2122 = vmatprep.subr.mxu0 0.0
          %2123 = vmatpush2.msra.mxu0 0.0
          %2124 = vmatprep.subr.mxu0 0.0
          %2125 = vmatpush2.msra.mxu0 0.0
          %2126 = vmatprep.subr.mxu0 0.0
          %2127 = vmatpush2.msra.mxu0 0.0
          %2128 = vmatprep.subr.mxu0 0.0
          %2129 = vmatpush2.msra.mxu0 0.0
          %2130 = vmatprep.subr.mxu0 0.0
          %2131 = vmatpush2.msra.mxu0 0.0
          %2132 = vmatprep.mubr.f32.mxu0 0.0
          %2133 = vmatmul.mubr.f32.gmra.mxu0 %v2043
          %v2134 = vpop.f32.mrf.mxu0
          %v2135 = vadd.f32 %v2066, %v2134
          %v2136 = vpop.f32.mrf.mxu0
          %2137 = vmatprep.mubr.f32.mxu0 0.0
          %2138 = vmatmul.mubr.f32.gmra.mxu0 %v2044
          %v2139 = vpop.f32.mrf.mxu0
          %v2140 = vadd.f32 %v2066, %v2139
          %v2141 = vpop.f32.mrf.mxu0
          %2142 = vdwg.mxu0
          %v2143 = vadd.f32 %v2033, %v2135
          %v2144 = vadd.f32 %v2038, %v2140
          %v2145 = vld [vmem:[%s17] sm:$0x1]
          %v2147 = vlaneseq
          %v2148 = vshrl.u32 %v2147, 7
          %v2149 = vsub.s32 0, %v2148
          %v2150 = vrot.slane %v2145, %v2149
          %v2152 = vsub.f32 %v2143, %v2150
          %v2153 = vsub.f32 %v2144, %v2150
          %v2154 = vld [vmem:[%s18] sm:$0x1]
          %v2155 = vadd.f32 %v2154, 1e-05
          %v2156 = vrsqrt.pop %v2155
          %v2158 = vlaneseq
          %v2159 = vshrl.u32 %v2158, 7
          %v2160 = vsub.s32 0, %v2159
          %v2161 = vrot.slane %v2156, %v2160
          %v2163 = vmul.f32 %v2152, %v2161
          %v2164 = vmul.f32 %v2153, %v2161
          %v2165 = vld [vmem:[%s15] sm:$0x1]
          %v2167 = vlaneseq
          %v2168 = vshrl.u32 %v2167, 7
          %v2169 = vsub.s32 0, %v2168
          %v2170 = vrot.slane %v2165, %v2169
          %v2172 = vmul.f32 %v2163, %v2170
          %v2173 = vmul.f32 %v2164, %v2170
          %v2174 = vld [vmem:[%s16] sm:$0x1]
          %v2176 = vlaneseq
          %v2177 = vshrl.u32 %v2176, 7
          %v2178 = vsub.s32 0, %v2177
          %v2179 = vrot.slane %v2174, %v2178
          %v2181 = vadd.f32 %v2172, %v2179
          %v2182 = vadd.f32 %v2173, %v2179
          %v2183 = vmax.f32 %v2181, 0.0
          %v2184 = vmax.f32 %v2182, 0.0
          %v2185 = vld [vmem:[%s20] sm:$0xff]
          %v2186 = vld [vmem:[%s20 + $0x8] sm:$0xff]
          %v2187 = vld [vmem:[%s20 + $0x10] sm:$0xff]
          %v2188 = vld [vmem:[%s20 + $0x18] sm:$0xff]
          %v2189 = vld [vmem:[#allocation7] sm:$0x1]
          %v2191 = vlaneseq
          %v2192 = vshrl.u32 %v2191, 7
          %v2193 = vsub.s32 0, %v2192
          %v2194 = vrot.slane %v2189, %v2193
          %v2197 = vsel %vm1346, %v2183, 0
          %v2200 = vsel %vm1346, %v2184, 0
          %2202 = vmatprep.subr.mxu0 0.0
          %2203 = vmatpush1.msra.mxu0 0.0
          %2204 = vmatprep.subr.mxu0 0.0
          %2205 = vmatpush1.msra.mxu0 0.0
          %2206 = vmatprep.subr.mxu0 0.0
          %2207 = vmatpush1.msra.mxu0 0.0
          %2208 = vmatprep.subr.mxu0 0.0
          %2209 = vmatpush1.msra.mxu0 0.0
          %2210 = vmatprep.subr.mxu0 0.0
          %2211 = vmatpush1.msra.mxu0 0.0
          %2212 = vmatprep.subr.mxu0 0.0
          %2213 = vmatpush1.msra.mxu0 0.0
          %2214 = vmatprep.subr.mxu0 0.0
          %2215 = vmatpush1.msra.mxu0 0.0
          %2216 = vmatprep.subr.mxu0 0.0
          %2217 = vmatpush1.msra.mxu0 0.0
          %2218 = vmatprep.subr.mxu0 0.0
          %2219 = vmatpush1.msra.mxu0 0.0
          %2220 = vmatprep.subr.mxu0 0.0
          %2221 = vmatpush1.msra.mxu0 0.0
          %2222 = vmatprep.subr.mxu0 0.0
          %2223 = vmatpush1.msra.mxu0 0.0
          %2224 = vmatprep.subr.mxu0 0.0
          %2225 = vmatpush1.msra.mxu0 0.0
          %2226 = vmatprep.subr.mxu0 0.0
          %2227 = vmatpush1.msra.mxu0 %v2188
          %2228 = vmatprep.subr.mxu0 0.0
          %2229 = vmatpush1.msra.mxu0 %v2187
          %2230 = vmatprep.subr.mxu0 0.0
          %2231 = vmatpush1.msra.mxu0 %v2186
          %2232 = vmatprep.subr.mxu0 0.0
          %2233 = vmatpush1.msra.mxu0 %v2185
          %2234 = vmatprep.subr.mxu0 0.0
          %2235 = vmatpush2.msra.mxu0 0.0
          %2236 = vmatprep.subr.mxu0 0.0
          %2237 = vmatpush2.msra.mxu0 0.0
          %2238 = vmatprep.subr.mxu0 0.0
          %2239 = vmatpush2.msra.mxu0 0.0
          %2240 = vmatprep.subr.mxu0 0.0
          %2241 = vmatpush2.msra.mxu0 0.0
          %2242 = vmatprep.subr.mxu0 0.0
          %2243 = vmatpush2.msra.mxu0 0.0
          %2244 = vmatprep.subr.mxu0 0.0
          %2245 = vmatpush2.msra.mxu0 0.0
          %2246 = vmatprep.subr.mxu0 0.0
          %2247 = vmatpush2.msra.mxu0 0.0
          %2248 = vmatprep.subr.mxu0 0.0
          %2249 = vmatpush2.msra.mxu0 0.0
          %2250 = vmatprep.subr.mxu0 0.0
          %2251 = vmatpush2.msra.mxu0 0.0
          %2252 = vmatprep.subr.mxu0 0.0
          %2253 = vmatpush2.msra.mxu0 0.0
          %2254 = vmatprep.subr.mxu0 0.0
          %2255 = vmatpush2.msra.mxu0 0.0
          %2256 = vmatprep.subr.mxu0 0.0
          %2257 = vmatpush2.msra.mxu0 0.0
          %2258 = vmatprep.subr.mxu0 0.0
          %2259 = vmatpush2.msra.mxu0 0.0
          %2260 = vmatprep.subr.mxu0 0.0
          %2261 = vmatpush2.msra.mxu0 0.0
          %2262 = vmatprep.subr.mxu0 0.0
          %2263 = vmatpush2.msra.mxu0 0.0
          %2264 = vmatprep.subr.mxu0 0.0
          %2265 = vmatpush2.msra.mxu0 0.0
          %2266 = vmatprep.mubr.f32.mxu0 0.0
          %2267 = vmatmul.mubr.f32.gmra.mxu0 %v2197
          %v2268 = vpop.f32.mrf.mxu0
          %v2269 = vadd.f32 %v2194, %v2268
          %v2270 = vpop.f32.mrf.mxu0
          %2271 = vmatprep.mubr.f32.mxu0 0.0
          %2272 = vmatmul.mubr.f32.gmra.mxu0 %v2200
          %v2273 = vpop.f32.mrf.mxu0
          %v2274 = vadd.f32 %v2194, %v2273
          %v2275 = vpop.f32.mrf.mxu0
          %2276 = vdwg.mxu0
          %2277 = vst.msk [vmem:[%s783] sm:$0xff] %vm1544, %v2269
          %2278 = vst.msk [vmem:[%s783 + $0x8] sm:$0xff] %vm1544, %v2274
        $region128: #{_lambda_.3} parent=119 // pred_fallthru
          _
      $region120: #{_lambda_.3} parent=107 // pred_fallthru
        _
      %s2279 = smul.u32 2, %s40
      %p2280 = scmp.lt.s32.totalorder %s2279, 1
      %s2281 = scalar_select %p2280, %s2279, 1
      %s2282 = smul.addr %s2281, 8
      %s2283 = scalar_lea.vmem %s22, %s2282
      // Predicated region
      $region129: #{_lambda_.3} parent=107 // pred_check
        %p2284 = pneg %p556
      $region130: #{_lambda_.3} parent=107 // pred_check_branch
        %2286 = sbr.rel (%p2284) target = $region132
      $region131: #{_lambda_.3} parent=107 // pred_region
        %s2287 = smul.u32 2, %s40
      $region132: #{_lambda_.3} parent=107 // pred_fallthru
        _
      // Predicated region
      $region133: #{_lambda_.3} parent=107 // pred_check
        %p2288 = pneg %p556
      $region134: #{_lambda_.3} parent=107 // pred_check_branch
        %2290 = sbr.rel (%p2288) target = $region136
      $region135: #{_lambda_.3} parent=107 // pred_region
        %s2291 = smul.u32 2, %s40
        %p2292 = scmp.lt.s32.totalorder %s2291, 1
        %s2293 = scalar_select %p2292, %s2291, 1
        %s2294 = smul.addr %s2293, 8
        %s2295 = scalar_lea.vmem %s22, %s2294
      $region136: #{_lambda_.3} parent=107 // pred_fallthru
        _
    $region108: #{_lambda_.3} parent=5 // pred_fallthru
      _
    %p2296 = scmp.le.s32.totalorder 2, %s30
    // Predicated region
    $region137: #{_lambda_.3} parent=5 // pred_check
      %p2297 = pneg %p2296
    $region138: #{_lambda_.3} parent=5 // pred_check_branch
      %2299 = sbr.rel (%p2297) target = $region140
    $region139: #{_lambda_.3} parent=5 // pred_region
      %s2300 = ssub.s32 %s30, 2
    $region140: #{_lambda_.3} parent=5 // pred_fallthru
      _
  $region6: #{_lambda_.3} parent=0 // loop_footer
    %s34 = sadd.s32 1, %s30
  $region7: #{_lambda_.3} parent=0 // loop_footer_branch
    %29 = sbr.rel target = $region3
  $region8: #{_lambda_.3} parent=0 // loop_exit
    _

</llo_original>
